<compile_context>
chip_gen: v7x
topology: tpu7x:2x2x1
jax: 0.10.0
libtpu: 0.0.40
codegen_flags: <defaults>
</compile_context>

<pallas_src>
import functools

import jax
import jax.numpy as jnp
from jax import lax
from jax.experimental import pallas as pl
from jax.experimental.pallas import tpu as pltpu


_VMEM_BUDGET = 36 * 1024 * 1024     # working-set target (fits v7x's 64 MiB VMEM)
_VMEM_LIMIT = 48 * 1024 * 1024      # explicit scoped-VMEM limit handed to Mosaic


def _round_up(x, m):
    return (x + m - 1) // m * m


def _cdiv(a, b):
    return (a + b - 1) // b


def _row_tiles(m, k, ncols, out_bytes=2):
    """VMEM-budgeted row tiling.

    Live bytes ~ 2*(tm*K*2 + tm*ncols*out_bytes) + 2*K*ncols*2 (+ bias/stats).
    Split into >=2 tiles whenever M >= 512 so the "parallel" grid axis spans
    both v7x TensorCores; otherwise use one whole-layer block.
    """
    fixed = 2 * k * ncols * 2 + 2 * ncols * 4 + 2 * 8 * ncols * 4
    per_row = 2 * (k * 2 + ncols * out_bytes)
    budget_rows = max(8, (_VMEM_BUDGET - fixed) // per_row)
    nt = 2 if m >= 512 else 1
    nt = max(nt, _cdiv(m, budget_rows))
    tm = _round_up(_cdiv(m, nt), 8)
    nt = _cdiv(m, tm)
    return tm, tm * nt, nt


# ----------------------------------------------------------------------------
# Pallas kernels
# ----------------------------------------------------------------------------
def _conv_matmul_kernel(*refs, has_bias, with_stats, act):
    """bf16 matmul on the MXU (f32 accum), optional fused bias + tanh, optional
    fused per-column sum / sum-of-squares partials (no masking: zero-padded
    tail rows contribute 0; border correction happens in JAX)."""
    it = iter(refs)
    a_ref = next(it)                       # (tm, K)      bf16
    b_ref = next(it)                       # (K, ncols)   bf16
    bias_ref = next(it) if has_bias else None
    o_ref = next(it)                       # (tm, ncols)  bf16
    stats_ref = next(it) if with_stats else None   # (8, ncols) f32

    acc = jnp.dot(a_ref[...], b_ref[...], preferred_element_type=jnp.float32)
    if has_bias:
        acc = acc + bias_ref[...]

    if with_stats:
        # Only rows 0-1 of the 8-row stats block are written; rows 2-7 are
        # never read on the host side.
        stats_ref[0:1, :] = jnp.sum(acc, axis=0, keepdims=True)
        stats_ref[1:2, :] = jnp.sum(acc * acc, axis=0, keepdims=True)

    if act == "tanh":
        acc = jnp.tanh(acc)
    o_ref[...] = acc.astype(o_ref.dtype)


def _affine_relu_kernel(x_ref, scale_ref, shift_ref, o_ref):
    y = x_ref[...].astype(jnp.float32) * scale_ref[...] + shift_ref[...]
    o_ref[...] = jnp.maximum(y, 0.0).astype(o_ref.dtype)


def fused_conv_matmul(A, B, *, bias_cols=None, act="none", with_stats=False):
    """(M, K) @ (K, ncols) -> bf16, with optional fused bias/tanh and fused
    (unmasked) BN sum / sum-of-squares partials (f32)."""
    M, K = A.shape
    ncols = B.shape[1]
    tm, Mp, nt = _row_tiles(M, K, ncols)
    if Mp != M:
        # Explicit zero pad: padded rows then contribute exactly 0 to the
        # matmul output and to the BN statistic sums.
        A = jnp.pad(A, ((0, Mp - M), (0, 0)))

    inputs = [A.astype(jnp.bfloat16), B.astype(jnp.bfloat16)]
    in_specs = [pl.BlockSpec((tm, K), lambda i: (i, 0)),
                pl.BlockSpec((K, ncols), lambda i: (0, 0))]

    has_bias = bias_cols is not None
    if has_bias:
        inputs.append(bias_cols.reshape(1, ncols).astype(jnp.float32))
        in_specs.append(pl.BlockSpec((1, ncols), lambda i: (0, 0)))

    if with_stats:
        out_shape = (jax.ShapeDtypeStruct((Mp, ncols), jnp.bfloat16),
                     jax.ShapeDtypeStruct((8 * nt, ncols), jnp.float32))
        out_specs = (pl.BlockSpec((tm, ncols), lambda i: (i, 0)),
                     pl.BlockSpec((8, ncols), lambda i: (i, 0)))
    else:
        out_shape = jax.ShapeDtypeStruct((Mp, ncols), jnp.bfloat16)
        out_specs = pl.BlockSpec((tm, ncols), lambda i: (i, 0))

    kernel = functools.partial(_conv_matmul_kernel, has_bias=has_bias,
                               with_stats=with_stats, act=act)
    res = pl.pallas_call(
        kernel,
        out_shape=out_shape,
        grid_spec=pltpu.PrefetchScalarGridSpec(
            num_scalar_prefetch=0, grid=(nt,),
            in_specs=in_specs, out_specs=out_specs),
        # Stats are per-tile partials (reduced in JAX), so the M axis stays
        # "parallel" and both v7x TensorCores can share the grid.
        compiler_params=pltpu.CompilerParams(
            dimension_semantics=("parallel",),
            vmem_limit_bytes=_VMEM_LIMIT),
    )(*inputs)

    if with_stats:
        out, stats = res
        st = stats.reshape(nt, 8, ncols)
        return out, (st[:, 0, :].sum(axis=0), st[:, 1, :].sum(axis=0)), tm
    return res, None, tm


def affine_relu(x, scale_cols, shift_cols, tm):
    """y = relu(x * scale + shift), bf16 in / bf16 out, f32 scale/shift."""
    Mp, ncols = x.shape
    nt = Mp // tm
    return pl.pallas_call(
        _affine_relu_kernel,
        out_shape=jax.ShapeDtypeStruct((Mp, ncols), jnp.bfloat16),
        grid_spec=pltpu.PrefetchScalarGridSpec(
            num_scalar_prefetch=0, grid=(nt,),
            in_specs=[pl.BlockSpec((tm, ncols), lambda i: (i, 0)),
                      pl.BlockSpec((1, ncols), lambda i: (0, 0)),
                      pl.BlockSpec((1, ncols), lambda i: (0, 0))],
            out_specs=pl.BlockSpec((tm, ncols), lambda i: (i, 0))),
        compiler_params=pltpu.CompilerParams(
            dimension_semantics=("parallel",),
            vmem_limit_bytes=_VMEM_LIMIT),
    )(x, scale_cols.reshape(1, ncols).astype(jnp.float32),
      shift_cols.reshape(1, ncols).astype(jnp.float32))


# ----------------------------------------------------------------------------
# Layer builders (JAX glue around the Pallas kernels)
# ----------------------------------------------------------------------------
def _bn_scale_shift(ch_sum, ch_sq, count, gamma, beta, eps=1e-5):
    mean = ch_sum / count
    var = ch_sq / count - mean * mean          # biased variance (training-mode BN)
    scale = gamma / jnp.sqrt(var + eps)
    shift = beta - mean * scale
    return scale, shift


def convt_s1_bn_relu(x, w, gamma, beta):
    """ConvTranspose2d(k, stride=1, padding=0, bias=False) + BatchNorm + ReLU."""
    N, H, W, Cin = x.shape
    _, Cout, kH, kW = w.shape
    OH, OW = H + kH - 1, W + kW - 1
    ncols = _round_up(Cout, 128)

    xb = x.astype(jnp.bfloat16)
    xp = jnp.pad(xb, ((0, 0), (kH - 1, kH - 1), (kW - 1, kW - 1), (0, 0)))
    taps = [xp[:, kh:kh + OH, kw:kw + OW, :] for kh in range(kH) for kw in range(kW)]
    A = jnp.concatenate(taps, axis=-1).reshape(N * OH * OW, kH * kW * Cin)

    wf = jnp.asarray(w, jnp.float32)
    B = jnp.zeros((kH * kW * Cin, ncols), jnp.float32)
    for kh in range(kH):
        for kw in range(kW):
            t = kh * kW + kw
            B = B.at[t * Cin:(t + 1) * Cin, :Cout].set(wf[:, :, kH - 1 - kh, kW - 1 - kw])

    M = N * OH * OW
    # Every real row is a valid output pixel and padded rows are exact zeros,
    # so the unmasked kernel sums are already the exact BN statistics.
    out, (csum, csq), tm = fused_conv_matmul(A, B, with_stats=True)

    scale, shift = _bn_scale_shift(csum[:Cout], csq[:Cout], float(M), gamma, beta)
    scale_cols = jnp.zeros((ncols,), jnp.float32).at[:Cout].set(scale)
    shift_cols = jnp.zeros((ncols,), jnp.float32).at[:Cout].set(shift)
    y = affine_relu(out, scale_cols, shift_cols, tm)
    return y[:M].reshape(N, OH, OW, ncols)[..., :Cout]


def _phase_operands(x, w, cout_pad):
    """Sub-pixel decomposition of ConvTranspose2d(4, stride=2, padding=1):
    a 2x2-tap stride-1 conv over the 1-padded input whose 4*cout_pad output
    columns hold the 4 output phases."""
    N, H, W, Cin = x.shape
    _, Cout, kH, kW = w.shape
    assert kH == 4 and kW == 4
    gh, gw = H + 1, W + 1
    xb = x.astype(jnp.bfloat16)
    xp = jnp.pad(xb, ((0, 0), (1, 1), (1, 1), (0, 0)))
    taps = [xp[:, dh:dh + gh, dw:dw + gw, :] for dh in (0, 1) for dw in (0, 1)]
    A = jnp.concatenate(taps, axis=-1).reshape(N * gh * gw, 4 * Cin)

    wf = jnp.asarray(w, jnp.float32)
    B = jnp.zeros((4 * Cin, 4 * cout_pad), jnp.float32)
    for dh in (0, 1):
        for dw in (0, 1):
            t = dh * 2 + dw
            for rh in (0, 1):
                for rw in (0, 1):
                    p = rh * 2 + rw
                    B = B.at[t * Cin:(t + 1) * Cin,
                             p * cout_pad:p * cout_pad + Cout].set(
                                 wf[:, :, 3 - rh - 2 * dh, 3 - rw - 2 * dw])
    return A, B, gh, gw


def _phase_border_sums(out_rows, N, gh, gw, cout_pad):
    """Per-phase (sum, sumsq) over the conv outputs that fall OUTSIDE the
    valid 2Hx2W window: each phase drops exactly one grid row and one grid
    column of the (gh, gw) grid, so only thin border slices are read."""
    cg = out_rows.reshape(N, gh, gw, 4, cout_pad)
    sums, sqs = [], []
    for rh in (0, 1):
        for rw in (0, 1):
            p = rh * 2 + rw
            ei = gh - 1 if rh == 0 else 0      # excluded grid row for this phase
            ej = gw - 1 if rw == 0 else 0      # excluded grid col for this phase
            row = cg[:, ei, :, p, :].astype(jnp.float32)    # (N, gw, cp)
            col = cg[:, :, ej, p, :].astype(jnp.float32)    # (N, gh, cp)
            cor = cg[:, ei, ej, p, :].astype(jnp.float32)   # (N, cp)
            sums.append(row.sum((0, 1)) + col.sum((0, 1)) - cor.sum(0))
            sqs.append((row * row).sum((0, 1)) + (col * col).sum((0, 1))
                       - (cor * cor).sum(0))
    return jnp.stack(sums), jnp.stack(sqs)      # (4, cout_pad) each


def _interleave_phases(y, M, N, H, W, Cout, cout_pad, gh, gw):
    cg = y[:M].reshape(N, gh, gw, 4, cout_pad)
    parts = [cg[:, rh:rh + H, rw:rw + W, rh * 2 + rw, :Cout]
             for rh in (0, 1) for rw in (0, 1)]
    ph = jnp.stack(parts, axis=0).reshape(2, 2, N, H, W, Cout)
    return jnp.transpose(ph, (2, 3, 0, 4, 1, 5)).reshape(N, 2 * H, 2 * W, Cout)


def convt_s2_bn_relu(x, w, gamma, beta):
    """ConvTranspose2d(4, stride=2, padding=1, bias=False) + BatchNorm + ReLU."""
    N, H, W, _ = x.shape
    _, Cout, _, _ = w.shape
    cout_pad = _round_up(Cout, 32)             # 4 * cout_pad is a multiple of 128
    A, B, gh, gw = _phase_operands(x, w, cout_pad)
    M = N * gh * gw
    out, (tsum, tsq), tm = fused_conv_matmul(A, B, with_stats=True)

    # Unmasked in-kernel sums minus the thin per-phase border strips that lie
    # outside the valid output window.
    bsum, bsq = _phase_border_sums(out[:M], N, gh, gw, cout_pad)
    ch_sum = (tsum.reshape(4, cout_pad) - bsum)[:, :Cout].sum(axis=0)
    ch_sq = (tsq.reshape(4, cout_pad) - bsq)[:, :Cout].sum(axis=0)
    count = float(N * 2 * H * 2 * W)

    scale, shift = _bn_scale_shift(ch_sum, ch_sq, count, gamma, beta)
    scale_cols = jnp.tile(jnp.zeros((cout_pad,), jnp.float32).at[:Cout].set(scale), 4)
    shift_cols = jnp.tile(jnp.zeros((cout_pad,), jnp.float32).at[:Cout].set(shift), 4)
    y = affine_relu(out, scale_cols, shift_cols, tm)
    return _interleave_phases(y, M, N, H, W, Cout, cout_pad, gh, gw)


def convt_s2_bias_tanh(x, w, b):
    """Final ConvTranspose2d(4, stride=2, padding=1) + bias + Tanh (fused)."""
    N, H, W, _ = x.shape
    _, Cout, _, _ = w.shape
    cout_pad = _round_up(Cout, 32)
    A, B, gh, gw = _phase_operands(x, w, cout_pad)
    M = N * gh * gw
    bias_cols = jnp.tile(jnp.zeros((cout_pad,), jnp.float32).at[:Cout].set(b), 4)
    out, _, _ = fused_conv_matmul(A, B, bias_cols=bias_cols, act="tanh")
    return _interleave_phases(out, M, N, H, W, Cout, cout_pad, gh, gw)


# ----------------------------------------------------------------------------
# Generator forward
# ----------------------------------------------------------------------------
def generator_forward(x_nchw, params):
    x = jnp.transpose(x_nchw, (0, 2, 3, 1)).astype(jnp.float32)   # NCHW -> NHWC
    x = convt_s1_bn_relu(x, params["w0"], params["gamma0"], params["beta0"])
    for i in (1, 2, 3):
        x = convt_s2_bn_relu(x, params[f"w{i}"], params[f"gamma{i}"], params[f"beta{i}"])
    y = convt_s2_bias_tanh(x, params["w4"], params["b4"])
    return jnp.transpose(y, (0, 3, 1, 2)).astype(jnp.float32)      # NHWC -> NCHW


def init_params(key, channels_noise, channels_img, fg):
    dims = [(channels_noise, fg * 16), (fg * 16, fg * 8),
            (fg * 8, fg * 4), (fg * 4, fg * 2)]
    keys = jax.random.split(key, 6)
    params = {}
    for i, (cin, cout) in enumerate(dims):
        params[f"w{i}"] = 0.02 * jax.random.normal(keys[i], (cin, cout, 4, 4), jnp.float32)
        params[f"gamma{i}"] = jnp.ones((cout,), jnp.float32)
        params[f"beta{i}"] = jnp.zeros((cout,), jnp.float32)
    params["w4"] = 0.02 * jax.random.normal(keys[4], (fg * 2, channels_img, 4, 4), jnp.float32)
    params["b4"] = 0.02 * jax.random.normal(keys[5], (channels_img,), jnp.float32)
    return params


# ----------------------------------------------------------------------------
# Plain-XLA reference (bf16 conv inputs / f32 accumulate) for checking
# ----------------------------------------------------------------------------
def _ref_conv_transpose(x_nhwc, w, stride, padding):
    _, _, kH, kW = w.shape
    wf = jnp.transpose(jnp.asarray(w)[:, :, ::-1, ::-1], (1, 0, 2, 3))  # (Cout,Cin,kH,kW)
    return lax.conv_general_dilated(
        x_nhwc.astype(jnp.bfloat16), wf.astype(jnp.bfloat16),
        window_strides=(1, 1),
        padding=[(kH - 1 - padding, kH - 1 - padding),
                 (kW - 1 - padding, kW - 1 - padding)],
        lhs_dilation=(stride, stride),
        dimension_numbers=("NHWC", "OIHW", "NHWC"),
        preferred_element_type=jnp.float32)


def reference_forward(x_nchw, params, eps=1e-5):
    x = jnp.transpose(x_nchw, (0, 2, 3, 1)).astype(jnp.float32)
    strides = [1, 2, 2, 2]
    pads = [0, 1, 1, 1]
    for i in range(4):
        y = _ref_conv_transpose(x, params[f"w{i}"], strides[i], pads[i])
        mean = jnp.mean(y, axis=(0, 1, 2))
        var = jnp.mean(y * y, axis=(0, 1, 2)) - mean * mean
        scale = params[f"gamma{i}"] / jnp.sqrt(var + eps)
        shift = params[f"beta{i}"] - mean * scale
        x = jnp.maximum(y * scale + shift, 0.0)
    y = _ref_conv_transpose(x, params["w4"], 2, 1) + params["b4"]
    return jnp.transpose(jnp.tanh(y), (0, 3, 1, 2))


if __name__ == "__main__":
    key = jax.random.PRNGKey(0)
    k_params, k_x = jax.random.split(key)

    channels_noise, channels_img, features_g = 8, 3, 8
    params = init_params(k_params, channels_noise, channels_img, features_g)

    # DCGAN generator input: (batch, channels_noise, 1, 1)
    x = jax.random.normal(k_x, (2, channels_noise, 1, 1), jnp.float32)

    fwd = jax.jit(lambda xx: generator_forward(xx, params))
    y = fwd(x)
    jax.block_until_ready(y)
    assert y.shape == (2, channels_img, 64, 64), y.shape
    assert bool(jnp.all(jnp.isfinite(y)))
    assert bool(jnp.all(jnp.abs(y) <= 1.0 + 1e-6))     # tanh output range

    y_ref = jax.jit(lambda xx: reference_forward(xx, params))(x)
    jax.block_until_ready(y_ref)
    err = float(jnp.max(jnp.abs(y - y_ref)))
    # bf16 storage of the inter-layer activations adds ~1e-2 of rounding vs.
    # the f32-activation reference; 3e-2 on a [-1, 1] tanh output is still a
    # tight end-to-end check.
    assert err < 3e-2, f"mismatch vs reference: max abs err = {err}"

    print("KERNEL_OK")
</pallas_src>

<mosaic_0001>
module attributes {stable_mosaic.version = 11 : i64} {
  func.func @_conv_matmul_kernel(%arg0: i32, %arg1: memref<32x128xbf16, #tpu.memory_space<vmem>>, %arg2: memref<128x128xbf16, #tpu.memory_space<vmem>>, %arg3: memref<32x128xbf16, #tpu.memory_space<vmem>>, %arg4: memref<8x128xf32, #tpu.memory_space<vmem>>) attributes {dimension_semantics = [#tpu.dimension_semantics<parallel>], iteration_bounds = array<i64: 1>, scalar_prefetch = 0 : i64, scratch_operands = 0 : i64, tpu.core_type = #tpu.core_type<tc>, window_params = [{transform_indices = @transform_0, window_bounds = array<i64: 32, 128>}, {pipeline_mode = #tpu.pipeline_mode<synchronous>, transform_indices = @transform_1, window_bounds = array<i64: 128, 128>}, {transform_indices = @transform_2, window_bounds = array<i64: 32, 128>}, {transform_indices = @transform_3, window_bounds = array<i64: 8, 128>}]} {
    %c0 = arith.constant 0 : index
    %c0_0 = arith.constant 0 : index
    %0 = vector.load %arg1[%c0, %c0_0] : memref<32x128xbf16, #tpu.memory_space<vmem>>, vector<32x128xbf16>
    %c0_1 = arith.constant 0 : index
    %c0_2 = arith.constant 0 : index
    %1 = vector.load %arg2[%c0_1, %c0_2] : memref<128x128xbf16, #tpu.memory_space<vmem>>, vector<128x128xbf16>
    %cst = arith.constant dense<0.000000e+00> : vector<32x128xf32>
    %2 = tpu.matmul %0, %1, %cst {dimension_numbers = #tpu.dot_dimension_numbers<[1], [0], [0], [1], [0, 0, 1, 1], [], []>} : vector<32x128xbf16>, vector<128x128xbf16>, vector<32x128xf32> -> vector<32x128xf32>
    %cst_3 = arith.constant dense<0.000000e+00> : vector<128xf32>
    %3 = vector.multi_reduction <add>, %2, %cst_3 [0] : vector<32x128xf32> to vector<128xf32>
    %4 = vector.shape_cast %3 : vector<128xf32> to vector<1x128xf32>
    %c0_4 = arith.constant 0 : index
    %c0_5 = arith.constant 0 : index
    %5 = vector.load %arg4[%c0_4, %c0_5] : memref<8x128xf32, #tpu.memory_space<vmem>>, vector<1x128xf32>
    tpu.vector_store %arg4[%c0_4, %c0_5], %4 {strides = array<i32>} : memref<8x128xf32, #tpu.memory_space<vmem>>, vector<1x128xf32>,
    %6 = arith.mulf %2, %2 : vector<32x128xf32>
    %cst_6 = arith.constant dense<0.000000e+00> : vector<128xf32>
    %7 = vector.multi_reduction <add>, %6, %cst_6 [0] : vector<32x128xf32> to vector<128xf32>
    %8 = vector.shape_cast %7 : vector<128xf32> to vector<1x128xf32>
    %c1 = arith.constant 1 : index
    %c0_7 = arith.constant 0 : index
    %9 = vector.load %arg4[%c1, %c0_7] : memref<8x128xf32, #tpu.memory_space<vmem>>, vector<1x128xf32>
    tpu.vector_store %arg4[%c1, %c0_7], %8 {strides = array<i32>} : memref<8x128xf32, #tpu.memory_space<vmem>>, vector<1x128xf32>,
    %10 = arith.truncf %2 : vector<32x128xf32> to vector<32x128xbf16>
    %c0_8 = arith.constant 0 : index
    %c0_9 = arith.constant 0 : index
    %11 = vector.load %arg3[%c0_8, %c0_9] : memref<32x128xbf16, #tpu.memory_space<vmem>>, vector<32x128xbf16>
    tpu.vector_store %arg3[%c0_8, %c0_9], %10 {strides = array<i32>} : memref<32x128xbf16, #tpu.memory_space<vmem>>, vector<32x128xbf16>,
    return
  }
  func.func @transform_0(%arg0: i32) -> (i32, i32) {
    %c0_i32 = arith.constant 0 : i32
    %c0_i32_0 = arith.constant 0 : i32
    return %arg0, %c0_i32 : i32, i32
  }
  func.func @transform_1(%arg0: i32) -> (i32, i32) {
    %c0_i32 = arith.constant 0 : i32
    %c0_i32_0 = arith.constant 0 : i32
    %c0_i32_1 = arith.constant 0 : i32
    return %c0_i32, %c0_i32_0 : i32, i32
  }
  func.func @transform_2(%arg0: i32) -> (i32, i32) {
    %c0_i32 = arith.constant 0 : i32
    %c0_i32_0 = arith.constant 0 : i32
    return %arg0, %c0_i32 : i32, i32
  }
  func.func @transform_3(%arg0: i32) -> (i32, i32) {
    %c0_i32 = arith.constant 0 : i32
    %c0_i32_0 = arith.constant 0 : i32
    return %arg0, %c0_i32 : i32, i32
  }
}

module attributes {stable_mosaic.version = 11 : i64} {
  func.func @_affine_relu_kernel(%arg0: i32, %arg1: memref<32x128xbf16, #tpu.memory_space<vmem>>, %arg2: memref<1x128xf32, #tpu.memory_space<vmem>>, %arg3: memref<1x128xf32, #tpu.memory_space<vmem>>, %arg4: memref<32x128xbf16, #tpu.memory_space<vmem>>) attributes {dimension_semantics = [#tpu.dimension_semantics<parallel>], iteration_bounds = array<i64: 1>, scalar_prefetch = 0 : i64, scratch_operands = 0 : i64, tpu.core_type = #tpu.core_type<tc>, window_params = [{transform_indices = @transform_0, window_bounds = array<i64: 32, 128>}, {pipeline_mode = #tpu.pipeline_mode<synchronous>, transform_indices = @transform_1, window_bounds = array<i64: 1, 128>}, {pipeline_mode = #tpu.pipeline_mode<synchronous>, transform_indices = @transform_2, window_bounds = array<i64: 1, 128>}, {transform_indices = @transform_3, window_bounds = array<i64: 32, 128>}]} {
    %c0 = arith.constant 0 : index
    %c0_0 = arith.constant 0 : index
    %0 = vector.load %arg1[%c0, %c0_0] : memref<32x128xbf16, #tpu.memory_space<vmem>>, vector<32x128xbf16>
    %1 = arith.extf %0 : vector<32x128xbf16> to vector<32x128xf32>
    %c0_1 = arith.constant 0 : index
    %c0_2 = arith.constant 0 : index
    %2 = vector.load %arg2[%c0_1, %c0_2] : memref<1x128xf32, #tpu.memory_space<vmem>>, vector<1x128xf32>
    %3 = vector.broadcast %2 : vector<1x128xf32> to vector<32x128xf32>
    %4 = arith.mulf %1, %3 : vector<32x128xf32>
    %c0_3 = arith.constant 0 : index
    %c0_4 = arith.constant 0 : index
    %5 = vector.load %arg3[%c0_3, %c0_4] : memref<1x128xf32, #tpu.memory_space<vmem>>, vector<1x128xf32>
    %6 = vector.broadcast %5 : vector<1x128xf32> to vector<32x128xf32>
    %7 = arith.addf %4, %6 : vector<32x128xf32>
    %cst = arith.constant 0.000000e+00 : f32
    %8 = vector.broadcast %cst : f32 to vector<32x128xf32>
    %9 = arith.maximumf %7, %8 : vector<32x128xf32>
    %10 = arith.truncf %9 : vector<32x128xf32> to vector<32x128xbf16>
    %c0_5 = arith.constant 0 : index
    %c0_6 = arith.constant 0 : index
    %11 = vector.load %arg4[%c0_5, %c0_6] : memref<32x128xbf16, #tpu.memory_space<vmem>>, vector<32x128xbf16>
    tpu.vector_store %arg4[%c0_5, %c0_6], %10 {strides = array<i32>} : memref<32x128xbf16, #tpu.memory_space<vmem>>, vector<32x128xbf16>,
    return
  }
  func.func @transform_0(%arg0: i32) -> (i32, i32) {
    %c0_i32 = arith.constant 0 : i32
    %c0_i32_0 = arith.constant 0 : i32
    return %arg0, %c0_i32 : i32, i32
  }
  func.func @transform_1(%arg0: i32) -> (i32, i32) {
    %c0_i32 = arith.constant 0 : i32
    %c0_i32_0 = arith.constant 0 : i32
    %c0_i32_1 = arith.constant 0 : i32
    return %c0_i32, %c0_i32_0 : i32, i32
  }
  func.func @transform_2(%arg0: i32) -> (i32, i32) {
    %c0_i32 = arith.constant 0 : i32
    %c0_i32_0 = arith.constant 0 : i32
    %c0_i32_1 = arith.constant 0 : i32
    return %c0_i32, %c0_i32_0 : i32, i32
  }
  func.func @transform_3(%arg0: i32) -> (i32, i32) {
    %c0_i32 = arith.constant 0 : i32
    %c0_i32_0 = arith.constant 0 : i32
    return %arg0, %c0_i32 : i32, i32
  }
}

module attributes {stable_mosaic.version = 11 : i64} {
  func.func @_conv_matmul_kernel(%arg0: i32, %arg1: memref<56x512xbf16, #tpu.memory_space<vmem>>, %arg2: memref<512x256xbf16, #tpu.memory_space<vmem>>, %arg3: memref<56x256xbf16, #tpu.memory_space<vmem>>, %arg4: memref<8x256xf32, #tpu.memory_space<vmem>>) attributes {dimension_semantics = [#tpu.dimension_semantics<parallel>], iteration_bounds = array<i64: 1>, scalar_prefetch = 0 : i64, scratch_operands = 0 : i64, tpu.core_type = #tpu.core_type<tc>, window_params = [{transform_indices = @transform_0, window_bounds = array<i64: 56, 512>}, {pipeline_mode = #tpu.pipeline_mode<synchronous>, transform_indices = @transform_1, window_bounds = array<i64: 512, 256>}, {transform_indices = @transform_2, window_bounds = array<i64: 56, 256>}, {transform_indices = @transform_3, window_bounds = array<i64: 8, 256>}]} {
    %c0 = arith.constant 0 : index
    %c0_0 = arith.constant 0 : index
    %0 = vector.load %arg1[%c0, %c0_0] : memref<56x512xbf16, #tpu.memory_space<vmem>>, vector<56x512xbf16>
    %c0_1 = arith.constant 0 : index
    %c0_2 = arith.constant 0 : index
    %1 = vector.load %arg2[%c0_1, %c0_2] : memref<512x256xbf16, #tpu.memory_space<vmem>>, vector<512x256xbf16>
    %cst = arith.constant dense<0.000000e+00> : vector<56x256xf32>
    %2 = tpu.matmul %0, %1, %cst {dimension_numbers = #tpu.dot_dimension_numbers<[1], [0], [0], [1], [0, 0, 1, 1], [], []>} : vector<56x512xbf16>, vector<512x256xbf16>, vector<56x256xf32> -> vector<56x256xf32>
    %cst_3 = arith.constant dense<0.000000e+00> : vector<256xf32>
    %3 = vector.multi_reduction <add>, %2, %cst_3 [0] : vector<56x256xf32> to vector<256xf32>
    %4 = vector.shape_cast %3 : vector<256xf32> to vector<1x256xf32>
    %c0_4 = arith.constant 0 : index
    %c0_5 = arith.constant 0 : index
    %5 = vector.load %arg4[%c0_4, %c0_5] : memref<8x256xf32, #tpu.memory_space<vmem>>, vector<1x256xf32>
    tpu.vector_store %arg4[%c0_4, %c0_5], %4 {strides = array<i32>} : memref<8x256xf32, #tpu.memory_space<vmem>>, vector<1x256xf32>,
    %6 = arith.mulf %2, %2 : vector<56x256xf32>
    %cst_6 = arith.constant dense<0.000000e+00> : vector<256xf32>
    %7 = vector.multi_reduction <add>, %6, %cst_6 [0] : vector<56x256xf32> to vector<256xf32>
    %8 = vector.shape_cast %7 : vector<256xf32> to vector<1x256xf32>
    %c1 = arith.constant 1 : index
    %c0_7 = arith.constant 0 : index
    %9 = vector.load %arg4[%c1, %c0_7] : memref<8x256xf32, #tpu.memory_space<vmem>>, vector<1x256xf32>
    tpu.vector_store %arg4[%c1, %c0_7], %8 {strides = array<i32>} : memref<8x256xf32, #tpu.memory_space<vmem>>, vector<1x256xf32>,
    %10 = arith.truncf %2 : vector<56x256xf32> to vector<56x256xbf16>
    %c0_8 = arith.constant 0 : index
    %c0_9 = arith.constant 0 : index
    %11 = vector.load %arg3[%c0_8, %c0_9] : memref<56x256xbf16, #tpu.memory_space<vmem>>, vector<56x256xbf16>
    tpu.vector_store %arg3[%c0_8, %c0_9], %10 {strides = array<i32>} : memref<56x256xbf16, #tpu.memory_space<vmem>>, vector<56x256xbf16>,
    return
  }
  func.func @transform_0(%arg0: i32) -> (i32, i32) {
    %c0_i32 = arith.constant 0 : i32
    %c0_i32_0 = arith.constant 0 : i32
    return %arg0, %c0_i32 : i32, i32
  }
  func.func @transform_1(%arg0: i32) -> (i32, i32) {
    %c0_i32 = arith.constant 0 : i32
    %c0_i32_0 = arith.constant 0 : i32
    %c0_i32_1 = arith.constant 0 : i32
    return %c0_i32, %c0_i32_0 : i32, i32
  }
  func.func @transform_2(%arg0: i32) -> (i32, i32) {
    %c0_i32 = arith.constant 0 : i32
    %c0_i32_0 = arith.constant 0 : i32
    return %arg0, %c0_i32 : i32, i32
  }
  func.func @transform_3(%arg0: i32) -> (i32, i32) {
    %c0_i32 = arith.constant 0 : i32
    %c0_i32_0 = arith.constant 0 : i32
    return %arg0, %c0_i32 : i32, i32
  }
}

module attributes {stable_mosaic.version = 11 : i64} {
  func.func @_affine_relu_kernel(%arg0: i32, %arg1: memref<56x256xbf16, #tpu.memory_space<vmem>>, %arg2: memref<1x256xf32, #tpu.memory_space<vmem>>, %arg3: memref<1x256xf32, #tpu.memory_space<vmem>>, %arg4: memref<56x256xbf16, #tpu.memory_space<vmem>>) attributes {dimension_semantics = [#tpu.dimension_semantics<parallel>], iteration_bounds = array<i64: 1>, scalar_prefetch = 0 : i64, scratch_operands = 0 : i64, tpu.core_type = #tpu.core_type<tc>, window_params = [{transform_indices = @transform_0, window_bounds = array<i64: 56, 256>}, {pipeline_mode = #tpu.pipeline_mode<synchronous>, transform_indices = @transform_1, window_bounds = array<i64: 1, 256>}, {pipeline_mode = #tpu.pipeline_mode<synchronous>, transform_indices = @transform_2, window_bounds = array<i64: 1, 256>}, {transform_indices = @transform_3, window_bounds = array<i64: 56, 256>}]} {
    %c0 = arith.constant 0 : index
    %c0_0 = arith.constant 0 : index
    %0 = vector.load %arg1[%c0, %c0_0] : memref<56x256xbf16, #tpu.memory_space<vmem>>, vector<56x256xbf16>
    %1 = arith.extf %0 : vector<56x256xbf16> to vector<56x256xf32>
    %c0_1 = arith.constant 0 : index
    %c0_2 = arith.constant 0 : index
    %2 = vector.load %arg2[%c0_1, %c0_2] : memref<1x256xf32, #tpu.memory_space<vmem>>, vector<1x256xf32>
    %3 = vector.broadcast %2 : vector<1x256xf32> to vector<56x256xf32>
    %4 = arith.mulf %1, %3 : vector<56x256xf32>
    %c0_3 = arith.constant 0 : index
    %c0_4 = arith.constant 0 : index
    %5 = vector.load %arg3[%c0_3, %c0_4] : memref<1x256xf32, #tpu.memory_space<vmem>>, vector<1x256xf32>
    %6 = vector.broadcast %5 : vector<1x256xf32> to vector<56x256xf32>
    %7 = arith.addf %4, %6 : vector<56x256xf32>
    %cst = arith.constant 0.000000e+00 : f32
    %8 = vector.broadcast %cst : f32 to vector<56x256xf32>
    %9 = arith.maximumf %7, %8 : vector<56x256xf32>
    %10 = arith.truncf %9 : vector<56x256xf32> to vector<56x256xbf16>
    %c0_5 = arith.constant 0 : index
    %c0_6 = arith.constant 0 : index
    %11 = vector.load %arg4[%c0_5, %c0_6] : memref<56x256xbf16, #tpu.memory_space<vmem>>, vector<56x256xbf16>
    tpu.vector_store %arg4[%c0_5, %c0_6], %10 {strides = array<i32>} : memref<56x256xbf16, #tpu.memory_space<vmem>>, vector<56x256xbf16>,
    return
  }
  func.func @transform_0(%arg0: i32) -> (i32, i32) {
    %c0_i32 = arith.constant 0 : i32
    %c0_i32_0 = arith.constant 0 : i32
    return %arg0, %c0_i32 : i32, i32
  }
  func.func @transform_1(%arg0: i32) -> (i32, i32) {
    %c0_i32 = arith.constant 0 : i32
    %c0_i32_0 = arith.constant 0 : i32
    %c0_i32_1 = arith.constant 0 : i32
    return %c0_i32, %c0_i32_0 : i32, i32
  }
  func.func @transform_2(%arg0: i32) -> (i32, i32) {
    %c0_i32 = arith.constant 0 : i32
    %c0_i32_0 = arith.constant 0 : i32
    %c0_i32_1 = arith.constant 0 : i32
    return %c0_i32, %c0_i32_0 : i32, i32
  }
  func.func @transform_3(%arg0: i32) -> (i32, i32) {
    %c0_i32 = arith.constant 0 : i32
    %c0_i32_0 = arith.constant 0 : i32
    return %arg0, %c0_i32 : i32, i32
  }
}

module attributes {stable_mosaic.version = 11 : i64} {
  func.func @_conv_matmul_kernel(%arg0: i32, %arg1: memref<168x256xbf16, #tpu.memory_space<vmem>>, %arg2: memref<256x128xbf16, #tpu.memory_space<vmem>>, %arg3: memref<168x128xbf16, #tpu.memory_space<vmem>>, %arg4: memref<8x128xf32, #tpu.memory_space<vmem>>) attributes {dimension_semantics = [#tpu.dimension_semantics<parallel>], iteration_bounds = array<i64: 1>, scalar_prefetch = 0 : i64, scratch_operands = 0 : i64, tpu.core_type = #tpu.core_type<tc>, window_params = [{transform_indices = @transform_0, window_bounds = array<i64: 168, 256>}, {pipeline_mode = #tpu.pipeline_mode<synchronous>, transform_indices = @transform_1, window_bounds = array<i64: 256, 128>}, {transform_indices = @transform_2, window_bounds = array<i64: 168, 128>}, {transform_indices = @transform_3, window_bounds = array<i64: 8, 128>}]} {
    %c0 = arith.constant 0 : index
    %c0_0 = arith.constant 0 : index
    %0 = vector.load %arg1[%c0, %c0_0] : memref<168x256xbf16, #tpu.memory_space<vmem>>, vector<168x256xbf16>
    %c0_1 = arith.constant 0 : index
    %c0_2 = arith.constant 0 : index
    %1 = vector.load %arg2[%c0_1, %c0_2] : memref<256x128xbf16, #tpu.memory_space<vmem>>, vector<256x128xbf16>
    %cst = arith.constant dense<0.000000e+00> : vector<168x128xf32>
    %2 = tpu.matmul %0, %1, %cst {dimension_numbers = #tpu.dot_dimension_numbers<[1], [0], [0], [1], [0, 0, 1, 1], [], []>} : vector<168x256xbf16>, vector<256x128xbf16>, vector<168x128xf32> -> vector<168x128xf32>
    %cst_3 = arith.constant dense<0.000000e+00> : vector<128xf32>
    %3 = vector.multi_reduction <add>, %2, %cst_3 [0] : vector<168x128xf32> to vector<128xf32>
    %4 = vector.shape_cast %3 : vector<128xf32> to vector<1x128xf32>
    %c0_4 = arith.constant 0 : index
    %c0_5 = arith.constant 0 : index
    %5 = vector.load %arg4[%c0_4, %c0_5] : memref<8x128xf32, #tpu.memory_space<vmem>>, vector<1x128xf32>
    tpu.vector_store %arg4[%c0_4, %c0_5], %4 {strides = array<i32>} : memref<8x128xf32, #tpu.memory_space<vmem>>, vector<1x128xf32>,
    %6 = arith.mulf %2, %2 : vector<168x128xf32>
    %cst_6 = arith.constant dense<0.000000e+00> : vector<128xf32>
    %7 = vector.multi_reduction <add>, %6, %cst_6 [0] : vector<168x128xf32> to vector<128xf32>
    %8 = vector.shape_cast %7 : vector<128xf32> to vector<1x128xf32>
    %c1 = arith.constant 1 : index
    %c0_7 = arith.constant 0 : index
    %9 = vector.load %arg4[%c1, %c0_7] : memref<8x128xf32, #tpu.memory_space<vmem>>, vector<1x128xf32>
    tpu.vector_store %arg4[%c1, %c0_7], %8 {strides = array<i32>} : memref<8x128xf32, #tpu.memory_space<vmem>>, vector<1x128xf32>,
    %10 = arith.truncf %2 : vector<168x128xf32> to vector<168x128xbf16>
    %c0_8 = arith.constant 0 : index
    %c0_9 = arith.constant 0 : index
    %11 = vector.load %arg3[%c0_8, %c0_9] : memref<168x128xbf16, #tpu.memory_space<vmem>>, vector<168x128xbf16>
    tpu.vector_store %arg3[%c0_8, %c0_9], %10 {strides = array<i32>} : memref<168x128xbf16, #tpu.memory_space<vmem>>, vector<168x128xbf16>,
    return
  }
  func.func @transform_0(%arg0: i32) -> (i32, i32) {
    %c0_i32 = arith.constant 0 : i32
    %c0_i32_0 = arith.constant 0 : i32
    return %arg0, %c0_i32 : i32, i32
  }
  func.func @transform_1(%arg0: i32) -> (i32, i32) {
    %c0_i32 = arith.constant 0 : i32
    %c0_i32_0 = arith.constant 0 : i32
    %c0_i32_1 = arith.constant 0 : i32
    return %c0_i32, %c0_i32_0 : i32, i32
  }
  func.func @transform_2(%arg0: i32) -> (i32, i32) {
    %c0_i32 = arith.constant 0 : i32
    %c0_i32_0 = arith.constant 0 : i32
    return %arg0, %c0_i32 : i32, i32
  }
  func.func @transform_3(%arg0: i32) -> (i32, i32) {
    %c0_i32 = arith.constant 0 : i32
    %c0_i32_0 = arith.constant 0 : i32
    return %arg0, %c0_i32 : i32, i32
  }
}

module attributes {stable_mosaic.version = 11 : i64} {
  func.func @_affine_relu_kernel(%arg0: i32, %arg1: memref<168x128xbf16, #tpu.memory_space<vmem>>, %arg2: memref<1x128xf32, #tpu.memory_space<vmem>>, %arg3: memref<1x128xf32, #tpu.memory_space<vmem>>, %arg4: memref<168x128xbf16, #tpu.memory_space<vmem>>) attributes {dimension_semantics = [#tpu.dimension_semantics<parallel>], iteration_bounds = array<i64: 1>, scalar_prefetch = 0 : i64, scratch_operands = 0 : i64, tpu.core_type = #tpu.core_type<tc>, window_params = [{transform_indices = @transform_0, window_bounds = array<i64: 168, 128>}, {pipeline_mode = #tpu.pipeline_mode<synchronous>, transform_indices = @transform_1, window_bounds = array<i64: 1, 128>}, {pipeline_mode = #tpu.pipeline_mode<synchronous>, transform_indices = @transform_2, window_bounds = array<i64: 1, 128>}, {transform_indices = @transform_3, window_bounds = array<i64: 168, 128>}]} {
    %c0 = arith.constant 0 : index
    %c0_0 = arith.constant 0 : index
    %0 = vector.load %arg1[%c0, %c0_0] : memref<168x128xbf16, #tpu.memory_space<vmem>>, vector<168x128xbf16>
    %1 = arith.extf %0 : vector<168x128xbf16> to vector<168x128xf32>
    %c0_1 = arith.constant 0 : index
    %c0_2 = arith.constant 0 : index
    %2 = vector.load %arg2[%c0_1, %c0_2] : memref<1x128xf32, #tpu.memory_space<vmem>>, vector<1x128xf32>
    %3 = vector.broadcast %2 : vector<1x128xf32> to vector<168x128xf32>
    %4 = arith.mulf %1, %3 : vector<168x128xf32>
    %c0_3 = arith.constant 0 : index
    %c0_4 = arith.constant 0 : index
    %5 = vector.load %arg3[%c0_3, %c0_4] : memref<1x128xf32, #tpu.memory_space<vmem>>, vector<1x128xf32>
    %6 = vector.broadcast %5 : vector<1x128xf32> to vector<168x128xf32>
    %7 = arith.addf %4, %6 : vector<168x128xf32>
    %cst = arith.constant 0.000000e+00 : f32
    %8 = vector.broadcast %cst : f32 to vector<168x128xf32>
    %9 = arith.maximumf %7, %8 : vector<168x128xf32>
    %10 = arith.truncf %9 : vector<168x128xf32> to vector<168x128xbf16>
    %c0_5 = arith.constant 0 : index
    %c0_6 = arith.constant 0 : index
    %11 = vector.load %arg4[%c0_5, %c0_6] : memref<168x128xbf16, #tpu.memory_space<vmem>>, vector<168x128xbf16>
    tpu.vector_store %arg4[%c0_5, %c0_6], %10 {strides = array<i32>} : memref<168x128xbf16, #tpu.memory_space<vmem>>, vector<168x128xbf16>,
    return
  }
  func.func @transform_0(%arg0: i32) -> (i32, i32) {
    %c0_i32 = arith.constant 0 : i32
    %c0_i32_0 = arith.constant 0 : i32
    return %arg0, %c0_i32 : i32, i32
  }
  func.func @transform_1(%arg0: i32) -> (i32, i32) {
    %c0_i32 = arith.constant 0 : i32
    %c0_i32_0 = arith.constant 0 : i32
    %c0_i32_1 = arith.constant 0 : i32
    return %c0_i32, %c0_i32_0 : i32, i32
  }
  func.func @transform_2(%arg0: i32) -> (i32, i32) {
    %c0_i32 = arith.constant 0 : i32
    %c0_i32_0 = arith.constant 0 : i32
    %c0_i32_1 = arith.constant 0 : i32
    return %c0_i32, %c0_i32_0 : i32, i32
  }
  func.func @transform_3(%arg0: i32) -> (i32, i32) {
    %c0_i32 = arith.constant 0 : i32
    %c0_i32_0 = arith.constant 0 : i32
    return %arg0, %c0_i32 : i32, i32
  }
}

module attributes {stable_mosaic.version = 11 : i64} {
  func.func @_conv_matmul_kernel(%arg0: i32, %arg1: memref<296x128xbf16, #tpu.memory_space<vmem>>, %arg2: memref<128x128xbf16, #tpu.memory_space<vmem>>, %arg3: memref<296x128xbf16, #tpu.memory_space<vmem>>, %arg4: memref<8x128xf32, #tpu.memory_space<vmem>>) attributes {dimension_semantics = [#tpu.dimension_semantics<parallel>], iteration_bounds = array<i64: 2>, scalar_prefetch = 0 : i64, scratch_operands = 0 : i64, tpu.core_type = #tpu.core_type<tc>, window_params = [{transform_indices = @transform_0, window_bounds = array<i64: 296, 128>}, {pipeline_mode = #tpu.pipeline_mode<synchronous>, transform_indices = @transform_1, window_bounds = array<i64: 128, 128>}, {transform_indices = @transform_2, window_bounds = array<i64: 296, 128>}, {transform_indices = @transform_3, window_bounds = array<i64: 8, 128>}]} {
    %c0 = arith.constant 0 : index
    %c0_0 = arith.constant 0 : index
    %0 = vector.load %arg1[%c0, %c0_0] : memref<296x128xbf16, #tpu.memory_space<vmem>>, vector<296x128xbf16>
    %c0_1 = arith.constant 0 : index
    %c0_2 = arith.constant 0 : index
    %1 = vector.load %arg2[%c0_1, %c0_2] : memref<128x128xbf16, #tpu.memory_space<vmem>>, vector<128x128xbf16>
    %cst = arith.constant dense<0.000000e+00> : vector<296x128xf32>
    %2 = tpu.matmul %0, %1, %cst {dimension_numbers = #tpu.dot_dimension_numbers<[1], [0], [0], [1], [0, 0, 1, 1], [], []>} : vector<296x128xbf16>, vector<128x128xbf16>, vector<296x128xf32> -> vector<296x128xf32>
    %cst_3 = arith.constant dense<0.000000e+00> : vector<128xf32>
    %3 = vector.multi_reduction <add>, %2, %cst_3 [0] : vector<296x128xf32> to vector<128xf32>
    %4 = vector.shape_cast %3 : vector<128xf32> to vector<1x128xf32>
    %c0_4 = arith.constant 0 : index
    %c0_5 = arith.constant 0 : index
    %5 = vector.load %arg4[%c0_4, %c0_5] : memref<8x128xf32, #tpu.memory_space<vmem>>, vector<1x128xf32>
    tpu.vector_store %arg4[%c0_4, %c0_5], %4 {strides = array<i32>} : memref<8x128xf32, #tpu.memory_space<vmem>>, vector<1x128xf32>,
    %6 = arith.mulf %2, %2 : vector<296x128xf32>
    %cst_6 = arith.constant dense<0.000000e+00> : vector<128xf32>
    %7 = vector.multi_reduction <add>, %6, %cst_6 [0] : vector<296x128xf32> to vector<128xf32>
    %8 = vector.shape_cast %7 : vector<128xf32> to vector<1x128xf32>
    %c1 = arith.constant 1 : index
    %c0_7 = arith.constant 0 : index
    %9 = vector.load %arg4[%c1, %c0_7] : memref<8x128xf32, #tpu.memory_space<vmem>>, vector<1x128xf32>
    tpu.vector_store %arg4[%c1, %c0_7], %8 {strides = array<i32>} : memref<8x128xf32, #tpu.memory_space<vmem>>, vector<1x128xf32>,
    %10 = arith.truncf %2 : vector<296x128xf32> to vector<296x128xbf16>
    %c0_8 = arith.constant 0 : index
    %c0_9 = arith.constant 0 : index
    %11 = vector.load %arg3[%c0_8, %c0_9] : memref<296x128xbf16, #tpu.memory_space<vmem>>, vector<296x128xbf16>
    tpu.vector_store %arg3[%c0_8, %c0_9], %10 {strides = array<i32>} : memref<296x128xbf16, #tpu.memory_space<vmem>>, vector<296x128xbf16>,
    return
  }
  func.func @transform_0(%arg0: i32) -> (i32, i32) {
    %c0_i32 = arith.constant 0 : i32
    %c0_i32_0 = arith.constant 0 : i32
    return %arg0, %c0_i32 : i32, i32
  }
  func.func @transform_1(%arg0: i32) -> (i32, i32) {
    %c0_i32 = arith.constant 0 : i32
    %c0_i32_0 = arith.constant 0 : i32
    %c0_i32_1 = arith.constant 0 : i32
    return %c0_i32, %c0_i32_0 : i32, i32
  }
  func.func @transform_2(%arg0: i32) -> (i32, i32) {
    %c0_i32 = arith.constant 0 : i32
    %c0_i32_0 = arith.constant 0 : i32
    return %arg0, %c0_i32 : i32, i32
  }
  func.func @transform_3(%arg0: i32) -> (i32, i32) {
    %c0_i32 = arith.constant 0 : i32
    %c0_i32_0 = arith.constant 0 : i32
    return %arg0, %c0_i32 : i32, i32
  }
}

module attributes {stable_mosaic.version = 11 : i64} {
  func.func @_affine_relu_kernel(%arg0: i32, %arg1: memref<296x128xbf16, #tpu.memory_space<vmem>>, %arg2: memref<1x128xf32, #tpu.memory_space<vmem>>, %arg3: memref<1x128xf32, #tpu.memory_space<vmem>>, %arg4: memref<296x128xbf16, #tpu.memory_space<vmem>>) attributes {dimension_semantics = [#tpu.dimension_semantics<parallel>], iteration_bounds = array<i64: 2>, scalar_prefetch = 0 : i64, scratch_operands = 0 : i64, tpu.core_type = #tpu.core_type<tc>, window_params = [{transform_indices = @transform_0, window_bounds = array<i64: 296, 128>}, {pipeline_mode = #tpu.pipeline_mode<synchronous>, transform_indices = @transform_1, window_bounds = array<i64: 1, 128>}, {pipeline_mode = #tpu.pipeline_mode<synchronous>, transform_indices = @transform_2, window_bounds = array<i64: 1, 128>}, {transform_indices = @transform_3, window_bounds = array<i64: 296, 128>}]} {
    %c0 = arith.constant 0 : index
    %c0_0 = arith.constant 0 : index
    %0 = vector.load %arg1[%c0, %c0_0] : memref<296x128xbf16, #tpu.memory_space<vmem>>, vector<296x128xbf16>
    %1 = arith.extf %0 : vector<296x128xbf16> to vector<296x128xf32>
    %c0_1 = arith.constant 0 : index
    %c0_2 = arith.constant 0 : index
    %2 = vector.load %arg2[%c0_1, %c0_2] : memref<1x128xf32, #tpu.memory_space<vmem>>, vector<1x128xf32>
    %3 = vector.broadcast %2 : vector<1x128xf32> to vector<296x128xf32>
    %4 = arith.mulf %1, %3 : vector<296x128xf32>
    %c0_3 = arith.constant 0 : index
    %c0_4 = arith.constant 0 : index
    %5 = vector.load %arg3[%c0_3, %c0_4] : memref<1x128xf32, #tpu.memory_space<vmem>>, vector<1x128xf32>
    %6 = vector.broadcast %5 : vector<1x128xf32> to vector<296x128xf32>
    %7 = arith.addf %4, %6 : vector<296x128xf32>
    %cst = arith.constant 0.000000e+00 : f32
    %8 = vector.broadcast %cst : f32 to vector<296x128xf32>
    %9 = arith.maximumf %7, %8 : vector<296x128xf32>
    %10 = arith.truncf %9 : vector<296x128xf32> to vector<296x128xbf16>
    %c0_5 = arith.constant 0 : index
    %c0_6 = arith.constant 0 : index
    %11 = vector.load %arg4[%c0_5, %c0_6] : memref<296x128xbf16, #tpu.memory_space<vmem>>, vector<296x128xbf16>
    tpu.vector_store %arg4[%c0_5, %c0_6], %10 {strides = array<i32>} : memref<296x128xbf16, #tpu.memory_space<vmem>>, vector<296x128xbf16>,
    return
  }
  func.func @transform_0(%arg0: i32) -> (i32, i32) {
    %c0_i32 = arith.constant 0 : i32
    %c0_i32_0 = arith.constant 0 : i32
    return %arg0, %c0_i32 : i32, i32
  }
  func.func @transform_1(%arg0: i32) -> (i32, i32) {
    %c0_i32 = arith.constant 0 : i32
    %c0_i32_0 = arith.constant 0 : i32
    %c0_i32_1 = arith.constant 0 : i32
    return %c0_i32, %c0_i32_0 : i32, i32
  }
  func.func @transform_2(%arg0: i32) -> (i32, i32) {
    %c0_i32 = arith.constant 0 : i32
    %c0_i32_0 = arith.constant 0 : i32
    %c0_i32_1 = arith.constant 0 : i32
    return %c0_i32, %c0_i32_0 : i32, i32
  }
  func.func @transform_3(%arg0: i32) -> (i32, i32) {
    %c0_i32 = arith.constant 0 : i32
    %c0_i32_0 = arith.constant 0 : i32
    return %arg0, %c0_i32 : i32, i32
  }
}

module attributes {stable_mosaic.version = 11 : i64} {
  func.func @_conv_matmul_kernel(%arg0: i32, %arg1: memref<1096x64xbf16, #tpu.memory_space<vmem>>, %arg2: memref<64x128xbf16, #tpu.memory_space<vmem>>, %arg3: memref<1x128xf32, #tpu.memory_space<vmem>>, %arg4: memref<1096x128xbf16, #tpu.memory_space<vmem>>) attributes {dimension_semantics = [#tpu.dimension_semantics<parallel>], iteration_bounds = array<i64: 2>, scalar_prefetch = 0 : i64, scratch_operands = 0 : i64, tpu.core_type = #tpu.core_type<tc>, window_params = [{transform_indices = @transform_0, window_bounds = array<i64: 1096, 64>}, {pipeline_mode = #tpu.pipeline_mode<synchronous>, transform_indices = @transform_1, window_bounds = array<i64: 64, 128>}, {pipeline_mode = #tpu.pipeline_mode<synchronous>, transform_indices = @transform_2, window_bounds = array<i64: 1, 128>}, {transform_indices = @transform_3, window_bounds = array<i64: 1096, 128>}]} {
    %c0 = arith.constant 0 : index
    %c0_0 = arith.constant 0 : index
    %0 = vector.load %arg1[%c0, %c0_0] : memref<1096x64xbf16, #tpu.memory_space<vmem>>, vector<1096x64xbf16>
    %c0_1 = arith.constant 0 : index
    %c0_2 = arith.constant 0 : index
    %1 = vector.load %arg2[%c0_1, %c0_2] : memref<64x128xbf16, #tpu.memory_space<vmem>>, vector<64x128xbf16>
    %cst = arith.constant dense<0.000000e+00> : vector<1096x128xf32>
    %2 = tpu.matmul %0, %1, %cst {dimension_numbers = #tpu.dot_dimension_numbers<[1], [0], [0], [1], [0, 0, 1, 1], [], []>} : vector<1096x64xbf16>, vector<64x128xbf16>, vector<1096x128xf32> -> vector<1096x128xf32>
    %c0_3 = arith.constant 0 : index
    %c0_4 = arith.constant 0 : index
    %3 = vector.load %arg3[%c0_3, %c0_4] : memref<1x128xf32, #tpu.memory_space<vmem>>, vector<1x128xf32>
    %4 = vector.broadcast %3 : vector<1x128xf32> to vector<1096x128xf32>
    %5 = arith.addf %2, %4 : vector<1096x128xf32>
    %6 = math.tanh %5 : vector<1096x128xf32>
    %7 = arith.truncf %6 : vector<1096x128xf32> to vector<1096x128xbf16>
    %c0_5 = arith.constant 0 : index
    %c0_6 = arith.constant 0 : index
    %8 = vector.load %arg4[%c0_5, %c0_6] : memref<1096x128xbf16, #tpu.memory_space<vmem>>, vector<1096x128xbf16>
    tpu.vector_store %arg4[%c0_5, %c0_6], %7 {strides = array<i32>} : memref<1096x128xbf16, #tpu.memory_space<vmem>>, vector<1096x128xbf16>,
    return
  }
  func.func @transform_0(%arg0: i32) -> (i32, i32) {
    %c0_i32 = arith.constant 0 : i32
    %c0_i32_0 = arith.constant 0 : i32
    return %arg0, %c0_i32 : i32, i32
  }
  func.func @transform_1(%arg0: i32) -> (i32, i32) {
    %c0_i32 = arith.constant 0 : i32
    %c0_i32_0 = arith.constant 0 : i32
    %c0_i32_1 = arith.constant 0 : i32
    return %c0_i32, %c0_i32_0 : i32, i32
  }
  func.func @transform_2(%arg0: i32) -> (i32, i32) {
    %c0_i32 = arith.constant 0 : i32
    %c0_i32_0 = arith.constant 0 : i32
    %c0_i32_1 = arith.constant 0 : i32
    return %c0_i32, %c0_i32_0 : i32, i32
  }
  func.func @transform_3(%arg0: i32) -> (i32, i32) {
    %c0_i32 = arith.constant 0 : i32
    %c0_i32_0 = arith.constant 0 : i32
    return %arg0, %c0_i32 : i32, i32
  }
}

</mosaic_0001>

<llo_original>
// kernel: tile.68
$region0: #{tile.68}
  #allocation2 [shape = 's32[1]{0}', space=sflag, size = 0x4, scoped, tag = 'scoped memory for tile.68']
  %s0 = inlined_call_operand.hbm [shape: f32[32], index: 0, kind: input, shape index: {}]
  %s1 = inlined_call_operand.vmem [shape: f32[4,32], index: 1, kind: output, shape index: {}]
  $region1: #{tile.68} parent=0
    #allocation0 [shape = 'u8[512]{0}', space=vmem, size = 0x400, scoped, tag = 'operand span for operand 0']
    #allocation1 [shape = 's32[1]{0}', space=sflag, size = 0x4, scoped, tag = 'scoped memory for tile.68']
    %2 = vsyncpa [#allocation1], 0
    // Predicated region
    $region2: #{tile.68} parent=1 // pred_check
      _
    $region3: #{tile.68} parent=1 // pred_check_branch
      %4 = sbr.rel (0) target = $region5
    $region4: #{tile.68} parent=1 // pred_region
      %s6 = ssub.s32 16, 16
      %7 = vsyncadd [#allocation1], %s6
      %s9 = sshll.u32 [#allocation0], 4
      %s10 = int_to_ptr.vmem [resolvable:$true] %s9
      %12 = dma.hbm_to_vmem [thread:$0]  %s0, 16, %s10, [#allocation1]
    $region5: #{tile.68} parent=1 // pred_fallthru
      _
    // Predicated region
    $region6: #{tile.68} parent=1 // pred_check
      _
    $region7: #{tile.68} parent=1 // pred_check_branch
      %14 = sbr.rel (0) target = $region9
    $region8: #{tile.68} parent=1 // pred_region
      %15 = dma.done [#allocation1], 16
    $region9: #{tile.68} parent=1 // pred_fallthru
      _
    %v16 = vld [vmem:[#allocation0] ss:$0 sm:$0xff]
    %17 = vst [vmem:[%s1] sm:$0xf] %v16
    %18 = vsyncpa [#allocation1], 1

// kernel: tile.69
$region0: #{tile.69}
  %s0 = inlined_call_operand.vmem [shape: f32[4,32], index: 0, kind: input, shape index: {}]
  %s1 = inlined_call_operand.vmem [shape: f32[1,128], index: 1, kind: output, shape index: {}]
  $region1: #{tile.69} parent=0
    #allocation0 [shape = 'u8[4096]{0}', space=vmem, size = 0x1000, scoped, tag = 'scoped mem for output reshape']
    #allocation1 [shape = 'u8[4096]{0}', space=vmem, size = 0x1000, scoped, tag = 'scoped mem for input reshape']
    %s3 = sshllo.u32 0, 4
    %v4 = vld [vmem:[%s0] sm:%s3]
    %5 = vst [vmem:[#allocation1] sm:%s3] %v4
    %v6 = vld [vmem:[#allocation1] sm:$0x1]
    %vm7 = vcmask 261120
    %8 = vst.msk [vmem:[#allocation0] sm:$0x1] %vm7, %v6
    %s9 = scalar_lea.vmem [#allocation1], 3
    %v10 = vld [vmem:[%s9] sm:$0x1]
    %11 = vrot.lane.b32.xlu0 %v10, 96
    %v12 = vpop.permute.xlu0 %11
    %vm13 = vcmask 1048320
    %14 = vst.msk [vmem:[#allocation0] sm:$0x1] %vm13, %v12
    %s15 = scalar_lea.vmem [#allocation1], 2
    %v16 = vld [vmem:[%s15] sm:$0x1]
    %17 = vrot.lane.b32.xlu0 %v16, 64
    %v18 = vpop.permute.xlu0 %17
    %vm19 = vcmask 785920
    %20 = vst.msk [vmem:[#allocation0] sm:$0x1] %vm19, %v18
    %s21 = scalar_lea.vmem [#allocation1], 1
    %v22 = vld [vmem:[%s21] sm:$0x1]
    %23 = vrot.lane.b32.xlu0 %v22, 32
    %v24 = vpop.permute.xlu0 %23
    %vm25 = vcmask 523520
    %26 = vst.msk [vmem:[#allocation0] sm:$0x1] %vm25, %v24
    %s28 = sshllo.u32 0, 1
    %v30 = vld [vmem:[#allocation0] sm:%s28]
    %s31 = sshllo.u32 0, 1
    %32 = vst [vmem:[%s1] sm:%s31] %v30

// kernel: _lambda_.9
$region0: #{_lambda_.9}
  #allocation0 [shape = 'u32[]', space=smem, size = 0x4, offset = 0x4, fixed_abs, tag = 'smem constant byte address 0x4 - core index']
  #allocation1 [shape = 'u32[144,128]{1,0:T(1,128)}', space=vmem, size = 0x12000, scoped, tag = 'internal scratch']
  %s0 = inlined_call_operand.vmem [shape: bf16[32,128], index: 0, kind: input, shape index: {}]
  %s1 = inlined_call_operand.hbm [shape: bf16[128,128], index: 1, kind: input, shape index: {}]
  %s2 = inlined_call_operand.vmem [shape: bf16[32,128], index: 2, kind: output, shape index: {0}]
  %s3 = inlined_call_operand.vmem [shape: f32[8,128], index: 3, kind: output, shape index: {1}]
  %4 = xla_tuple %s2, %s3
  %s5 = sld [smem:[#allocation0]]
  $region30: #{_lambda_.9} parent=0
    _
  %s7 = ssub.s32 1, %s5
  %s8 = scalar_select 0, %s7, %s5
  $region1: #{_lambda_.9} parent=0
    #allocation2 [shape = 'u8[32768]{0}', space=vmem, size = 0x8000, scoped, tag = 'input window, operand 1, single buffered']
    #allocation3 [shape = 's32[1]{0}', space=sflag, size = 0x4, scoped, tag = 'scoped memory for _lambda_.9']
    %9 = vsyncpa [#allocation3], 0
    // Predicated region
    $region2: #{_lambda_.9} parent=1 // pred_check
      _
    $region3: #{_lambda_.9} parent=1 // pred_check_branch
      %11 = sbr.rel (0) target = $region5
    $region4: #{_lambda_.9} parent=1 // pred_region
      _
    $region5: #{_lambda_.9} parent=1 // pred_fallthru
      _
    // Predicated region
    $region6: #{_lambda_.9} parent=1 // pred_check
      _
    $region7: #{_lambda_.9} parent=1 // pred_check_branch
      %13 = sbr.rel (0) target = $region9
    $region8: #{_lambda_.9} parent=1 // pred_region
      %s15 = ssub.s32 1024, 1024
      %16 = vsyncadd [#allocation3], %s15
      %s17 = sshll.u32 [#allocation2], 4
      %s18 = int_to_ptr.vmem [resolvable:$true] %s17
      %23 = dma.hbm_to_vmem [thread:$0]  %s1, 1024, %s18, [#allocation3], 64, 64, 4
    $region9: #{_lambda_.9} parent=1 // pred_fallthru
      _
    // Predicated region
    $region10: #{_lambda_.9} parent=1 // pred_check
      _
    $region11: #{_lambda_.9} parent=1 // pred_check_branch
      %25 = sbr.rel (0) target = $region13
    $region12: #{_lambda_.9} parent=1 // pred_region
      %26 = dma.done [#allocation3], 1024
    $region13: #{_lambda_.9} parent=1 // pred_fallthru
      _
    %v28 = vld [vmem:[%s0] sm:$0xf]
    %v29 = vld [vmem:[%s0 + $0x4] sm:$0xf]
    %v30 = vld [vmem:[%s0 + $0x8] sm:$0xf]
    %v31 = vld [vmem:[%s0 + $0xc] sm:$0xf]
    %v32 = vld [vmem:[#allocation2] sm:$0xf]
    %v33 = vld [vmem:[#allocation2 + $0x4] sm:$0xf]
    %v34 = vld [vmem:[#allocation2 + $0x8] sm:$0xf]
    %v35 = vld [vmem:[#allocation2 + $0xc] sm:$0xf]
    %v36 = vld [vmem:[#allocation2 + $0x10] sm:$0xf]
    %v37 = vld [vmem:[#allocation2 + $0x14] sm:$0xf]
    %v38 = vld [vmem:[#allocation2 + $0x18] sm:$0xf]
    %v39 = vld [vmem:[#allocation2 + $0x1c] sm:$0xf]
    %v40 = vld [vmem:[#allocation2 + $0x20] sm:$0xf]
    %v41 = vld [vmem:[#allocation2 + $0x24] sm:$0xf]
    %v42 = vld [vmem:[#allocation2 + $0x28] sm:$0xf]
    %v43 = vld [vmem:[#allocation2 + $0x2c] sm:$0xf]
    %v44 = vld [vmem:[#allocation2 + $0x30] sm:$0xf]
    %v45 = vld [vmem:[#allocation2 + $0x34] sm:$0xf]
    %v46 = vld [vmem:[#allocation2 + $0x38] sm:$0xf]
    %v47 = vld [vmem:[#allocation2 + $0x3c] sm:$0xf]
    %v52 = vunpack.c.l.b16 %v28
    %v53 = vunpack.c.l.b16 %v29
    %v54 = vunpack.c.l.b16 %v30
    %v55 = vunpack.c.l.b16 %v31
    %v56 = vpack.c.b16 %v53, %v52
    %v57 = vpack.c.b16 %v55, %v54
    %v76 = vunpack.c.l.b16 %v32
    %v77 = vunpack.c.l.b16 %v33
    %v78 = vunpack.c.l.b16 %v34
    %v79 = vunpack.c.l.b16 %v35
    %v80 = vunpack.c.l.b16 %v36
    %v81 = vunpack.c.l.b16 %v37
    %v82 = vunpack.c.l.b16 %v38
    %v83 = vunpack.c.l.b16 %v39
    %v84 = vunpack.c.l.b16 %v40
    %v85 = vunpack.c.l.b16 %v41
    %v86 = vunpack.c.l.b16 %v42
    %v87 = vunpack.c.l.b16 %v43
    %v88 = vunpack.c.l.b16 %v44
    %v89 = vunpack.c.l.b16 %v45
    %v90 = vunpack.c.l.b16 %v46
    %v91 = vunpack.c.l.b16 %v47
    %v92 = vpack.c.b16 %v77, %v76
    %v93 = vpack.c.b16 %v79, %v78
    %v94 = vpack.c.b16 %v81, %v80
    %v95 = vpack.c.b16 %v83, %v82
    %v96 = vpack.c.b16 %v85, %v84
    %v97 = vpack.c.b16 %v87, %v86
    %v98 = vpack.c.b16 %v89, %v88
    %v99 = vpack.c.b16 %v91, %v90
    %108 = vmatprep.subr.bf16.mxu0 0
    %109 = vmatpush1.bf16.msra.mxu0 %v92
    %110 = vmatprep.subr.bf16.mxu0 0
    %111 = vmatpush1.bf16.msra.mxu0 %v93
    %112 = vmatprep.subr.bf16.mxu0 0
    %113 = vmatpush1.bf16.msra.mxu0 %v94
    %114 = vmatprep.subr.bf16.mxu0 0
    %115 = vmatpush1.bf16.msra.mxu0 %v95
    %116 = vmatprep.subr.bf16.mxu0 0
    %117 = vmatpush1.bf16.msra.mxu0 %v96
    %118 = vmatprep.subr.bf16.mxu0 0
    %119 = vmatpush1.bf16.msra.mxu0 %v97
    %120 = vmatprep.subr.bf16.mxu0 0
    %121 = vmatpush1.bf16.msra.mxu0 %v98
    %122 = vmatprep.subr.bf16.mxu0 0
    %123 = vmatpush1.bf16.msra.mxu0 %v99
    %124 = vmatprep.subr.bf16.mxu0 0
    %125 = vmatpush1.bf16.msra.mxu0 0
    %126 = vmatprep.subr.bf16.mxu0 0
    %127 = vmatpush1.bf16.msra.mxu0 0
    %128 = vmatprep.subr.bf16.mxu0 0
    %129 = vmatpush1.bf16.msra.mxu0 0
    %130 = vmatprep.subr.bf16.mxu0 0
    %131 = vmatpush1.bf16.msra.mxu0 0
    %132 = vmatprep.subr.bf16.mxu0 0
    %133 = vmatpush1.bf16.msra.mxu0 0
    %134 = vmatprep.subr.bf16.mxu0 0
    %135 = vmatpush1.bf16.msra.mxu0 0
    %136 = vmatprep.subr.bf16.mxu0 0
    %137 = vmatpush1.bf16.msra.mxu0 0
    %138 = vmatprep.subr.bf16.mxu0 0
    %139 = vmatpush1.bf16.msra.mxu0 0
    %140 = vmatprep.mubr.bf16.mxu0 0
    %141 = vmatmul.mubr.bf16.gmra.mrb[0].mxu0 %v56
    %v142 = vpop.f32.mrb[0].mxu0
    %v143 = vadd.f32 0.0, %v142
    %v144 = vpop.f32.mrb[0].mxu0
    %v145 = vpop.f32.mrb[0].mxu0
    %v146 = vadd.f32 0.0, %v145
    %v147 = vpop.f32.mrb[0].mxu0
    %148 = vmatprep.mubr.bf16.mxu0 0
    %149 = vmatmul.mubr.bf16.gmra.mrb[0].mxu0 %v57
    %v150 = vpop.f32.mrb[0].mxu0
    %v151 = vadd.f32 0.0, %v150
    %v152 = vpop.f32.mrb[0].mxu0
    %v153 = vpop.f32.mrb[0].mxu0
    %v154 = vadd.f32 0.0, %v153
    %v155 = vpop.f32.mrb[0].mxu0
    %156 = vdwg.mxu0
    %v157 = vadd.f32 %v143, %v146
    %v158 = vadd.f32 %v157, %v151
    %v159 = vadd.f32 %v158, %v154
    %v160 = vrot.slane %v159, 4
    %v161 = vadd.f32 %v159, %v160
    %v162 = vrot.slane %v161, 2
    %v163 = vadd.f32 %v161, %v162
    %v164 = vrot.slane %v163, 1
    %v165 = vadd.f32 %v163, %v164
    %166 = vst [vmem:[%s3] sm:$0x1] %v165
    %v167 = vmul.f32 %v143, %v143
    %v168 = vmul.f32 %v146, %v146
    %v169 = vmul.f32 %v151, %v151
    %v170 = vmul.f32 %v154, %v154
    %v171 = vadd.f32 %v167, %v168
    %v172 = vadd.f32 %v171, %v169
    %v173 = vadd.f32 %v172, %v170
    %v174 = vrot.slane %v173, 4
    %v175 = vadd.f32 %v173, %v174
    %v176 = vrot.slane %v175, 2
    %v177 = vadd.f32 %v175, %v176
    %v178 = vrot.slane %v177, 1
    %v179 = vadd.f32 %v177, %v178
    %180 = vst [vmem:[%s3 + $0x1] sm:$0x1] %v179
    %v181 = vpack.c.bf16 %v146, %v143
    %v182 = vpack.c.bf16 %v154, %v151
    %v185 = vunpack.c.l.b16 %v181
    %v186 = vunpack.c.h.b16 %v181
    %v187 = vunpack.c.l.b16 %v182
    %v188 = vunpack.c.h.b16 %v182
    %v189 = vpack.c.b16 %v185, %v185
    %v190 = vpack.c.b16 %v186, %v186
    %v191 = vpack.c.b16 %v187, %v187
    %v192 = vpack.c.b16 %v188, %v188
    %197 = vst [vmem:[%s2] sm:$0xf] %v189
    %198 = vst [vmem:[%s2 + $0x4] sm:$0xf] %v190
    %199 = vst [vmem:[%s2 + $0x8] sm:$0xf] %v191
    %200 = vst [vmem:[%s2 + $0xc] sm:$0xf] %v192
    // Predicated region
    $region14: #{_lambda_.9} parent=1 // pred_check
      _
    $region15: #{_lambda_.9} parent=1 // pred_check_branch
      %202 = sbr.rel (0) target = $region17
    $region16: #{_lambda_.9} parent=1 // pred_region
      _
    $region17: #{_lambda_.9} parent=1 // pred_fallthru
      _
    // Predicated region
    $region18: #{_lambda_.9} parent=1 // pred_check
      _
    $region19: #{_lambda_.9} parent=1 // pred_check_branch
      %204 = sbr.rel (0) target = $region21
    $region20: #{_lambda_.9} parent=1 // pred_region
      _
    $region21: #{_lambda_.9} parent=1 // pred_fallthru
      _
    // Predicated region
    $region22: #{_lambda_.9} parent=1 // pred_check
      _
    $region23: #{_lambda_.9} parent=1 // pred_check_branch
      %206 = sbr.rel (0) target = $region25
    $region24: #{_lambda_.9} parent=1 // pred_region
      _
    $region25: #{_lambda_.9} parent=1 // pred_fallthru
      _
    // Predicated region
    $region26: #{_lambda_.9} parent=1 // pred_check
      _
    $region27: #{_lambda_.9} parent=1 // pred_check_branch
      %208 = sbr.rel (0) target = $region29
    $region28: #{_lambda_.9} parent=1 // pred_region
      _
    $region29: #{_lambda_.9} parent=1 // pred_fallthru
      _
    %209 = vsyncpa [#allocation3], 1

// kernel: _lambda_.10
$region0: #{_lambda_.10}
  #allocation0 [shape = 'u32[]', space=smem, size = 0x4, offset = 0x4, fixed_abs, tag = 'smem constant byte address 0x4 - core index']
  #allocation1 [shape = 'u32[144,128]{1,0:T(1,128)}', space=vmem, size = 0x12000, scoped, tag = 'internal scratch']
  %s0 = inlined_call_operand.vmem [shape: bf16[32,128], index: 0, kind: input, shape index: {}]
  %s1 = inlined_call_operand.vmem [shape: f32[1,128], index: 1, kind: input, shape index: {}]
  %s2 = inlined_call_operand.vmem [shape: f32[1,128], index: 2, kind: input, shape index: {}]
  %s3 = inlined_call_operand.vmem [shape: bf16[32,128], index: 3, kind: output, shape index: {}]
  %s4 = sld [smem:[#allocation0]]
  $region22: #{_lambda_.10} parent=0
    _
  %s6 = ssub.s32 1, %s4
  %s7 = scalar_select 0, %s6, %s4
  // Predicated region
  $region2: #{_lambda_.10} parent=0 // pred_check
    _
  $region3: #{_lambda_.10} parent=0 // pred_check_branch
    %9 = sbr.rel (0) target = $region5
  $region4: #{_lambda_.10} parent=0 // pred_region
    _
  $region5: #{_lambda_.10} parent=0 // pred_fallthru
    _
  // Predicated region
  $region6: #{_lambda_.10} parent=0 // pred_check
    _
  $region7: #{_lambda_.10} parent=0 // pred_check_branch
    %11 = sbr.rel (0) target = $region9
  $region8: #{_lambda_.10} parent=0 // pred_region
    _
  $region9: #{_lambda_.10} parent=0 // pred_fallthru
    _
  // Predicated region
  $region10: #{_lambda_.10} parent=0 // pred_check
    _
  $region11: #{_lambda_.10} parent=0 // pred_check_branch
    %13 = sbr.rel (0) target = $region13
  $region12: #{_lambda_.10} parent=0 // pred_region
    _
  $region13: #{_lambda_.10} parent=0 // pred_fallthru
    _
  %v14 = vld [vmem:[%s0] sm:$0xf]
  %v15 = vld [vmem:[%s0 + $0x4] sm:$0xf]
  %v16 = vld [vmem:[%s0 + $0x8] sm:$0xf]
  %v17 = vld [vmem:[%s0 + $0xc] sm:$0xf]
  %v18 = vunpack.c.l.bf16 %v14
  %v19 = vunpack.c.l.bf16 %v15
  %v20 = vunpack.c.l.bf16 %v16
  %v21 = vunpack.c.l.bf16 %v17
  %v22 = vld [vmem:[%s1] sm:$0x1]
  %v24 = vlaneseq
  %v25 = vshrl.u32 %v24, 7
  %v26 = vsub.s32 0, %v25
  %v27 = vrot.slane %v22, %v26
  %v29 = vmul.f32 %v18, %v27
  %v30 = vmul.f32 %v19, %v27
  %v31 = vmul.f32 %v20, %v27
  %v32 = vmul.f32 %v21, %v27
  %v33 = vld [vmem:[%s2] sm:$0x1]
  %v35 = vlaneseq
  %v36 = vshrl.u32 %v35, 7
  %v37 = vsub.s32 0, %v36
  %v38 = vrot.slane %v33, %v37
  %v40 = vadd.f32 %v29, %v38
  %v41 = vadd.f32 %v30, %v38
  %v42 = vadd.f32 %v31, %v38
  %v43 = vadd.f32 %v32, %v38
  %v44 = vmax.f32 %v40, 0.0
  %v45 = vmax.f32 %v41, 0.0
  %v46 = vmax.f32 %v42, 0.0
  %v47 = vmax.f32 %v43, 0.0
  %v48 = vpack.c.bf16 %v45, %v44
  %v49 = vpack.c.bf16 %v47, %v46
  %v52 = vunpack.c.l.b16 %v48
  %v53 = vunpack.c.h.b16 %v48
  %v54 = vunpack.c.l.b16 %v49
  %v55 = vunpack.c.h.b16 %v49
  %v56 = vpack.c.b16 %v52, %v52
  %v57 = vpack.c.b16 %v53, %v53
  %v58 = vpack.c.b16 %v54, %v54
  %v59 = vpack.c.b16 %v55, %v55
  %64 = vst [vmem:[%s3] sm:$0xf] %v56
  %65 = vst [vmem:[%s3 + $0x4] sm:$0xf] %v57
  %66 = vst [vmem:[%s3 + $0x8] sm:$0xf] %v58
  %67 = vst [vmem:[%s3 + $0xc] sm:$0xf] %v59
  // Predicated region
  $region14: #{_lambda_.10} parent=0 // pred_check
    _
  $region15: #{_lambda_.10} parent=0 // pred_check_branch
    %69 = sbr.rel (0) target = $region17
  $region16: #{_lambda_.10} parent=0 // pred_region
    _
  $region17: #{_lambda_.10} parent=0 // pred_fallthru
    _
  // Predicated region
  $region18: #{_lambda_.10} parent=0 // pred_check
    _
  $region19: #{_lambda_.10} parent=0 // pred_check_branch
    %71 = sbr.rel (0) target = $region21
  $region20: #{_lambda_.10} parent=0 // pred_region
    _
  $region21: #{_lambda_.10} parent=0 // pred_fallthru
    _

// kernel: tile.42
$region0: #{tile.42}
  #allocation0 [shape = 's32[1]{0}', space=sflag, size = 0x4, scoped, tag = 'scoped memory for tile.42']
  %s0 = inlined_call_operand.vmem [shape: f32[64], index: 0, kind: input, shape index: {}]
  %s1 = inlined_call_operand.vmem [shape: f32[4,64], index: 1, kind: output, shape index: {}]
  // Predicated region
  $region2: #{tile.42} parent=0 // pred_check
    _
  $region3: #{tile.42} parent=0 // pred_check_branch
    %3 = sbr.rel (0) target = $region5
  $region4: #{tile.42} parent=0 // pred_region
    _
  $region5: #{tile.42} parent=0 // pred_fallthru
    _
  %v4 = vld [vmem:[%s0] ss:$0 sm:$0xff]
  %5 = vst [vmem:[%s1] sm:$0xf] %v4

// kernel: tile.44
$region0: #{tile.44}
  %s0 = inlined_call_operand.vmem [shape: f32[4,64], index: 0, kind: input, shape index: {}]
  %s1 = inlined_call_operand.vmem [shape: f32[1,256], index: 1, kind: output, shape index: {}]
  $region1: #{tile.44} parent=0
    #allocation0 [shape = 'u8[8192]{0}', space=vmem, size = 0x2000, scoped, tag = 'scoped mem for output reshape']
    #allocation1 [shape = 'u8[4096]{0}', space=vmem, size = 0x1000, scoped, tag = 'scoped mem for input reshape']
    %s3 = sshllo.u32 0, 4
    %v4 = vld [vmem:[%s0] sm:%s3]
    %5 = vst [vmem:[#allocation1] sm:%s3] %v4
    %s6 = smov 3
    %v7 = vld [vmem:[#allocation1] ss:$2 sm:%s6]
    %vm8 = vcmask 523264
    %9 = vst.msk [vmem:[#allocation0] ss:$8 sm:$0x3] %vm8, %v7
    %s10 = scalar_lea.vmem [#allocation1], 1
    %s11 = smov 3
    %v12 = vld [vmem:[%s10] ss:$2 sm:%s11]
    %13 = vrot.lane.b32.xlu0 %v12, 64
    %v14 = vpop.permute.xlu0 %13
    %vm15 = vcmask 1048064
    %16 = vst.msk [vmem:[#allocation0] ss:$8 sm:$0x3] %vm15, %v14
    %s18 = sshllo.u32 0, 1
    %v20 = vld [vmem:[#allocation0] sm:%s18]
    %s21 = sshllo.u32 0, 1
    %22 = vst [vmem:[%s1] sm:%s21] %v20
    %s23 = scalar_lea.vmem [#allocation0], 8
    %v24 = vld [vmem:[%s23] sm:%s18]
    %s25 = sshllo.u32 0, 1
    %s26 = scalar_lea.vmem %s1, 1
    %27 = vst [vmem:[%s26] sm:%s25] %v24

// kernel: _lambda_.11
$region0: #{_lambda_.11}
  #allocation0 [shape = 'u32[]', space=smem, size = 0x4, offset = 0x4, fixed_abs, tag = 'smem constant byte address 0x4 - core index']
  #allocation1 [shape = 'u32[144,128]{1,0:T(1,128)}', space=vmem, size = 0x12000, scoped, tag = 'internal scratch']
  %s0 = inlined_call_operand.vmem [shape: bf16[56,512], index: 0, kind: input, shape index: {}]
  %s1 = inlined_call_operand.vmem [shape: bf16[512,256], index: 1, kind: input, shape index: {}]
  %s2 = inlined_call_operand.vmem [shape: bf16[56,256], index: 2, kind: output, shape index: {0}]
  %s3 = inlined_call_operand.vmem [shape: f32[8,256], index: 3, kind: output, shape index: {1}]
  %4 = xla_tuple %s2, %s3
  %s5 = sld [smem:[#allocation0]]
  $region26: #{_lambda_.11} parent=0
    _
  %s7 = ssub.s32 1, %s5
  %s8 = scalar_select 0, %s7, %s5
  // Predicated region
  $region2: #{_lambda_.11} parent=0 // pred_check
    _
  $region3: #{_lambda_.11} parent=0 // pred_check_branch
    %10 = sbr.rel (0) target = $region5
  $region4: #{_lambda_.11} parent=0 // pred_region
    _
  $region5: #{_lambda_.11} parent=0 // pred_fallthru
    _
  // Predicated region
  $region6: #{_lambda_.11} parent=0 // pred_check
    _
  $region7: #{_lambda_.11} parent=0 // pred_check_branch
    %12 = sbr.rel (0) target = $region9
  $region8: #{_lambda_.11} parent=0 // pred_region
    _
  $region9: #{_lambda_.11} parent=0 // pred_fallthru
    _
  %v13 = vld [vmem:[%s0] sm:$0xff]
  %v14 = vld [vmem:[%s0 + $0x8] sm:$0xff]
  %v15 = vld [vmem:[%s0 + $0x10] sm:$0xff]
  %v16 = vld [vmem:[%s0 + $0x18] sm:$0xff]
  %v17 = vld [vmem:[%s0 + $0x20] sm:$0xff]
  %v18 = vld [vmem:[%s0 + $0x28] sm:$0xff]
  %v19 = vld [vmem:[%s0 + $0x30] sm:$0xff]
  %v20 = vld [vmem:[%s0 + $0x38] sm:$0xff]
  %v21 = vld [vmem:[%s0 + $0x40] sm:$0xff]
  %v22 = vld [vmem:[%s0 + $0x48] sm:$0xff]
  %v23 = vld [vmem:[%s0 + $0x50] sm:$0xff]
  %v24 = vld [vmem:[%s0 + $0x58] sm:$0xff]
  %v25 = vld [vmem:[%s0 + $0x60] sm:$0xff]
  %v26 = vld [vmem:[%s0 + $0x68] sm:$0xff]
  %v27 = vld [vmem:[%s1] sm:$0xff]
  %v28 = vld [vmem:[%s1 + $0x8] sm:$0xff]
  %v29 = vld [vmem:[%s1 + $0x10] sm:$0xff]
  %v30 = vld [vmem:[%s1 + $0x18] sm:$0xff]
  %v31 = vld [vmem:[%s1 + $0x20] sm:$0xff]
  %v32 = vld [vmem:[%s1 + $0x28] sm:$0xff]
  %v33 = vld [vmem:[%s1 + $0x30] sm:$0xff]
  %v34 = vld [vmem:[%s1 + $0x38] sm:$0xff]
  %v35 = vld [vmem:[%s1 + $0x40] sm:$0xff]
  %v36 = vld [vmem:[%s1 + $0x48] sm:$0xff]
  %v37 = vld [vmem:[%s1 + $0x50] sm:$0xff]
  %v38 = vld [vmem:[%s1 + $0x58] sm:$0xff]
  %v39 = vld [vmem:[%s1 + $0x60] sm:$0xff]
  %v40 = vld [vmem:[%s1 + $0x68] sm:$0xff]
  %v41 = vld [vmem:[%s1 + $0x70] sm:$0xff]
  %v42 = vld [vmem:[%s1 + $0x78] sm:$0xff]
  %v43 = vld [vmem:[%s1 + $0x80] sm:$0xff]
  %v44 = vld [vmem:[%s1 + $0x88] sm:$0xff]
  %v45 = vld [vmem:[%s1 + $0x90] sm:$0xff]
  %v46 = vld [vmem:[%s1 + $0x98] sm:$0xff]
  %v47 = vld [vmem:[%s1 + $0xa0] sm:$0xff]
  %v48 = vld [vmem:[%s1 + $0xa8] sm:$0xff]
  %v49 = vld [vmem:[%s1 + $0xb0] sm:$0xff]
  %v50 = vld [vmem:[%s1 + $0xb8] sm:$0xff]
  %v51 = vld [vmem:[%s1 + $0xc0] sm:$0xff]
  %v52 = vld [vmem:[%s1 + $0xc8] sm:$0xff]
  %v53 = vld [vmem:[%s1 + $0xd0] sm:$0xff]
  %v54 = vld [vmem:[%s1 + $0xd8] sm:$0xff]
  %v55 = vld [vmem:[%s1 + $0xe0] sm:$0xff]
  %v56 = vld [vmem:[%s1 + $0xe8] sm:$0xff]
  %v57 = vld [vmem:[%s1 + $0xf0] sm:$0xff]
  %v58 = vld [vmem:[%s1 + $0xf8] sm:$0xff]
  %v59 = vld [vmem:[%s1 + $0x100] sm:$0xff]
  %v60 = vld [vmem:[%s1 + $0x108] sm:$0xff]
  %v61 = vld [vmem:[%s1 + $0x110] sm:$0xff]
  %v62 = vld [vmem:[%s1 + $0x118] sm:$0xff]
  %v63 = vld [vmem:[%s1 + $0x120] sm:$0xff]
  %v64 = vld [vmem:[%s1 + $0x128] sm:$0xff]
  %v65 = vld [vmem:[%s1 + $0x130] sm:$0xff]
  %v66 = vld [vmem:[%s1 + $0x138] sm:$0xff]
  %v67 = vld [vmem:[%s1 + $0x140] sm:$0xff]
  %v68 = vld [vmem:[%s1 + $0x148] sm:$0xff]
  %v69 = vld [vmem:[%s1 + $0x150] sm:$0xff]
  %v70 = vld [vmem:[%s1 + $0x158] sm:$0xff]
  %v71 = vld [vmem:[%s1 + $0x160] sm:$0xff]
  %v72 = vld [vmem:[%s1 + $0x168] sm:$0xff]
  %v73 = vld [vmem:[%s1 + $0x170] sm:$0xff]
  %v74 = vld [vmem:[%s1 + $0x178] sm:$0xff]
  %v75 = vld [vmem:[%s1 + $0x180] sm:$0xff]
  %v76 = vld [vmem:[%s1 + $0x188] sm:$0xff]
  %v77 = vld [vmem:[%s1 + $0x190] sm:$0xff]
  %v78 = vld [vmem:[%s1 + $0x198] sm:$0xff]
  %v79 = vld [vmem:[%s1 + $0x1a0] sm:$0xff]
  %v80 = vld [vmem:[%s1 + $0x1a8] sm:$0xff]
  %v81 = vld [vmem:[%s1 + $0x1b0] sm:$0xff]
  %v82 = vld [vmem:[%s1 + $0x1b8] sm:$0xff]
  %v83 = vld [vmem:[%s1 + $0x1c0] sm:$0xff]
  %v84 = vld [vmem:[%s1 + $0x1c8] sm:$0xff]
  %v85 = vld [vmem:[%s1 + $0x1d0] sm:$0xff]
  %v86 = vld [vmem:[%s1 + $0x1d8] sm:$0xff]
  %v87 = vld [vmem:[%s1 + $0x1e0] sm:$0xff]
  %v88 = vld [vmem:[%s1 + $0x1e8] sm:$0xff]
  %v89 = vld [vmem:[%s1 + $0x1f0] sm:$0xff]
  %v90 = vld [vmem:[%s1 + $0x1f8] sm:$0xff]
  %v105 = vunpack.c.l.b16 %v13
  %v106 = vunpack.c.h.b16 %v13
  %v107 = vunpack.c.l.b16 %v14
  %v108 = vunpack.c.h.b16 %v14
  %v109 = vunpack.c.l.b16 %v15
  %v110 = vunpack.c.h.b16 %v15
  %v111 = vunpack.c.l.b16 %v16
  %v112 = vunpack.c.h.b16 %v16
  %v113 = vunpack.c.l.b16 %v17
  %v114 = vunpack.c.h.b16 %v17
  %v115 = vunpack.c.l.b16 %v18
  %v116 = vunpack.c.h.b16 %v18
  %v117 = vunpack.c.l.b16 %v19
  %v118 = vunpack.c.h.b16 %v19
  %v119 = vunpack.c.l.b16 %v20
  %v120 = vunpack.c.h.b16 %v20
  %v121 = vunpack.c.l.b16 %v21
  %v122 = vunpack.c.h.b16 %v21
  %v123 = vunpack.c.l.b16 %v22
  %v124 = vunpack.c.h.b16 %v22
  %v125 = vunpack.c.l.b16 %v23
  %v126 = vunpack.c.h.b16 %v23
  %v127 = vunpack.c.l.b16 %v24
  %v128 = vunpack.c.h.b16 %v24
  %v129 = vunpack.c.l.b16 %v25
  %v130 = vunpack.c.h.b16 %v25
  %v131 = vunpack.c.l.b16 %v26
  %v132 = vunpack.c.h.b16 %v26
  %v133 = vpack.c.b16 %v109, %v105
  %v134 = vpack.c.b16 %v110, %v106
  %v135 = vpack.c.b16 %v111, %v107
  %v136 = vpack.c.b16 %v112, %v108
  %v137 = vpack.c.b16 %v117, %v113
  %v138 = vpack.c.b16 %v118, %v114
  %v139 = vpack.c.b16 %v119, %v115
  %v140 = vpack.c.b16 %v120, %v116
  %v141 = vpack.c.b16 %v125, %v121
  %v142 = vpack.c.b16 %v126, %v122
  %v143 = vpack.c.b16 %v127, %v123
  %v144 = vpack.c.b16 %v128, %v124
  %v145 = vpack.c.b16 %v129, %v129
  %v146 = vpack.c.b16 %v130, %v130
  %v147 = vpack.c.b16 %v131, %v131
  %v148 = vpack.c.b16 %v132, %v132
  %v229 = vunpack.c.l.b16 %v27
  %v230 = vunpack.c.h.b16 %v27
  %v231 = vunpack.c.l.b16 %v28
  %v232 = vunpack.c.h.b16 %v28
  %v233 = vunpack.c.l.b16 %v29
  %v234 = vunpack.c.h.b16 %v29
  %v235 = vunpack.c.l.b16 %v30
  %v236 = vunpack.c.h.b16 %v30
  %v237 = vunpack.c.l.b16 %v31
  %v238 = vunpack.c.h.b16 %v31
  %v239 = vunpack.c.l.b16 %v32
  %v240 = vunpack.c.h.b16 %v32
  %v241 = vunpack.c.l.b16 %v33
  %v242 = vunpack.c.h.b16 %v33
  %v243 = vunpack.c.l.b16 %v34
  %v244 = vunpack.c.h.b16 %v34
  %v245 = vunpack.c.l.b16 %v35
  %v246 = vunpack.c.h.b16 %v35
  %v247 = vunpack.c.l.b16 %v36
  %v248 = vunpack.c.h.b16 %v36
  %v249 = vunpack.c.l.b16 %v37
  %v250 = vunpack.c.h.b16 %v37
  %v251 = vunpack.c.l.b16 %v38
  %v252 = vunpack.c.h.b16 %v38
  %v253 = vunpack.c.l.b16 %v39
  %v254 = vunpack.c.h.b16 %v39
  %v255 = vunpack.c.l.b16 %v40
  %v256 = vunpack.c.h.b16 %v40
  %v257 = vunpack.c.l.b16 %v41
  %v258 = vunpack.c.h.b16 %v41
  %v259 = vunpack.c.l.b16 %v42
  %v260 = vunpack.c.h.b16 %v42
  %v261 = vunpack.c.l.b16 %v43
  %v262 = vunpack.c.h.b16 %v43
  %v263 = vunpack.c.l.b16 %v44
  %v264 = vunpack.c.h.b16 %v44
  %v265 = vunpack.c.l.b16 %v45
  %v266 = vunpack.c.h.b16 %v45
  %v267 = vunpack.c.l.b16 %v46
  %v268 = vunpack.c.h.b16 %v46
  %v269 = vunpack.c.l.b16 %v47
  %v270 = vunpack.c.h.b16 %v47
  %v271 = vunpack.c.l.b16 %v48
  %v272 = vunpack.c.h.b16 %v48
  %v273 = vunpack.c.l.b16 %v49
  %v274 = vunpack.c.h.b16 %v49
  %v275 = vunpack.c.l.b16 %v50
  %v276 = vunpack.c.h.b16 %v50
  %v277 = vunpack.c.l.b16 %v51
  %v278 = vunpack.c.h.b16 %v51
  %v279 = vunpack.c.l.b16 %v52
  %v280 = vunpack.c.h.b16 %v52
  %v281 = vunpack.c.l.b16 %v53
  %v282 = vunpack.c.h.b16 %v53
  %v283 = vunpack.c.l.b16 %v54
  %v284 = vunpack.c.h.b16 %v54
  %v285 = vunpack.c.l.b16 %v55
  %v286 = vunpack.c.h.b16 %v55
  %v287 = vunpack.c.l.b16 %v56
  %v288 = vunpack.c.h.b16 %v56
  %v289 = vunpack.c.l.b16 %v57
  %v290 = vunpack.c.h.b16 %v57
  %v291 = vunpack.c.l.b16 %v58
  %v292 = vunpack.c.h.b16 %v58
  %v293 = vunpack.c.l.b16 %v59
  %v294 = vunpack.c.h.b16 %v59
  %v295 = vunpack.c.l.b16 %v60
  %v296 = vunpack.c.h.b16 %v60
  %v297 = vunpack.c.l.b16 %v61
  %v298 = vunpack.c.h.b16 %v61
  %v299 = vunpack.c.l.b16 %v62
  %v300 = vunpack.c.h.b16 %v62
  %v301 = vunpack.c.l.b16 %v63
  %v302 = vunpack.c.h.b16 %v63
  %v303 = vunpack.c.l.b16 %v64
  %v304 = vunpack.c.h.b16 %v64
  %v305 = vunpack.c.l.b16 %v65
  %v306 = vunpack.c.h.b16 %v65
  %v307 = vunpack.c.l.b16 %v66
  %v308 = vunpack.c.h.b16 %v66
  %v309 = vunpack.c.l.b16 %v67
  %v310 = vunpack.c.h.b16 %v67
  %v311 = vunpack.c.l.b16 %v68
  %v312 = vunpack.c.h.b16 %v68
  %v313 = vunpack.c.l.b16 %v69
  %v314 = vunpack.c.h.b16 %v69
  %v315 = vunpack.c.l.b16 %v70
  %v316 = vunpack.c.h.b16 %v70
  %v317 = vunpack.c.l.b16 %v71
  %v318 = vunpack.c.h.b16 %v71
  %v319 = vunpack.c.l.b16 %v72
  %v320 = vunpack.c.h.b16 %v72
  %v321 = vunpack.c.l.b16 %v73
  %v322 = vunpack.c.h.b16 %v73
  %v323 = vunpack.c.l.b16 %v74
  %v324 = vunpack.c.h.b16 %v74
  %v325 = vunpack.c.l.b16 %v75
  %v326 = vunpack.c.h.b16 %v75
  %v327 = vunpack.c.l.b16 %v76
  %v328 = vunpack.c.h.b16 %v76
  %v329 = vunpack.c.l.b16 %v77
  %v330 = vunpack.c.h.b16 %v77
  %v331 = vunpack.c.l.b16 %v78
  %v332 = vunpack.c.h.b16 %v78
  %v333 = vunpack.c.l.b16 %v79
  %v334 = vunpack.c.h.b16 %v79
  %v335 = vunpack.c.l.b16 %v80
  %v336 = vunpack.c.h.b16 %v80
  %v337 = vunpack.c.l.b16 %v81
  %v338 = vunpack.c.h.b16 %v81
  %v339 = vunpack.c.l.b16 %v82
  %v340 = vunpack.c.h.b16 %v82
  %v341 = vunpack.c.l.b16 %v83
  %v342 = vunpack.c.h.b16 %v83
  %v343 = vunpack.c.l.b16 %v84
  %v344 = vunpack.c.h.b16 %v84
  %v345 = vunpack.c.l.b16 %v85
  %v346 = vunpack.c.h.b16 %v85
  %v347 = vunpack.c.l.b16 %v86
  %v348 = vunpack.c.h.b16 %v86
  %v349 = vunpack.c.l.b16 %v87
  %v350 = vunpack.c.h.b16 %v87
  %v351 = vunpack.c.l.b16 %v88
  %v352 = vunpack.c.h.b16 %v88
  %v353 = vunpack.c.l.b16 %v89
  %v354 = vunpack.c.h.b16 %v89
  %v355 = vunpack.c.l.b16 %v90
  %v356 = vunpack.c.h.b16 %v90
  %v357 = vpack.c.b16 %v231, %v229
  %v358 = vpack.c.b16 %v232, %v230
  %v359 = vpack.c.b16 %v235, %v233
  %v360 = vpack.c.b16 %v236, %v234
  %v361 = vpack.c.b16 %v239, %v237
  %v362 = vpack.c.b16 %v240, %v238
  %v363 = vpack.c.b16 %v243, %v241
  %v364 = vpack.c.b16 %v244, %v242
  %v365 = vpack.c.b16 %v247, %v245
  %v366 = vpack.c.b16 %v248, %v246
  %v367 = vpack.c.b16 %v251, %v249
  %v368 = vpack.c.b16 %v252, %v250
  %v369 = vpack.c.b16 %v255, %v253
  %v370 = vpack.c.b16 %v256, %v254
  %v371 = vpack.c.b16 %v259, %v257
  %v372 = vpack.c.b16 %v260, %v258
  %v373 = vpack.c.b16 %v263, %v261
  %v374 = vpack.c.b16 %v264, %v262
  %v375 = vpack.c.b16 %v267, %v265
  %v376 = vpack.c.b16 %v268, %v266
  %v377 = vpack.c.b16 %v271, %v269
  %v378 = vpack.c.b16 %v272, %v270
  %v379 = vpack.c.b16 %v275, %v273
  %v380 = vpack.c.b16 %v276, %v274
  %v381 = vpack.c.b16 %v279, %v277
  %v382 = vpack.c.b16 %v280, %v278
  %v383 = vpack.c.b16 %v283, %v281
  %v384 = vpack.c.b16 %v284, %v282
  %v385 = vpack.c.b16 %v287, %v285
  %v386 = vpack.c.b16 %v288, %v286
  %v387 = vpack.c.b16 %v291, %v289
  %v388 = vpack.c.b16 %v292, %v290
  %v389 = vpack.c.b16 %v295, %v293
  %v390 = vpack.c.b16 %v296, %v294
  %v391 = vpack.c.b16 %v299, %v297
  %v392 = vpack.c.b16 %v300, %v298
  %v393 = vpack.c.b16 %v303, %v301
  %v394 = vpack.c.b16 %v304, %v302
  %v395 = vpack.c.b16 %v307, %v305
  %v396 = vpack.c.b16 %v308, %v306
  %v397 = vpack.c.b16 %v311, %v309
  %v398 = vpack.c.b16 %v312, %v310
  %v399 = vpack.c.b16 %v315, %v313
  %v400 = vpack.c.b16 %v316, %v314
  %v401 = vpack.c.b16 %v319, %v317
  %v402 = vpack.c.b16 %v320, %v318
  %v403 = vpack.c.b16 %v323, %v321
  %v404 = vpack.c.b16 %v324, %v322
  %v405 = vpack.c.b16 %v327, %v325
  %v406 = vpack.c.b16 %v328, %v326
  %v407 = vpack.c.b16 %v331, %v329
  %v408 = vpack.c.b16 %v332, %v330
  %v409 = vpack.c.b16 %v335, %v333
  %v410 = vpack.c.b16 %v336, %v334
  %v411 = vpack.c.b16 %v339, %v337
  %v412 = vpack.c.b16 %v340, %v338
  %v413 = vpack.c.b16 %v343, %v341
  %v414 = vpack.c.b16 %v344, %v342
  %v415 = vpack.c.b16 %v347, %v345
  %v416 = vpack.c.b16 %v348, %v346
  %v417 = vpack.c.b16 %v351, %v349
  %v418 = vpack.c.b16 %v352, %v350
  %v419 = vpack.c.b16 %v355, %v353
  %v420 = vpack.c.b16 %v356, %v354
  %485 = vmatprep.subr.bf16.mxu0 %v358
  %486 = vmatpush1.bf16.msra.mxu0 %v357
  %487 = vmatprep.subr.bf16.mxu0 %v360
  %488 = vmatpush1.bf16.msra.mxu0 %v359
  %489 = vmatprep.subr.bf16.mxu0 %v362
  %490 = vmatpush1.bf16.msra.mxu0 %v361
  %491 = vmatprep.subr.bf16.mxu0 %v364
  %492 = vmatpush1.bf16.msra.mxu0 %v363
  %493 = vmatprep.subr.bf16.mxu0 %v366
  %494 = vmatpush1.bf16.msra.mxu0 %v365
  %495 = vmatprep.subr.bf16.mxu0 %v368
  %496 = vmatpush1.bf16.msra.mxu0 %v367
  %497 = vmatprep.subr.bf16.mxu0 %v370
  %498 = vmatpush1.bf16.msra.mxu0 %v369
  %499 = vmatprep.subr.bf16.mxu0 %v372
  %500 = vmatpush1.bf16.msra.mxu0 %v371
  %501 = vmatprep.subr.bf16.mxu0 %v374
  %502 = vmatpush1.bf16.msra.mxu0 %v373
  %503 = vmatprep.subr.bf16.mxu0 %v376
  %504 = vmatpush1.bf16.msra.mxu0 %v375
  %505 = vmatprep.subr.bf16.mxu0 %v378
  %506 = vmatpush1.bf16.msra.mxu0 %v377
  %507 = vmatprep.subr.bf16.mxu0 %v380
  %508 = vmatpush1.bf16.msra.mxu0 %v379
  %509 = vmatprep.subr.bf16.mxu0 %v382
  %510 = vmatpush1.bf16.msra.mxu0 %v381
  %511 = vmatprep.subr.bf16.mxu0 %v384
  %512 = vmatpush1.bf16.msra.mxu0 %v383
  %513 = vmatprep.subr.bf16.mxu0 %v386
  %514 = vmatpush1.bf16.msra.mxu0 %v385
  %515 = vmatprep.subr.bf16.mxu0 %v388
  %516 = vmatpush1.bf16.msra.mxu0 %v387
  %517 = vmatprep.mubr.bf16.mxu0 %v134
  %518 = vmatmul.mubr.bf16.gmra.mrb[0].mxu0 %v133
  %v519 = vpop.f32.mrb[0].mxu0
  %v520 = vadd.f32 0.0, %v519
  %v521 = vpop.f32.mrb[0].mxu0
  %v522 = vadd.f32 0.0, %v521
  %v523 = vpop.f32.mrb[0].mxu0
  %v524 = vadd.f32 0.0, %v523
  %v525 = vpop.f32.mrb[0].mxu0
  %v526 = vadd.f32 0.0, %v525
  %527 = vmatprep.mubr.bf16.mxu0 %v138
  %528 = vmatmul.mubr.bf16.gmra.mrb[0].mxu0 %v137
  %v529 = vpop.f32.mrb[0].mxu0
  %v530 = vadd.f32 0.0, %v529
  %v531 = vpop.f32.mrb[0].mxu0
  %v532 = vadd.f32 0.0, %v531
  %v533 = vpop.f32.mrb[0].mxu0
  %v534 = vadd.f32 0.0, %v533
  %v535 = vpop.f32.mrb[0].mxu0
  %v536 = vadd.f32 0.0, %v535
  %537 = vmatprep.mubr.bf16.mxu0 %v142
  %538 = vmatmul.mubr.bf16.gmra.mrb[0].mxu0 %v141
  %v539 = vpop.f32.mrb[0].mxu0
  %v540 = vadd.f32 0.0, %v539
  %v541 = vpop.f32.mrb[0].mxu0
  %v542 = vadd.f32 0.0, %v541
  %v543 = vpop.f32.mrb[0].mxu0
  %v544 = vadd.f32 0.0, %v543
  %v545 = vpop.f32.mrb[0].mxu0
  %v546 = vadd.f32 0.0, %v545
  %547 = vmatprep.mubr.bf16.mxu0 %v146
  %548 = vmatmul.mubr.bf16.gmra.mrb[0].mxu0 %v145
  %v549 = vpop.f32.mrb[0].mxu0
  %v550 = vadd.f32 0.0, %v549
  %v551 = vpop.f32.mrb[0].mxu0
  %v552 = vadd.f32 0.0, %v551
  %v553 = vpop.f32.mrb[0].mxu0
  %v554 = vpop.f32.mrb[0].mxu0
  %555 = vdwg.mxu0
  %556 = vmatprep.subr.bf16.mxu0 %v390
  %557 = vmatpush1.bf16.msra.mxu0 %v389
  %558 = vmatprep.subr.bf16.mxu0 %v392
  %559 = vmatpush1.bf16.msra.mxu0 %v391
  %560 = vmatprep.subr.bf16.mxu0 %v394
  %561 = vmatpush1.bf16.msra.mxu0 %v393
  %562 = vmatprep.subr.bf16.mxu0 %v396
  %563 = vmatpush1.bf16.msra.mxu0 %v395
  %564 = vmatprep.subr.bf16.mxu0 %v398
  %565 = vmatpush1.bf16.msra.mxu0 %v397
  %566 = vmatprep.subr.bf16.mxu0 %v400
  %567 = vmatpush1.bf16.msra.mxu0 %v399
  %568 = vmatprep.subr.bf16.mxu0 %v402
  %569 = vmatpush1.bf16.msra.mxu0 %v401
  %570 = vmatprep.subr.bf16.mxu0 %v404
  %571 = vmatpush1.bf16.msra.mxu0 %v403
  %572 = vmatprep.subr.bf16.mxu0 %v406
  %573 = vmatpush1.bf16.msra.mxu0 %v405
  %574 = vmatprep.subr.bf16.mxu0 %v408
  %575 = vmatpush1.bf16.msra.mxu0 %v407
  %576 = vmatprep.subr.bf16.mxu0 %v410
  %577 = vmatpush1.bf16.msra.mxu0 %v409
  %578 = vmatprep.subr.bf16.mxu0 %v412
  %579 = vmatpush1.bf16.msra.mxu0 %v411
  %580 = vmatprep.subr.bf16.mxu0 %v414
  %581 = vmatpush1.bf16.msra.mxu0 %v413
  %582 = vmatprep.subr.bf16.mxu0 %v416
  %583 = vmatpush1.bf16.msra.mxu0 %v415
  %584 = vmatprep.subr.bf16.mxu0 %v418
  %585 = vmatpush1.bf16.msra.mxu0 %v417
  %586 = vmatprep.subr.bf16.mxu0 %v420
  %587 = vmatpush1.bf16.msra.mxu0 %v419
  %588 = vmatprep.mubr.bf16.mxu0 %v136
  %589 = vmatmul.mubr.bf16.gmra.mrb[0].mxu0 %v135
  %v590 = vpop.f32.mrb[0].mxu0
  %v591 = vadd.f32 %v520, %v590
  %v592 = vpop.f32.mrb[0].mxu0
  %v593 = vadd.f32 %v522, %v592
  %v594 = vpop.f32.mrb[0].mxu0
  %v595 = vadd.f32 %v524, %v594
  %v596 = vpop.f32.mrb[0].mxu0
  %v597 = vadd.f32 %v526, %v596
  %598 = vmatprep.mubr.bf16.mxu0 %v140
  %599 = vmatmul.mubr.bf16.gmra.mrb[0].mxu0 %v139
  %v600 = vpop.f32.mrb[0].mxu0
  %v601 = vadd.f32 %v530, %v600
  %v602 = vpop.f32.mrb[0].mxu0
  %v603 = vadd.f32 %v532, %v602
  %v604 = vpop.f32.mrb[0].mxu0
  %v605 = vadd.f32 %v534, %v604
  %v606 = vpop.f32.mrb[0].mxu0
  %v607 = vadd.f32 %v536, %v606
  %608 = vmatprep.mubr.bf16.mxu0 %v144
  %609 = vmatmul.mubr.bf16.gmra.mrb[0].mxu0 %v143
  %v610 = vpop.f32.mrb[0].mxu0
  %v611 = vadd.f32 %v540, %v610
  %v612 = vpop.f32.mrb[0].mxu0
  %v613 = vadd.f32 %v542, %v612
  %v614 = vpop.f32.mrb[0].mxu0
  %v615 = vadd.f32 %v544, %v614
  %v616 = vpop.f32.mrb[0].mxu0
  %v617 = vadd.f32 %v546, %v616
  %618 = vmatprep.mubr.bf16.mxu0 %v148
  %619 = vmatmul.mubr.bf16.gmra.mrb[0].mxu0 %v147
  %v620 = vpop.f32.mrb[0].mxu0
  %v621 = vadd.f32 %v550, %v620
  %v622 = vpop.f32.mrb[0].mxu0
  %v623 = vadd.f32 %v552, %v622
  %v624 = vpop.f32.mrb[0].mxu0
  %v625 = vpop.f32.mrb[0].mxu0
  %626 = vdwg.mxu0
  %v627 = vadd.f32 %v591, %v595
  %v628 = vadd.f32 %v627, %v601
  %v629 = vadd.f32 %v628, %v605
  %v630 = vadd.f32 %v629, %v611
  %v631 = vadd.f32 %v630, %v615
  %v632 = vadd.f32 %v631, %v621
  %v633 = vrot.slane %v632, 4
  %v634 = vadd.f32 %v632, %v633
  %v635 = vrot.slane %v634, 2
  %v636 = vadd.f32 %v634, %v635
  %v637 = vrot.slane %v636, 1
  %v638 = vadd.f32 %v636, %v637
  %v639 = vadd.f32 %v593, %v597
  %v640 = vadd.f32 %v639, %v603
  %v641 = vadd.f32 %v640, %v607
  %v642 = vadd.f32 %v641, %v613
  %v643 = vadd.f32 %v642, %v617
  %v644 = vadd.f32 %v643, %v623
  %v645 = vrot.slane %v644, 4
  %v646 = vadd.f32 %v644, %v645
  %v647 = vrot.slane %v646, 2
  %v648 = vadd.f32 %v646, %v647
  %v649 = vrot.slane %v648, 1
  %v650 = vadd.f32 %v648, %v649
  %v653 = vcombine.low %v638, %v650
  %v655 = vunpack.c.l.s4 1966171168
  %v656 = vunpack.c.0.s8 %v655
  %v657 = vlaneseq
  %v658 = vshrl.u32 %v657, 7
  %v659 = vsub.s32 %v656, %v658
  %v660 = vrot.slane %v653, %v659
  %v662 = vunpack.c.l.s4 1966171168
  %v663 = vunpack.c.0.s8 %v662
  %v664 = vlaneseq
  %v665 = vshrl.u32 %v664, 7
  %v666 = vsub.s32 %v663, %v665
  %v667 = vrot.slane %v660, %v666
  %v669 = vlaneseq
  %vm670 = vcmp.ge.s32.totalorder %v669, 0
  %vm671 = vcmp.lt.s32.totalorder %v669, 256
  %vm672 = vmand %vm670, %vm671
  %673 = vst.msk [vmem:[%s3] ss:$8 sm:$0x3] %vm672, %v667
  %674 = vst.msk [vmem:[%s3] ss:$8 sm:$0x0] %vm672, %v667
  %v675 = vmul.f32 %v591, %v591
  %v676 = vmul.f32 %v593, %v593
  %v677 = vmul.f32 %v595, %v595
  %v678 = vmul.f32 %v597, %v597
  %v679 = vmul.f32 %v601, %v601
  %v680 = vmul.f32 %v603, %v603
  %v681 = vmul.f32 %v605, %v605
  %v682 = vmul.f32 %v607, %v607
  %v683 = vmul.f32 %v611, %v611
  %v684 = vmul.f32 %v613, %v613
  %v685 = vmul.f32 %v615, %v615
  %v686 = vmul.f32 %v617, %v617
  %v687 = vmul.f32 %v621, %v621
  %v688 = vmul.f32 %v623, %v623
  %v689 = vadd.f32 %v675, %v677
  %v690 = vadd.f32 %v689, %v679
  %v691 = vadd.f32 %v690, %v681
  %v692 = vadd.f32 %v691, %v683
  %v693 = vadd.f32 %v692, %v685
  %v694 = vadd.f32 %v693, %v687
  %v695 = vrot.slane %v694, 4
  %v696 = vadd.f32 %v694, %v695
  %v697 = vrot.slane %v696, 2
  %v698 = vadd.f32 %v696, %v697
  %v699 = vrot.slane %v698, 1
  %v700 = vadd.f32 %v698, %v699
  %v701 = vadd.f32 %v676, %v678
  %v702 = vadd.f32 %v701, %v680
  %v703 = vadd.f32 %v702, %v682
  %v704 = vadd.f32 %v703, %v684
  %v705 = vadd.f32 %v704, %v686
  %v706 = vadd.f32 %v705, %v688
  %v707 = vrot.slane %v706, 4
  %v708 = vadd.f32 %v706, %v707
  %v709 = vrot.slane %v708, 2
  %v710 = vadd.f32 %v708, %v709
  %v711 = vrot.slane %v710, 1
  %v712 = vadd.f32 %v710, %v711
  %v715 = vcombine.low %v700, %v712
  %v717 = vunpack.c.l.s4 1966171168
  %v718 = vunpack.c.0.s8 %v717
  %v719 = vlaneseq
  %v720 = vshrl.u32 %v719, 7
  %v721 = vsub.s32 %v718, %v720
  %v722 = vrot.slane %v715, %v721
  %v724 = vunpack.c.l.s4 1966171168
  %v725 = vunpack.c.0.s8 %v724
  %v726 = vlaneseq
  %v727 = vshrl.u32 %v726, 7
  %v728 = vsub.s32 %v725, %v727
  %v729 = vrot.slane %v722, %v728
  %s731 = scalar_lea.vmem %s3, 1
  %732 = vst.msk [vmem:[%s731] ss:$8 sm:$0x3] %vm672, %v729
  %733 = vst.msk [vmem:[%s731] ss:$8 sm:$0x0] %vm672, %v729
  %v734 = vpack.c.bf16 %v595, %v591
  %v735 = vpack.c.bf16 %v597, %v593
  %v736 = vpack.c.bf16 %v605, %v601
  %v737 = vpack.c.bf16 %v607, %v603
  %v738 = vpack.c.bf16 %v615, %v611
  %v739 = vpack.c.bf16 %v617, %v613
  %v740 = vpack.c.bf16 %v621, %v621
  %v741 = vpack.c.bf16 %v623, %v623
  %v750 = vunpack.c.l.b16 %v734
  %v751 = vunpack.c.l.b16 %v735
  %v752 = vunpack.c.h.b16 %v734
  %v753 = vunpack.c.h.b16 %v735
  %v754 = vunpack.c.l.b16 %v736
  %v755 = vunpack.c.l.b16 %v737
  %v756 = vunpack.c.h.b16 %v736
  %v757 = vunpack.c.h.b16 %v737
  %v758 = vunpack.c.l.b16 %v738
  %v759 = vunpack.c.l.b16 %v739
  %v760 = vunpack.c.h.b16 %v738
  %v761 = vunpack.c.h.b16 %v739
  %v762 = vunpack.c.l.b16 %v740
  %v763 = vunpack.c.l.b16 %v741
  %v764 = vpack.c.b16 %v751, %v750
  %v765 = vpack.c.b16 %v753, %v752
  %v766 = vpack.c.b16 %v755, %v754
  %v767 = vpack.c.b16 %v757, %v756
  %v768 = vpack.c.b16 %v759, %v758
  %v769 = vpack.c.b16 %v761, %v760
  %v770 = vpack.c.b16 %v763, %v762
  %778 = vst [vmem:[%s2] sm:$0xff] %v764
  %779 = vst [vmem:[%s2 + $0x8] sm:$0xff] %v765
  %780 = vst [vmem:[%s2 + $0x10] sm:$0xff] %v766
  %781 = vst [vmem:[%s2 + $0x18] sm:$0xff] %v767
  %782 = vst [vmem:[%s2 + $0x20] sm:$0xff] %v768
  %783 = vst [vmem:[%s2 + $0x28] sm:$0xff] %v769
  %784 = vst [vmem:[%s2 + $0x30] sm:$0xff] %v770
  // Predicated region
  $region10: #{_lambda_.11} parent=0 // pred_check
    _
  $region11: #{_lambda_.11} parent=0 // pred_check_branch
    %786 = sbr.rel (0) target = $region13
  $region12: #{_lambda_.11} parent=0 // pred_region
    _
  $region13: #{_lambda_.11} parent=0 // pred_fallthru
    _
  // Predicated region
  $region14: #{_lambda_.11} parent=0 // pred_check
    _
  $region15: #{_lambda_.11} parent=0 // pred_check_branch
    %788 = sbr.rel (0) target = $region17
  $region16: #{_lambda_.11} parent=0 // pred_region
    _
  $region17: #{_lambda_.11} parent=0 // pred_fallthru
    _
  // Predicated region
  $region18: #{_lambda_.11} parent=0 // pred_check
    _
  $region19: #{_lambda_.11} parent=0 // pred_check_branch
    %790 = sbr.rel (0) target = $region21
  $region20: #{_lambda_.11} parent=0 // pred_region
    _
  $region21: #{_lambda_.11} parent=0 // pred_fallthru
    _
  // Predicated region
  $region22: #{_lambda_.11} parent=0 // pred_check
    _
  $region23: #{_lambda_.11} parent=0 // pred_check_branch
    %792 = sbr.rel (0) target = $region25
  $region24: #{_lambda_.11} parent=0 // pred_region
    _
  $region25: #{_lambda_.11} parent=0 // pred_fallthru
    _

// kernel: _lambda_.12
$region0: #{_lambda_.12}
  #allocation0 [shape = 'u32[]', space=smem, size = 0x4, offset = 0x4, fixed_abs, tag = 'smem constant byte address 0x4 - core index']
  #allocation1 [shape = 'u32[144,128]{1,0:T(1,128)}', space=vmem, size = 0x12000, scoped, tag = 'internal scratch']
  %s0 = inlined_call_operand.vmem [shape: bf16[56,256], index: 0, kind: input, shape index: {}]
  %s1 = inlined_call_operand.vmem [shape: f32[1,256], index: 1, kind: input, shape index: {}]
  %s2 = inlined_call_operand.vmem [shape: f32[1,256], index: 2, kind: input, shape index: {}]
  %s3 = inlined_call_operand.vmem [shape: bf16[56,256], index: 3, kind: output, shape index: {}]
  %s4 = sld [smem:[#allocation0]]
  $region22: #{_lambda_.12} parent=0
    _
  %s6 = ssub.s32 1, %s4
  %s7 = scalar_select 0, %s6, %s4
  // Predicated region
  $region2: #{_lambda_.12} parent=0 // pred_check
    _
  $region3: #{_lambda_.12} parent=0 // pred_check_branch
    %9 = sbr.rel (0) target = $region5
  $region4: #{_lambda_.12} parent=0 // pred_region
    _
  $region5: #{_lambda_.12} parent=0 // pred_fallthru
    _
  // Predicated region
  $region6: #{_lambda_.12} parent=0 // pred_check
    _
  $region7: #{_lambda_.12} parent=0 // pred_check_branch
    %11 = sbr.rel (0) target = $region9
  $region8: #{_lambda_.12} parent=0 // pred_region
    _
  $region9: #{_lambda_.12} parent=0 // pred_fallthru
    _
  // Predicated region
  $region10: #{_lambda_.12} parent=0 // pred_check
    _
  $region11: #{_lambda_.12} parent=0 // pred_check_branch
    %13 = sbr.rel (0) target = $region13
  $region12: #{_lambda_.12} parent=0 // pred_region
    _
  $region13: #{_lambda_.12} parent=0 // pred_fallthru
    _
  %v14 = vld [vmem:[%s0] sm:$0xff]
  %v15 = vld [vmem:[%s0 + $0x8] sm:$0xff]
  %v16 = vld [vmem:[%s0 + $0x10] sm:$0xff]
  %v17 = vld [vmem:[%s0 + $0x18] sm:$0xff]
  %v18 = vld [vmem:[%s0 + $0x20] sm:$0xff]
  %v19 = vld [vmem:[%s0 + $0x28] sm:$0xff]
  %v20 = vld [vmem:[%s0 + $0x30] sm:$0xff]
  %v21 = vunpack.c.l.bf16 %v14
  %v22 = vunpack.c.h.bf16 %v14
  %v23 = vunpack.c.l.bf16 %v15
  %v24 = vunpack.c.h.bf16 %v15
  %v25 = vunpack.c.l.bf16 %v16
  %v26 = vunpack.c.h.bf16 %v16
  %v27 = vunpack.c.l.bf16 %v17
  %v28 = vunpack.c.h.bf16 %v17
  %v29 = vunpack.c.l.bf16 %v18
  %v30 = vunpack.c.h.bf16 %v18
  %v31 = vunpack.c.l.bf16 %v19
  %v32 = vunpack.c.h.bf16 %v19
  %v33 = vunpack.c.l.bf16 %v20
  %v34 = vunpack.c.h.bf16 %v20
  %v35 = vld [vmem:[%s1] sm:$0x3]
  %v37 = vlaneseq
  %v38 = vshrl.u32 %v37, 7
  %v39 = vsub.s32 0, %v38
  %v40 = vrot.slane %v35, %v39
  %v41 = vlaneseq
  %v42 = vshrl.u32 %v41, 7
  %v43 = vsub.s32 1, %v42
  %v44 = vrot.slane %v35, %v43
  %v47 = vmul.f32 %v21, %v40
  %v48 = vmul.f32 %v22, %v44
  %v49 = vmul.f32 %v23, %v40
  %v50 = vmul.f32 %v24, %v44
  %v51 = vmul.f32 %v25, %v40
  %v52 = vmul.f32 %v26, %v44
  %v53 = vmul.f32 %v27, %v40
  %v54 = vmul.f32 %v28, %v44
  %v55 = vmul.f32 %v29, %v40
  %v56 = vmul.f32 %v30, %v44
  %v57 = vmul.f32 %v31, %v40
  %v58 = vmul.f32 %v32, %v44
  %v59 = vmul.f32 %v33, %v40
  %v60 = vmul.f32 %v34, %v44
  %v61 = vld [vmem:[%s2] sm:$0x3]
  %v63 = vlaneseq
  %v64 = vshrl.u32 %v63, 7
  %v65 = vsub.s32 0, %v64
  %v66 = vrot.slane %v61, %v65
  %v67 = vlaneseq
  %v68 = vshrl.u32 %v67, 7
  %v69 = vsub.s32 1, %v68
  %v70 = vrot.slane %v61, %v69
  %v73 = vadd.f32 %v47, %v66
  %v74 = vadd.f32 %v48, %v70
  %v75 = vadd.f32 %v49, %v66
  %v76 = vadd.f32 %v50, %v70
  %v77 = vadd.f32 %v51, %v66
  %v78 = vadd.f32 %v52, %v70
  %v79 = vadd.f32 %v53, %v66
  %v80 = vadd.f32 %v54, %v70
  %v81 = vadd.f32 %v55, %v66
  %v82 = vadd.f32 %v56, %v70
  %v83 = vadd.f32 %v57, %v66
  %v84 = vadd.f32 %v58, %v70
  %v85 = vadd.f32 %v59, %v66
  %v86 = vadd.f32 %v60, %v70
  %v87 = vmax.f32 %v73, 0.0
  %v88 = vmax.f32 %v74, 0.0
  %v89 = vmax.f32 %v75, 0.0
  %v90 = vmax.f32 %v76, 0.0
  %v91 = vmax.f32 %v77, 0.0
  %v92 = vmax.f32 %v78, 0.0
  %v93 = vmax.f32 %v79, 0.0
  %v94 = vmax.f32 %v80, 0.0
  %v95 = vmax.f32 %v81, 0.0
  %v96 = vmax.f32 %v82, 0.0
  %v97 = vmax.f32 %v83, 0.0
  %v98 = vmax.f32 %v84, 0.0
  %v99 = vmax.f32 %v85, 0.0
  %v100 = vmax.f32 %v86, 0.0
  %v101 = vpack.c.bf16 %v89, %v87
  %v102 = vpack.c.bf16 %v90, %v88
  %v103 = vpack.c.bf16 %v93, %v91
  %v104 = vpack.c.bf16 %v94, %v92
  %v105 = vpack.c.bf16 %v97, %v95
  %v106 = vpack.c.bf16 %v98, %v96
  %v107 = vpack.c.bf16 %v99, %v99
  %v108 = vpack.c.bf16 %v100, %v100
  %v117 = vunpack.c.l.b16 %v101
  %v118 = vunpack.c.l.b16 %v102
  %v119 = vunpack.c.h.b16 %v101
  %v120 = vunpack.c.h.b16 %v102
  %v121 = vunpack.c.l.b16 %v103
  %v122 = vunpack.c.l.b16 %v104
  %v123 = vunpack.c.h.b16 %v103
  %v124 = vunpack.c.h.b16 %v104
  %v125 = vunpack.c.l.b16 %v105
  %v126 = vunpack.c.l.b16 %v106
  %v127 = vunpack.c.h.b16 %v105
  %v128 = vunpack.c.h.b16 %v106
  %v129 = vunpack.c.l.b16 %v107
  %v130 = vunpack.c.l.b16 %v108
  %v131 = vpack.c.b16 %v118, %v117
  %v132 = vpack.c.b16 %v120, %v119
  %v133 = vpack.c.b16 %v122, %v121
  %v134 = vpack.c.b16 %v124, %v123
  %v135 = vpack.c.b16 %v126, %v125
  %v136 = vpack.c.b16 %v128, %v127
  %v137 = vpack.c.b16 %v130, %v129
  %145 = vst [vmem:[%s3] sm:$0xff] %v131
  %146 = vst [vmem:[%s3 + $0x8] sm:$0xff] %v132
  %147 = vst [vmem:[%s3 + $0x10] sm:$0xff] %v133
  %148 = vst [vmem:[%s3 + $0x18] sm:$0xff] %v134
  %149 = vst [vmem:[%s3 + $0x20] sm:$0xff] %v135
  %150 = vst [vmem:[%s3 + $0x28] sm:$0xff] %v136
  %151 = vst [vmem:[%s3 + $0x30] sm:$0xff] %v137
  // Predicated region
  $region14: #{_lambda_.12} parent=0 // pred_check
    _
  $region15: #{_lambda_.12} parent=0 // pred_check_branch
    %153 = sbr.rel (0) target = $region17
  $region16: #{_lambda_.12} parent=0 // pred_region
    _
  $region17: #{_lambda_.12} parent=0 // pred_fallthru
    _
  // Predicated region
  $region18: #{_lambda_.12} parent=0 // pred_check
    _
  $region19: #{_lambda_.12} parent=0 // pred_check_branch
    %155 = sbr.rel (0) target = $region21
  $region20: #{_lambda_.12} parent=0 // pred_region
    _
  $region21: #{_lambda_.12} parent=0 // pred_fallthru
    _

// kernel: _lambda_.13
$region0: #{_lambda_.13}
  #allocation0 [shape = 'u32[]', space=smem, size = 0x4, offset = 0x4, fixed_abs, tag = 'smem constant byte address 0x4 - core index']
  #allocation1 [shape = 'u32[144,128]{1,0:T(1,128)}', space=vmem, size = 0x12000, scoped, tag = 'internal scratch']
  %s0 = inlined_call_operand.vmem [shape: bf16[168,256], index: 0, kind: input, shape index: {}]
  %s1 = inlined_call_operand.vmem [shape: bf16[256,128], index: 1, kind: input, shape index: {}]
  %s2 = inlined_call_operand.vmem [shape: bf16[168,128], index: 2, kind: output, shape index: {0}]
  %s3 = inlined_call_operand.vmem [shape: f32[8,128], index: 3, kind: output, shape index: {1}]
  %4 = xla_tuple %s2, %s3
  %s5 = sld [smem:[#allocation0]]
  $region26: #{_lambda_.13} parent=0
    _
  %s7 = ssub.s32 1, %s5
  %s8 = scalar_select 0, %s7, %s5
  // Predicated region
  $region2: #{_lambda_.13} parent=0 // pred_check
    _
  $region3: #{_lambda_.13} parent=0 // pred_check_branch
    %10 = sbr.rel (0) target = $region5
  $region4: #{_lambda_.13} parent=0 // pred_region
    _
  $region5: #{_lambda_.13} parent=0 // pred_fallthru
    _
  // Predicated region
  $region6: #{_lambda_.13} parent=0 // pred_check
    _
  $region7: #{_lambda_.13} parent=0 // pred_check_branch
    %12 = sbr.rel (0) target = $region9
  $region8: #{_lambda_.13} parent=0 // pred_region
    _
  $region9: #{_lambda_.13} parent=0 // pred_fallthru
    _
  %v14 = vld [vmem:[%s0] sm:$0xff]
  %v15 = vld [vmem:[%s0 + $0x8] sm:$0xff]
  %v16 = vld [vmem:[%s0 + $0x10] sm:$0xff]
  %v17 = vld [vmem:[%s0 + $0x18] sm:$0xff]
  %v18 = vld [vmem:[%s0 + $0x20] sm:$0xff]
  %v19 = vld [vmem:[%s0 + $0x28] sm:$0xff]
  %v20 = vld [vmem:[%s0 + $0x30] sm:$0xff]
  %v21 = vld [vmem:[%s0 + $0x38] sm:$0xff]
  %v22 = vld [vmem:[%s0 + $0x40] sm:$0xff]
  %v23 = vld [vmem:[%s0 + $0x48] sm:$0xff]
  %v24 = vld [vmem:[%s0 + $0x50] sm:$0xff]
  %v25 = vld [vmem:[%s0 + $0x58] sm:$0xff]
  %v26 = vld [vmem:[%s0 + $0x60] sm:$0xff]
  %v27 = vld [vmem:[%s0 + $0x68] sm:$0xff]
  %v28 = vld [vmem:[%s0 + $0x70] sm:$0xff]
  %v29 = vld [vmem:[%s0 + $0x78] sm:$0xff]
  %v30 = vld [vmem:[%s0 + $0x80] sm:$0xff]
  %v31 = vld [vmem:[%s0 + $0x88] sm:$0xff]
  %v32 = vld [vmem:[%s0 + $0x90] sm:$0xff]
  %v33 = vld [vmem:[%s0 + $0x98] sm:$0xff]
  %v34 = vld [vmem:[%s0 + $0xa0] sm:$0xff]
  %v35 = vld [vmem:[%s1] sm:$0xf]
  %v36 = vld [vmem:[%s1 + $0x4] sm:$0xf]
  %v37 = vld [vmem:[%s1 + $0x8] sm:$0xf]
  %v38 = vld [vmem:[%s1 + $0xc] sm:$0xf]
  %v39 = vld [vmem:[%s1 + $0x10] sm:$0xf]
  %v40 = vld [vmem:[%s1 + $0x14] sm:$0xf]
  %v41 = vld [vmem:[%s1 + $0x18] sm:$0xf]
  %v42 = vld [vmem:[%s1 + $0x1c] sm:$0xf]
  %v43 = vld [vmem:[%s1 + $0x20] sm:$0xf]
  %v44 = vld [vmem:[%s1 + $0x24] sm:$0xf]
  %v45 = vld [vmem:[%s1 + $0x28] sm:$0xf]
  %v46 = vld [vmem:[%s1 + $0x2c] sm:$0xf]
  %v47 = vld [vmem:[%s1 + $0x30] sm:$0xf]
  %v48 = vld [vmem:[%s1 + $0x34] sm:$0xf]
  %v49 = vld [vmem:[%s1 + $0x38] sm:$0xf]
  %v50 = vld [vmem:[%s1 + $0x3c] sm:$0xf]
  %v51 = vld [vmem:[%s1 + $0x40] sm:$0xf]
  %v52 = vld [vmem:[%s1 + $0x44] sm:$0xf]
  %v53 = vld [vmem:[%s1 + $0x48] sm:$0xf]
  %v54 = vld [vmem:[%s1 + $0x4c] sm:$0xf]
  %v55 = vld [vmem:[%s1 + $0x50] sm:$0xf]
  %v56 = vld [vmem:[%s1 + $0x54] sm:$0xf]
  %v57 = vld [vmem:[%s1 + $0x58] sm:$0xf]
  %v58 = vld [vmem:[%s1 + $0x5c] sm:$0xf]
  %v59 = vld [vmem:[%s1 + $0x60] sm:$0xf]
  %v60 = vld [vmem:[%s1 + $0x64] sm:$0xf]
  %v61 = vld [vmem:[%s1 + $0x68] sm:$0xf]
  %v62 = vld [vmem:[%s1 + $0x6c] sm:$0xf]
  %v63 = vld [vmem:[%s1 + $0x70] sm:$0xf]
  %v64 = vld [vmem:[%s1 + $0x74] sm:$0xf]
  %v65 = vld [vmem:[%s1 + $0x78] sm:$0xf]
  %v66 = vld [vmem:[%s1 + $0x7c] sm:$0xf]
  %v88 = vunpack.c.l.b16 %v14
  %v89 = vunpack.c.h.b16 %v14
  %v90 = vunpack.c.l.b16 %v15
  %v91 = vunpack.c.h.b16 %v15
  %v92 = vunpack.c.l.b16 %v16
  %v93 = vunpack.c.h.b16 %v16
  %v94 = vunpack.c.l.b16 %v17
  %v95 = vunpack.c.h.b16 %v17
  %v96 = vunpack.c.l.b16 %v18
  %v97 = vunpack.c.h.b16 %v18
  %v98 = vunpack.c.l.b16 %v19
  %v99 = vunpack.c.h.b16 %v19
  %v100 = vunpack.c.l.b16 %v20
  %v101 = vunpack.c.h.b16 %v20
  %v102 = vunpack.c.l.b16 %v21
  %v103 = vunpack.c.h.b16 %v21
  %v104 = vunpack.c.l.b16 %v22
  %v105 = vunpack.c.h.b16 %v22
  %v106 = vunpack.c.l.b16 %v23
  %v107 = vunpack.c.h.b16 %v23
  %v108 = vunpack.c.l.b16 %v24
  %v109 = vunpack.c.h.b16 %v24
  %v110 = vunpack.c.l.b16 %v25
  %v111 = vunpack.c.h.b16 %v25
  %v112 = vunpack.c.l.b16 %v26
  %v113 = vunpack.c.h.b16 %v26
  %v114 = vunpack.c.l.b16 %v27
  %v115 = vunpack.c.h.b16 %v27
  %v116 = vunpack.c.l.b16 %v28
  %v117 = vunpack.c.h.b16 %v28
  %v118 = vunpack.c.l.b16 %v29
  %v119 = vunpack.c.h.b16 %v29
  %v120 = vunpack.c.l.b16 %v30
  %v121 = vunpack.c.h.b16 %v30
  %v122 = vunpack.c.l.b16 %v31
  %v123 = vunpack.c.h.b16 %v31
  %v124 = vunpack.c.l.b16 %v32
  %v125 = vunpack.c.h.b16 %v32
  %v126 = vunpack.c.l.b16 %v33
  %v127 = vunpack.c.h.b16 %v33
  %v128 = vunpack.c.l.b16 %v34
  %v129 = vunpack.c.h.b16 %v34
  %v130 = vpack.c.b16 %v90, %v88
  %v131 = vpack.c.b16 %v91, %v89
  %v132 = vpack.c.b16 %v94, %v92
  %v133 = vpack.c.b16 %v95, %v93
  %v134 = vpack.c.b16 %v98, %v96
  %v135 = vpack.c.b16 %v99, %v97
  %v136 = vpack.c.b16 %v102, %v100
  %v137 = vpack.c.b16 %v103, %v101
  %v138 = vpack.c.b16 %v106, %v104
  %v139 = vpack.c.b16 %v107, %v105
  %v140 = vpack.c.b16 %v110, %v108
  %v141 = vpack.c.b16 %v111, %v109
  %v142 = vpack.c.b16 %v114, %v112
  %v143 = vpack.c.b16 %v115, %v113
  %v144 = vpack.c.b16 %v118, %v116
  %v145 = vpack.c.b16 %v119, %v117
  %v146 = vpack.c.b16 %v122, %v120
  %v147 = vpack.c.b16 %v123, %v121
  %v148 = vpack.c.b16 %v126, %v124
  %v149 = vpack.c.b16 %v127, %v125
  %v150 = vpack.c.b16 %v128, %v128
  %v151 = vpack.c.b16 %v129, %v129
  %v206 = vunpack.c.l.b16 %v35
  %v207 = vunpack.c.l.b16 %v36
  %v208 = vunpack.c.l.b16 %v37
  %v209 = vunpack.c.l.b16 %v38
  %v210 = vunpack.c.l.b16 %v39
  %v211 = vunpack.c.l.b16 %v40
  %v212 = vunpack.c.l.b16 %v41
  %v213 = vunpack.c.l.b16 %v42
  %v214 = vunpack.c.l.b16 %v43
  %v215 = vunpack.c.l.b16 %v44
  %v216 = vunpack.c.l.b16 %v45
  %v217 = vunpack.c.l.b16 %v46
  %v218 = vunpack.c.l.b16 %v47
  %v219 = vunpack.c.l.b16 %v48
  %v220 = vunpack.c.l.b16 %v49
  %v221 = vunpack.c.l.b16 %v50
  %v222 = vunpack.c.l.b16 %v51
  %v223 = vunpack.c.l.b16 %v52
  %v224 = vunpack.c.l.b16 %v53
  %v225 = vunpack.c.l.b16 %v54
  %v226 = vunpack.c.l.b16 %v55
  %v227 = vunpack.c.l.b16 %v56
  %v228 = vunpack.c.l.b16 %v57
  %v229 = vunpack.c.l.b16 %v58
  %v230 = vunpack.c.l.b16 %v59
  %v231 = vunpack.c.l.b16 %v60
  %v232 = vunpack.c.l.b16 %v61
  %v233 = vunpack.c.l.b16 %v62
  %v234 = vunpack.c.l.b16 %v63
  %v235 = vunpack.c.l.b16 %v64
  %v236 = vunpack.c.l.b16 %v65
  %v237 = vunpack.c.l.b16 %v66
  %v238 = vpack.c.b16 %v207, %v206
  %v239 = vpack.c.b16 %v209, %v208
  %v240 = vpack.c.b16 %v211, %v210
  %v241 = vpack.c.b16 %v213, %v212
  %v242 = vpack.c.b16 %v215, %v214
  %v243 = vpack.c.b16 %v217, %v216
  %v244 = vpack.c.b16 %v219, %v218
  %v245 = vpack.c.b16 %v221, %v220
  %v246 = vpack.c.b16 %v223, %v222
  %v247 = vpack.c.b16 %v225, %v224
  %v248 = vpack.c.b16 %v227, %v226
  %v249 = vpack.c.b16 %v229, %v228
  %v250 = vpack.c.b16 %v231, %v230
  %v251 = vpack.c.b16 %v233, %v232
  %v252 = vpack.c.b16 %v235, %v234
  %v253 = vpack.c.b16 %v237, %v236
  %270 = vmatprep.subr.bf16.mxu0 0
  %271 = vmatpush1.bf16.msra.mxu0 %v238
  %272 = vmatprep.subr.bf16.mxu0 0
  %273 = vmatpush1.bf16.msra.mxu0 %v239
  %274 = vmatprep.subr.bf16.mxu0 0
  %275 = vmatpush1.bf16.msra.mxu0 %v240
  %276 = vmatprep.subr.bf16.mxu0 0
  %277 = vmatpush1.bf16.msra.mxu0 %v241
  %278 = vmatprep.subr.bf16.mxu0 0
  %279 = vmatpush1.bf16.msra.mxu0 %v242
  %280 = vmatprep.subr.bf16.mxu0 0
  %281 = vmatpush1.bf16.msra.mxu0 %v243
  %282 = vmatprep.subr.bf16.mxu0 0
  %283 = vmatpush1.bf16.msra.mxu0 %v244
  %284 = vmatprep.subr.bf16.mxu0 0
  %285 = vmatpush1.bf16.msra.mxu0 %v245
  %286 = vmatprep.subr.bf16.mxu0 0
  %287 = vmatpush1.bf16.msra.mxu0 %v246
  %288 = vmatprep.subr.bf16.mxu0 0
  %289 = vmatpush1.bf16.msra.mxu0 %v247
  %290 = vmatprep.subr.bf16.mxu0 0
  %291 = vmatpush1.bf16.msra.mxu0 %v248
  %292 = vmatprep.subr.bf16.mxu0 0
  %293 = vmatpush1.bf16.msra.mxu0 %v249
  %294 = vmatprep.subr.bf16.mxu0 0
  %295 = vmatpush1.bf16.msra.mxu0 %v250
  %296 = vmatprep.subr.bf16.mxu0 0
  %297 = vmatpush1.bf16.msra.mxu0 %v251
  %298 = vmatprep.subr.bf16.mxu0 0
  %299 = vmatpush1.bf16.msra.mxu0 %v252
  %300 = vmatprep.subr.bf16.mxu0 0
  %301 = vmatpush1.bf16.msra.mxu0 %v253
  %302 = vmatprep.mubr.bf16.mxu0 %v131
  %303 = vmatmul.mubr.bf16.gmra.mrb[0].mxu0 %v130
  %v304 = vpop.f32.mrb[0].mxu0
  %v305 = vadd.f32 0.0, %v304
  %v306 = vpop.f32.mrb[0].mxu0
  %v307 = vpop.f32.mrb[0].mxu0
  %v308 = vadd.f32 0.0, %v307
  %v309 = vpop.f32.mrb[0].mxu0
  %310 = vmatprep.mubr.bf16.mxu0 %v133
  %311 = vmatmul.mubr.bf16.gmra.mrb[0].mxu0 %v132
  %v312 = vpop.f32.mrb[0].mxu0
  %v313 = vadd.f32 0.0, %v312
  %v314 = vpop.f32.mrb[0].mxu0
  %v315 = vpop.f32.mrb[0].mxu0
  %v316 = vadd.f32 0.0, %v315
  %v317 = vpop.f32.mrb[0].mxu0
  %318 = vmatprep.mubr.bf16.mxu0 %v135
  %319 = vmatmul.mubr.bf16.gmra.mrb[0].mxu0 %v134
  %v320 = vpop.f32.mrb[0].mxu0
  %v321 = vadd.f32 0.0, %v320
  %v322 = vpop.f32.mrb[0].mxu0
  %v323 = vpop.f32.mrb[0].mxu0
  %v324 = vadd.f32 0.0, %v323
  %v325 = vpop.f32.mrb[0].mxu0
  %326 = vmatprep.mubr.bf16.mxu0 %v137
  %327 = vmatmul.mubr.bf16.gmra.mrb[0].mxu0 %v136
  %v328 = vpop.f32.mrb[0].mxu0
  %v329 = vadd.f32 0.0, %v328
  %v330 = vpop.f32.mrb[0].mxu0
  %v331 = vpop.f32.mrb[0].mxu0
  %v332 = vadd.f32 0.0, %v331
  %v333 = vpop.f32.mrb[0].mxu0
  %334 = vmatprep.mubr.bf16.mxu0 %v139
  %335 = vmatmul.mubr.bf16.gmra.mrb[0].mxu0 %v138
  %v336 = vpop.f32.mrb[0].mxu0
  %v337 = vadd.f32 0.0, %v336
  %v338 = vpop.f32.mrb[0].mxu0
  %v339 = vpop.f32.mrb[0].mxu0
  %v340 = vadd.f32 0.0, %v339
  %v341 = vpop.f32.mrb[0].mxu0
  %342 = vmatprep.mubr.bf16.mxu0 %v141
  %343 = vmatmul.mubr.bf16.gmra.mrb[0].mxu0 %v140
  %v344 = vpop.f32.mrb[0].mxu0
  %v345 = vadd.f32 0.0, %v344
  %v346 = vpop.f32.mrb[0].mxu0
  %v347 = vpop.f32.mrb[0].mxu0
  %v348 = vadd.f32 0.0, %v347
  %v349 = vpop.f32.mrb[0].mxu0
  %350 = vmatprep.mubr.bf16.mxu0 %v143
  %351 = vmatmul.mubr.bf16.gmra.mrb[0].mxu0 %v142
  %v352 = vpop.f32.mrb[0].mxu0
  %v353 = vadd.f32 0.0, %v352
  %v354 = vpop.f32.mrb[0].mxu0
  %v355 = vpop.f32.mrb[0].mxu0
  %v356 = vadd.f32 0.0, %v355
  %v357 = vpop.f32.mrb[0].mxu0
  %358 = vmatprep.mubr.bf16.mxu0 %v145
  %359 = vmatmul.mubr.bf16.gmra.mrb[0].mxu0 %v144
  %v360 = vpop.f32.mrb[0].mxu0
  %v361 = vadd.f32 0.0, %v360
  %v362 = vpop.f32.mrb[0].mxu0
  %v363 = vpop.f32.mrb[0].mxu0
  %v364 = vadd.f32 0.0, %v363
  %v365 = vpop.f32.mrb[0].mxu0
  %366 = vmatprep.mubr.bf16.mxu0 %v147
  %367 = vmatmul.mubr.bf16.gmra.mrb[0].mxu0 %v146
  %v368 = vpop.f32.mrb[0].mxu0
  %v369 = vadd.f32 0.0, %v368
  %v370 = vpop.f32.mrb[0].mxu0
  %v371 = vpop.f32.mrb[0].mxu0
  %v372 = vadd.f32 0.0, %v371
  %v373 = vpop.f32.mrb[0].mxu0
  %374 = vmatprep.mubr.bf16.mxu0 %v149
  %375 = vmatmul.mubr.bf16.gmra.mrb[0].mxu0 %v148
  %v376 = vpop.f32.mrb[0].mxu0
  %v377 = vadd.f32 0.0, %v376
  %v378 = vpop.f32.mrb[0].mxu0
  %v379 = vpop.f32.mrb[0].mxu0
  %v380 = vadd.f32 0.0, %v379
  %v381 = vpop.f32.mrb[0].mxu0
  %382 = vmatprep.mubr.bf16.mxu0 %v151
  %383 = vmatmul.mubr.bf16.gmra.mrb[0].mxu0 %v150
  %v384 = vpop.f32.mrb[0].mxu0
  %v385 = vadd.f32 0.0, %v384
  %v386 = vpop.f32.mrb[0].mxu0
  %v387 = vpop.f32.mrb[0].mxu0
  %v388 = vpop.f32.mrb[0].mxu0
  %389 = vdwg.mxu0
  %v390 = vadd.f32 %v305, %v308
  %v391 = vadd.f32 %v390, %v313
  %v392 = vadd.f32 %v391, %v316
  %v393 = vadd.f32 %v392, %v321
  %v394 = vadd.f32 %v393, %v324
  %v395 = vadd.f32 %v394, %v329
  %v396 = vadd.f32 %v395, %v332
  %v397 = vadd.f32 %v396, %v337
  %v398 = vadd.f32 %v397, %v340
  %v399 = vadd.f32 %v398, %v345
  %v400 = vadd.f32 %v399, %v348
  %v401 = vadd.f32 %v400, %v353
  %v402 = vadd.f32 %v401, %v356
  %v403 = vadd.f32 %v402, %v361
  %v404 = vadd.f32 %v403, %v364
  %v405 = vadd.f32 %v404, %v369
  %v406 = vadd.f32 %v405, %v372
  %v407 = vadd.f32 %v406, %v377
  %v408 = vadd.f32 %v407, %v380
  %v409 = vadd.f32 %v408, %v385
  %v410 = vrot.slane %v409, 4
  %v411 = vadd.f32 %v409, %v410
  %v412 = vrot.slane %v411, 2
  %v413 = vadd.f32 %v411, %v412
  %v414 = vrot.slane %v413, 1
  %v415 = vadd.f32 %v413, %v414
  %416 = vst [vmem:[%s3] sm:$0x1] %v415
  %v417 = vmul.f32 %v305, %v305
  %v418 = vmul.f32 %v308, %v308
  %v419 = vmul.f32 %v313, %v313
  %v420 = vmul.f32 %v316, %v316
  %v421 = vmul.f32 %v321, %v321
  %v422 = vmul.f32 %v324, %v324
  %v423 = vmul.f32 %v329, %v329
  %v424 = vmul.f32 %v332, %v332
  %v425 = vmul.f32 %v337, %v337
  %v426 = vmul.f32 %v340, %v340
  %v427 = vmul.f32 %v345, %v345
  %v428 = vmul.f32 %v348, %v348
  %v429 = vmul.f32 %v353, %v353
  %v430 = vmul.f32 %v356, %v356
  %v431 = vmul.f32 %v361, %v361
  %v432 = vmul.f32 %v364, %v364
  %v433 = vmul.f32 %v369, %v369
  %v434 = vmul.f32 %v372, %v372
  %v435 = vmul.f32 %v377, %v377
  %v436 = vmul.f32 %v380, %v380
  %v437 = vmul.f32 %v385, %v385
  %v438 = vadd.f32 %v417, %v418
  %v439 = vadd.f32 %v438, %v419
  %v440 = vadd.f32 %v439, %v420
  %v441 = vadd.f32 %v440, %v421
  %v442 = vadd.f32 %v441, %v422
  %v443 = vadd.f32 %v442, %v423
  %v444 = vadd.f32 %v443, %v424
  %v445 = vadd.f32 %v444, %v425
  %v446 = vadd.f32 %v445, %v426
  %v447 = vadd.f32 %v446, %v427
  %v448 = vadd.f32 %v447, %v428
  %v449 = vadd.f32 %v448, %v429
  %v450 = vadd.f32 %v449, %v430
  %v451 = vadd.f32 %v450, %v431
  %v452 = vadd.f32 %v451, %v432
  %v453 = vadd.f32 %v452, %v433
  %v454 = vadd.f32 %v453, %v434
  %v455 = vadd.f32 %v454, %v435
  %v456 = vadd.f32 %v455, %v436
  %v457 = vadd.f32 %v456, %v437
  %v458 = vrot.slane %v457, 4
  %v459 = vadd.f32 %v457, %v458
  %v460 = vrot.slane %v459, 2
  %v461 = vadd.f32 %v459, %v460
  %v462 = vrot.slane %v461, 1
  %v463 = vadd.f32 %v461, %v462
  %464 = vst [vmem:[%s3 + $0x1] sm:$0x1] %v463
  %v465 = vpack.c.bf16 %v308, %v305
  %v466 = vpack.c.bf16 %v316, %v313
  %v467 = vpack.c.bf16 %v324, %v321
  %v468 = vpack.c.bf16 %v332, %v329
  %v469 = vpack.c.bf16 %v340, %v337
  %v470 = vpack.c.bf16 %v348, %v345
  %v471 = vpack.c.bf16 %v356, %v353
  %v472 = vpack.c.bf16 %v364, %v361
  %v473 = vpack.c.bf16 %v372, %v369
  %v474 = vpack.c.bf16 %v380, %v377
  %v475 = vpack.c.bf16 %v385, %v385
  %v487 = vunpack.c.l.b16 %v465
  %v488 = vunpack.c.h.b16 %v465
  %v489 = vunpack.c.l.b16 %v466
  %v490 = vunpack.c.h.b16 %v466
  %v491 = vunpack.c.l.b16 %v467
  %v492 = vunpack.c.h.b16 %v467
  %v493 = vunpack.c.l.b16 %v468
  %v494 = vunpack.c.h.b16 %v468
  %v495 = vunpack.c.l.b16 %v469
  %v496 = vunpack.c.h.b16 %v469
  %v497 = vunpack.c.l.b16 %v470
  %v498 = vunpack.c.h.b16 %v470
  %v499 = vunpack.c.l.b16 %v471
  %v500 = vunpack.c.h.b16 %v471
  %v501 = vunpack.c.l.b16 %v472
  %v502 = vunpack.c.h.b16 %v472
  %v503 = vunpack.c.l.b16 %v473
  %v504 = vunpack.c.h.b16 %v473
  %v505 = vunpack.c.l.b16 %v474
  %v506 = vunpack.c.h.b16 %v474
  %v507 = vunpack.c.l.b16 %v475
  %v508 = vpack.c.b16 %v487, %v487
  %v509 = vpack.c.b16 %v488, %v488
  %v510 = vpack.c.b16 %v489, %v489
  %v511 = vpack.c.b16 %v490, %v490
  %v512 = vpack.c.b16 %v491, %v491
  %v513 = vpack.c.b16 %v492, %v492
  %v514 = vpack.c.b16 %v493, %v493
  %v515 = vpack.c.b16 %v494, %v494
  %v516 = vpack.c.b16 %v495, %v495
  %v517 = vpack.c.b16 %v496, %v496
  %v518 = vpack.c.b16 %v497, %v497
  %v519 = vpack.c.b16 %v498, %v498
  %v520 = vpack.c.b16 %v499, %v499
  %v521 = vpack.c.b16 %v500, %v500
  %v522 = vpack.c.b16 %v501, %v501
  %v523 = vpack.c.b16 %v502, %v502
  %v524 = vpack.c.b16 %v503, %v503
  %v525 = vpack.c.b16 %v504, %v504
  %v526 = vpack.c.b16 %v505, %v505
  %v527 = vpack.c.b16 %v506, %v506
  %v528 = vpack.c.b16 %v507, %v507
  %550 = vst [vmem:[%s2] sm:$0xf] %v508
  %551 = vst [vmem:[%s2 + $0x4] sm:$0xf] %v509
  %552 = vst [vmem:[%s2 + $0x8] sm:$0xf] %v510
  %553 = vst [vmem:[%s2 + $0xc] sm:$0xf] %v511
  %554 = vst [vmem:[%s2 + $0x10] sm:$0xf] %v512
  %555 = vst [vmem:[%s2 + $0x14] sm:$0xf] %v513
  %556 = vst [vmem:[%s2 + $0x18] sm:$0xf] %v514
  %557 = vst [vmem:[%s2 + $0x1c] sm:$0xf] %v515
  %558 = vst [vmem:[%s2 + $0x20] sm:$0xf] %v516
  %559 = vst [vmem:[%s2 + $0x24] sm:$0xf] %v517
  %560 = vst [vmem:[%s2 + $0x28] sm:$0xf] %v518
  %561 = vst [vmem:[%s2 + $0x2c] sm:$0xf] %v519
  %562 = vst [vmem:[%s2 + $0x30] sm:$0xf] %v520
  %563 = vst [vmem:[%s2 + $0x34] sm:$0xf] %v521
  %564 = vst [vmem:[%s2 + $0x38] sm:$0xf] %v522
  %565 = vst [vmem:[%s2 + $0x3c] sm:$0xf] %v523
  %566 = vst [vmem:[%s2 + $0x40] sm:$0xf] %v524
  %567 = vst [vmem:[%s2 + $0x44] sm:$0xf] %v525
  %568 = vst [vmem:[%s2 + $0x48] sm:$0xf] %v526
  %569 = vst [vmem:[%s2 + $0x4c] sm:$0xf] %v527
  %570 = vst [vmem:[%s2 + $0x50] sm:$0xf] %v528
  // Predicated region
  $region10: #{_lambda_.13} parent=0 // pred_check
    _
  $region11: #{_lambda_.13} parent=0 // pred_check_branch
    %572 = sbr.rel (0) target = $region13
  $region12: #{_lambda_.13} parent=0 // pred_region
    _
  $region13: #{_lambda_.13} parent=0 // pred_fallthru
    _
  // Predicated region
  $region14: #{_lambda_.13} parent=0 // pred_check
    _
  $region15: #{_lambda_.13} parent=0 // pred_check_branch
    %574 = sbr.rel (0) target = $region17
  $region16: #{_lambda_.13} parent=0 // pred_region
    _
  $region17: #{_lambda_.13} parent=0 // pred_fallthru
    _
  // Predicated region
  $region18: #{_lambda_.13} parent=0 // pred_check
    _
  $region19: #{_lambda_.13} parent=0 // pred_check_branch
    %576 = sbr.rel (0) target = $region21
  $region20: #{_lambda_.13} parent=0 // pred_region
    _
  $region21: #{_lambda_.13} parent=0 // pred_fallthru
    _
  // Predicated region
  $region22: #{_lambda_.13} parent=0 // pred_check
    _
  $region23: #{_lambda_.13} parent=0 // pred_check_branch
    %578 = sbr.rel (0) target = $region25
  $region24: #{_lambda_.13} parent=0 // pred_region
    _
  $region25: #{_lambda_.13} parent=0 // pred_fallthru
    _

// kernel: tile.52
$region0: #{tile.52}
  #allocation0 [shape = 's32[1]{0}', space=sflag, size = 0x4, scoped, tag = 'scoped memory for tile.52']
  %s0 = inlined_call_operand.vmem [shape: f32[32], index: 0, kind: input, shape index: {}]
  %s1 = inlined_call_operand.vmem [shape: f32[4,32], index: 1, kind: output, shape index: {}]
  // Predicated region
  $region2: #{tile.52} parent=0 // pred_check
    _
  $region3: #{tile.52} parent=0 // pred_check_branch
    %3 = sbr.rel (0) target = $region5
  $region4: #{tile.52} parent=0 // pred_region
    _
  $region5: #{tile.52} parent=0 // pred_fallthru
    _
  %v4 = vld [vmem:[%s0] ss:$0 sm:$0xff]
  %5 = vst [vmem:[%s1] sm:$0xf] %v4

// kernel: _lambda_.14
$region0: #{_lambda_.14}
  #allocation0 [shape = 'u32[]', space=smem, size = 0x4, offset = 0x4, fixed_abs, tag = 'smem constant byte address 0x4 - core index']
  #allocation1 [shape = 'u32[144,128]{1,0:T(1,128)}', space=vmem, size = 0x12000, scoped, tag = 'internal scratch']
  %s0 = inlined_call_operand.vmem [shape: bf16[168,128], index: 0, kind: input, shape index: {}]
  %s1 = inlined_call_operand.vmem [shape: f32[1,128], index: 1, kind: input, shape index: {}]
  %s2 = inlined_call_operand.vmem [shape: f32[1,128], index: 2, kind: input, shape index: {}]
  %s3 = inlined_call_operand.vmem [shape: bf16[168,128], index: 3, kind: output, shape index: {}]
  %s4 = sld [smem:[#allocation0]]
  $region22: #{_lambda_.14} parent=0
    _
  %s6 = ssub.s32 1, %s4
  %s7 = scalar_select 0, %s6, %s4
  // Predicated region
  $region2: #{_lambda_.14} parent=0 // pred_check
    _
  $region3: #{_lambda_.14} parent=0 // pred_check_branch
    %9 = sbr.rel (0) target = $region5
  $region4: #{_lambda_.14} parent=0 // pred_region
    _
  $region5: #{_lambda_.14} parent=0 // pred_fallthru
    _
  // Predicated region
  $region6: #{_lambda_.14} parent=0 // pred_check
    _
  $region7: #{_lambda_.14} parent=0 // pred_check_branch
    %11 = sbr.rel (0) target = $region9
  $region8: #{_lambda_.14} parent=0 // pred_region
    _
  $region9: #{_lambda_.14} parent=0 // pred_fallthru
    _
  // Predicated region
  $region10: #{_lambda_.14} parent=0 // pred_check
    _
  $region11: #{_lambda_.14} parent=0 // pred_check_branch
    %13 = sbr.rel (0) target = $region13
  $region12: #{_lambda_.14} parent=0 // pred_region
    _
  $region13: #{_lambda_.14} parent=0 // pred_fallthru
    _
  %v14 = vld [vmem:[%s0] sm:$0xf]
  %v15 = vld [vmem:[%s0 + $0x4] sm:$0xf]
  %v16 = vld [vmem:[%s0 + $0x8] sm:$0xf]
  %v17 = vld [vmem:[%s0 + $0xc] sm:$0xf]
  %v18 = vld [vmem:[%s0 + $0x10] sm:$0xf]
  %v19 = vld [vmem:[%s0 + $0x14] sm:$0xf]
  %v20 = vld [vmem:[%s0 + $0x18] sm:$0xf]
  %v21 = vld [vmem:[%s0 + $0x1c] sm:$0xf]
  %v22 = vld [vmem:[%s0 + $0x20] sm:$0xf]
  %v23 = vld [vmem:[%s0 + $0x24] sm:$0xf]
  %v24 = vld [vmem:[%s0 + $0x28] sm:$0xf]
  %v25 = vld [vmem:[%s0 + $0x2c] sm:$0xf]
  %v26 = vld [vmem:[%s0 + $0x30] sm:$0xf]
  %v27 = vld [vmem:[%s0 + $0x34] sm:$0xf]
  %v28 = vld [vmem:[%s0 + $0x38] sm:$0xf]
  %v29 = vld [vmem:[%s0 + $0x3c] sm:$0xf]
  %v30 = vld [vmem:[%s0 + $0x40] sm:$0xf]
  %v31 = vld [vmem:[%s0 + $0x44] sm:$0xf]
  %v32 = vld [vmem:[%s0 + $0x48] sm:$0xf]
  %v33 = vld [vmem:[%s0 + $0x4c] sm:$0xf]
  %v34 = vld [vmem:[%s0 + $0x50] sm:$0xf]
  %v35 = vunpack.c.l.bf16 %v14
  %v36 = vunpack.c.l.bf16 %v15
  %v37 = vunpack.c.l.bf16 %v16
  %v38 = vunpack.c.l.bf16 %v17
  %v39 = vunpack.c.l.bf16 %v18
  %v40 = vunpack.c.l.bf16 %v19
  %v41 = vunpack.c.l.bf16 %v20
  %v42 = vunpack.c.l.bf16 %v21
  %v43 = vunpack.c.l.bf16 %v22
  %v44 = vunpack.c.l.bf16 %v23
  %v45 = vunpack.c.l.bf16 %v24
  %v46 = vunpack.c.l.bf16 %v25
  %v47 = vunpack.c.l.bf16 %v26
  %v48 = vunpack.c.l.bf16 %v27
  %v49 = vunpack.c.l.bf16 %v28
  %v50 = vunpack.c.l.bf16 %v29
  %v51 = vunpack.c.l.bf16 %v30
  %v52 = vunpack.c.l.bf16 %v31
  %v53 = vunpack.c.l.bf16 %v32
  %v54 = vunpack.c.l.bf16 %v33
  %v55 = vunpack.c.l.bf16 %v34
  %v56 = vld [vmem:[%s1] sm:$0x1]
  %v58 = vlaneseq
  %v59 = vshrl.u32 %v58, 7
  %v60 = vsub.s32 0, %v59
  %v61 = vrot.slane %v56, %v60
  %v63 = vmul.f32 %v35, %v61
  %v64 = vmul.f32 %v36, %v61
  %v65 = vmul.f32 %v37, %v61
  %v66 = vmul.f32 %v38, %v61
  %v67 = vmul.f32 %v39, %v61
  %v68 = vmul.f32 %v40, %v61
  %v69 = vmul.f32 %v41, %v61
  %v70 = vmul.f32 %v42, %v61
  %v71 = vmul.f32 %v43, %v61
  %v72 = vmul.f32 %v44, %v61
  %v73 = vmul.f32 %v45, %v61
  %v74 = vmul.f32 %v46, %v61
  %v75 = vmul.f32 %v47, %v61
  %v76 = vmul.f32 %v48, %v61
  %v77 = vmul.f32 %v49, %v61
  %v78 = vmul.f32 %v50, %v61
  %v79 = vmul.f32 %v51, %v61
  %v80 = vmul.f32 %v52, %v61
  %v81 = vmul.f32 %v53, %v61
  %v82 = vmul.f32 %v54, %v61
  %v83 = vmul.f32 %v55, %v61
  %v84 = vld [vmem:[%s2] sm:$0x1]
  %v86 = vlaneseq
  %v87 = vshrl.u32 %v86, 7
  %v88 = vsub.s32 0, %v87
  %v89 = vrot.slane %v84, %v88
  %v91 = vadd.f32 %v63, %v89
  %v92 = vadd.f32 %v64, %v89
  %v93 = vadd.f32 %v65, %v89
  %v94 = vadd.f32 %v66, %v89
  %v95 = vadd.f32 %v67, %v89
  %v96 = vadd.f32 %v68, %v89
  %v97 = vadd.f32 %v69, %v89
  %v98 = vadd.f32 %v70, %v89
  %v99 = vadd.f32 %v71, %v89
  %v100 = vadd.f32 %v72, %v89
  %v101 = vadd.f32 %v73, %v89
  %v102 = vadd.f32 %v74, %v89
  %v103 = vadd.f32 %v75, %v89
  %v104 = vadd.f32 %v76, %v89
  %v105 = vadd.f32 %v77, %v89
  %v106 = vadd.f32 %v78, %v89
  %v107 = vadd.f32 %v79, %v89
  %v108 = vadd.f32 %v80, %v89
  %v109 = vadd.f32 %v81, %v89
  %v110 = vadd.f32 %v82, %v89
  %v111 = vadd.f32 %v83, %v89
  %v112 = vmax.f32 %v91, 0.0
  %v113 = vmax.f32 %v92, 0.0
  %v114 = vmax.f32 %v93, 0.0
  %v115 = vmax.f32 %v94, 0.0
  %v116 = vmax.f32 %v95, 0.0
  %v117 = vmax.f32 %v96, 0.0
  %v118 = vmax.f32 %v97, 0.0
  %v119 = vmax.f32 %v98, 0.0
  %v120 = vmax.f32 %v99, 0.0
  %v121 = vmax.f32 %v100, 0.0
  %v122 = vmax.f32 %v101, 0.0
  %v123 = vmax.f32 %v102, 0.0
  %v124 = vmax.f32 %v103, 0.0
  %v125 = vmax.f32 %v104, 0.0
  %v126 = vmax.f32 %v105, 0.0
  %v127 = vmax.f32 %v106, 0.0
  %v128 = vmax.f32 %v107, 0.0
  %v129 = vmax.f32 %v108, 0.0
  %v130 = vmax.f32 %v109, 0.0
  %v131 = vmax.f32 %v110, 0.0
  %v132 = vmax.f32 %v111, 0.0
  %v133 = vpack.c.bf16 %v113, %v112
  %v134 = vpack.c.bf16 %v115, %v114
  %v135 = vpack.c.bf16 %v117, %v116
  %v136 = vpack.c.bf16 %v119, %v118
  %v137 = vpack.c.bf16 %v121, %v120
  %v138 = vpack.c.bf16 %v123, %v122
  %v139 = vpack.c.bf16 %v125, %v124
  %v140 = vpack.c.bf16 %v127, %v126
  %v141 = vpack.c.bf16 %v129, %v128
  %v142 = vpack.c.bf16 %v131, %v130
  %v143 = vpack.c.bf16 %v132, %v132
  %v155 = vunpack.c.l.b16 %v133
  %v156 = vunpack.c.h.b16 %v133
  %v157 = vunpack.c.l.b16 %v134
  %v158 = vunpack.c.h.b16 %v134
  %v159 = vunpack.c.l.b16 %v135
  %v160 = vunpack.c.h.b16 %v135
  %v161 = vunpack.c.l.b16 %v136
  %v162 = vunpack.c.h.b16 %v136
  %v163 = vunpack.c.l.b16 %v137
  %v164 = vunpack.c.h.b16 %v137
  %v165 = vunpack.c.l.b16 %v138
  %v166 = vunpack.c.h.b16 %v138
  %v167 = vunpack.c.l.b16 %v139
  %v168 = vunpack.c.h.b16 %v139
  %v169 = vunpack.c.l.b16 %v140
  %v170 = vunpack.c.h.b16 %v140
  %v171 = vunpack.c.l.b16 %v141
  %v172 = vunpack.c.h.b16 %v141
  %v173 = vunpack.c.l.b16 %v142
  %v174 = vunpack.c.h.b16 %v142
  %v175 = vunpack.c.l.b16 %v143
  %v176 = vpack.c.b16 %v155, %v155
  %v177 = vpack.c.b16 %v156, %v156
  %v178 = vpack.c.b16 %v157, %v157
  %v179 = vpack.c.b16 %v158, %v158
  %v180 = vpack.c.b16 %v159, %v159
  %v181 = vpack.c.b16 %v160, %v160
  %v182 = vpack.c.b16 %v161, %v161
  %v183 = vpack.c.b16 %v162, %v162
  %v184 = vpack.c.b16 %v163, %v163
  %v185 = vpack.c.b16 %v164, %v164
  %v186 = vpack.c.b16 %v165, %v165
  %v187 = vpack.c.b16 %v166, %v166
  %v188 = vpack.c.b16 %v167, %v167
  %v189 = vpack.c.b16 %v168, %v168
  %v190 = vpack.c.b16 %v169, %v169
  %v191 = vpack.c.b16 %v170, %v170
  %v192 = vpack.c.b16 %v171, %v171
  %v193 = vpack.c.b16 %v172, %v172
  %v194 = vpack.c.b16 %v173, %v173
  %v195 = vpack.c.b16 %v174, %v174
  %v196 = vpack.c.b16 %v175, %v175
  %218 = vst [vmem:[%s3] sm:$0xf] %v176
  %219 = vst [vmem:[%s3 + $0x4] sm:$0xf] %v177
  %220 = vst [vmem:[%s3 + $0x8] sm:$0xf] %v178
  %221 = vst [vmem:[%s3 + $0xc] sm:$0xf] %v179
  %222 = vst [vmem:[%s3 + $0x10] sm:$0xf] %v180
  %223 = vst [vmem:[%s3 + $0x14] sm:$0xf] %v181
  %224 = vst [vmem:[%s3 + $0x18] sm:$0xf] %v182
  %225 = vst [vmem:[%s3 + $0x1c] sm:$0xf] %v183
  %226 = vst [vmem:[%s3 + $0x20] sm:$0xf] %v184
  %227 = vst [vmem:[%s3 + $0x24] sm:$0xf] %v185
  %228 = vst [vmem:[%s3 + $0x28] sm:$0xf] %v186
  %229 = vst [vmem:[%s3 + $0x2c] sm:$0xf] %v187
  %230 = vst [vmem:[%s3 + $0x30] sm:$0xf] %v188
  %231 = vst [vmem:[%s3 + $0x34] sm:$0xf] %v189
  %232 = vst [vmem:[%s3 + $0x38] sm:$0xf] %v190
  %233 = vst [vmem:[%s3 + $0x3c] sm:$0xf] %v191
  %234 = vst [vmem:[%s3 + $0x40] sm:$0xf] %v192
  %235 = vst [vmem:[%s3 + $0x44] sm:$0xf] %v193
  %236 = vst [vmem:[%s3 + $0x48] sm:$0xf] %v194
  %237 = vst [vmem:[%s3 + $0x4c] sm:$0xf] %v195
  %238 = vst [vmem:[%s3 + $0x50] sm:$0xf] %v196
  // Predicated region
  $region14: #{_lambda_.14} parent=0 // pred_check
    _
  $region15: #{_lambda_.14} parent=0 // pred_check_branch
    %240 = sbr.rel (0) target = $region17
  $region16: #{_lambda_.14} parent=0 // pred_region
    _
  $region17: #{_lambda_.14} parent=0 // pred_fallthru
    _
  // Predicated region
  $region18: #{_lambda_.14} parent=0 // pred_check
    _
  $region19: #{_lambda_.14} parent=0 // pred_check_branch
    %242 = sbr.rel (0) target = $region21
  $region20: #{_lambda_.14} parent=0 // pred_region
    _
  $region21: #{_lambda_.14} parent=0 // pred_fallthru
    _

// kernel: _lambda_.15
$region0: #{_lambda_.15}
  #allocation0 [shape = 'u32[]', space=smem, size = 0x4, offset = 0x4, fixed_abs, tag = 'smem constant byte address 0x4 - core index']
  #allocation1 [shape = 'u32[144,128]{1,0:T(1,128)}', space=vmem, size = 0x12000, scoped, tag = 'internal scratch']
  %s0 = inlined_call_operand.vmem [shape: bf16[592,128], index: 0, kind: input, shape index: {}]
  %s1 = inlined_call_operand.vmem [shape: bf16[128,128], index: 1, kind: input, shape index: {}]
  %s2 = inlined_call_operand.vmem [shape: bf16[592,128], index: 2, kind: output, shape index: {0}]
  %s3 = inlined_call_operand.vmem [shape: f32[16,128], index: 3, kind: output, shape index: {1}]
  %4 = xla_tuple %s2, %s3
  %s5 = sld [smem:[#allocation0]]
  $region49: #{_lambda_.15} parent=0
    _
  %s7 = ssub.s32 1, %s5
  %s8 = scalar_select 0, %s7, %s5
  loop: start=0, step=1, limit=4
  $region2: #{_lambda_.15} parent=0 // loop_pre_header
    _
  $region3: #{_lambda_.15} parent=0 // loop_header
    %s10 = sphi 0, %s14
    %p11 = scmp.ge.s32.totalorder %s10, 4
    %s20 = sphi 0, %s22
    %s23 = sphi 0, %s20
    %s24 = sphi 0, %s23
    %s40 = sphi 0, %s24
    %s44 = sphi 0, %s44
    %s46 = sphi 0, %s44
    %s47 = sphi 0, %s46
    %s61 = sphi 0, %s47
    %s67 = sphi 0, %s69
    %s70 = sphi 0, %s67
    %s71 = sphi 0, %s70
    %s87 = sphi 0, %s71
    %s93 = sphi 0, %s95
    %s96 = sphi 0, %s93
    %s97 = sphi 0, %s96
    %s113 = sphi 0, %s97
  $region4: #{_lambda_.15} parent=0 // loop_header_branch
    %13 = sbr.rel (%p11) target = $region8
  $region5: #{_lambda_.15} parent=0 // loop_body
    %s15 = ssub.s32 %s10, 1
    %s16 = ssub.s32 %s10, 2
    %s17 = sadd.s32 %s10, 1
    %s18 = ssub.s32 %s10, %s17
    %p19 = scmp.eq.s32.totalorder %s18, 0
    %s21 = sadd.s32 %s20, 1
    %s22 = scalar_select %p19, %s20, %s21
    %p25 = pneg %p19
    %p26 = scmp.eq.s32.totalorder %s10, 1
    %p27 = por %p25, %p26
    %p28 = scmp.ne.s32.totalorder %s20, %s23
    %p29 = scmp.eq.s32.totalorder %s10, 0
    %p30 = por %p28, %p29
    %p31 = scmp.ne.s32.totalorder %s20, %s23
    %p32 = scmp.eq.s32.totalorder %s15, 1
    %p33 = por %p31, %p32
    %p34 = scmp.ne.s32.totalorder %s23, %s24
    %p35 = scmp.eq.s32.totalorder %s15, 0
    %p36 = por %p34, %p35
    %p37 = scmp.ne.s32.totalorder %s23, %s24
    %p38 = scmp.eq.s32.totalorder %s16, 1
    %p39 = por %p37, %p38
    %p41 = scmp.ne.s32.totalorder %s24, %s40
    %p42 = scmp.eq.s32.totalorder %s16, 0
    %p43 = por %p41, %p42
    %s45 = sadd.s32 %s44, 1
    %p48 = scmp.eq.s32.totalorder %s10, 1
    %p49 = scmp.ne.s32.totalorder %s44, %s46
    %p50 = scmp.eq.s32.totalorder %s10, 0
    %p51 = por %p49, %p50
    %p52 = scmp.ne.s32.totalorder %s44, %s46
    %p53 = scmp.eq.s32.totalorder %s15, 1
    %p54 = por %p52, %p53
    %p55 = scmp.ne.s32.totalorder %s46, %s47
    %p56 = scmp.eq.s32.totalorder %s15, 0
    %p57 = por %p55, %p56
    %p58 = scmp.ne.s32.totalorder %s46, %s47
    %p59 = scmp.eq.s32.totalorder %s16, 1
    %p60 = por %p58, %p59
    %p62 = scmp.ne.s32.totalorder %s47, %s61
    %p63 = scmp.eq.s32.totalorder %s16, 0
    %p64 = por %p62, %p63
    %s65 = ssub.s32 %s10, %s17
    %p66 = scmp.eq.s32.totalorder %s65, 0
    %s68 = sadd.s32 %s67, 1
    %s69 = scalar_select %p66, %s67, %s68
    %p72 = pneg %p66
    %p73 = scmp.eq.s32.totalorder %s10, 1
    %p74 = por %p72, %p73
    %p75 = scmp.ne.s32.totalorder %s67, %s70
    %p76 = scmp.eq.s32.totalorder %s10, 0
    %p77 = por %p75, %p76
    %p78 = scmp.ne.s32.totalorder %s67, %s70
    %p79 = scmp.eq.s32.totalorder %s15, 1
    %p80 = por %p78, %p79
    %p81 = scmp.ne.s32.totalorder %s70, %s71
    %p82 = scmp.eq.s32.totalorder %s15, 0
    %p83 = por %p81, %p82
    %p84 = scmp.ne.s32.totalorder %s70, %s71
    %p85 = scmp.eq.s32.totalorder %s16, 1
    %p86 = por %p84, %p85
    %p88 = scmp.ne.s32.totalorder %s71, %s87
    %p89 = scmp.eq.s32.totalorder %s16, 0
    %p90 = por %p88, %p89
    %s91 = ssub.s32 %s10, %s17
    %p92 = scmp.eq.s32.totalorder %s91, 0
    %s94 = sadd.s32 %s93, 1
    %s95 = scalar_select %p92, %s93, %s94
    %p98 = pneg %p92
    %p99 = scmp.eq.s32.totalorder %s10, 1
    %p100 = por %p98, %p99
    %p101 = scmp.ne.s32.totalorder %s93, %s96
    %p102 = scmp.eq.s32.totalorder %s10, 0
    %p103 = por %p101, %p102
    %p104 = scmp.ne.s32.totalorder %s93, %s96
    %p105 = scmp.eq.s32.totalorder %s15, 1
    %p106 = por %p104, %p105
    %p107 = scmp.ne.s32.totalorder %s96, %s97
    %p108 = scmp.eq.s32.totalorder %s15, 0
    %p109 = por %p107, %p108
    %p110 = scmp.ne.s32.totalorder %s96, %s97
    %p111 = scmp.eq.s32.totalorder %s16, 1
    %p112 = por %p110, %p111
    %p114 = scmp.ne.s32.totalorder %s97, %s113
    %p115 = scmp.eq.s32.totalorder %s16, 0
    %p116 = por %p114, %p115
    %p117 = scmp.le.s32.totalorder 1, %s10
    %p118 = scmp.lt.s32.totalorder %s10, 3
    %p119 = pnand %p117, %p118
    %p120 = pneg %p119
    // Predicated region
    $region9: #{_lambda_.15} parent=5 // pred_check
      _
    $region10: #{_lambda_.15} parent=5 // pred_check_branch
      %122 = sbr.rel (%p119) target = $region12
    $region11: #{_lambda_.15} parent=5 // pred_region
      %s123 = ssub.s32 %s10, 1
      // Predicated region
      $region13: #{_lambda_.15} parent=11 // pred_check
        %p124 = pneg %p57
      $region14: #{_lambda_.15} parent=11 // pred_check_branch
        %126 = sbr.rel (%p124) target = $region16
      $region15: #{_lambda_.15} parent=11 // pred_region
        _
      $region16: #{_lambda_.15} parent=11 // pred_fallthru
        _
    $region12: #{_lambda_.15} parent=5 // pred_fallthru
      _
    %p127 = scmp.lt.s32.totalorder %s10, 2
    // Predicated region
    $region17: #{_lambda_.15} parent=5 // pred_check
      %p128 = pneg %p127
    $region18: #{_lambda_.15} parent=5 // pred_check_branch
      %130 = sbr.rel (%p128) target = $region20
    $region19: #{_lambda_.15} parent=5 // pred_region
      // Predicated region
      $region21: #{_lambda_.15} parent=19 // pred_check
        %p131 = pneg %p30
      $region22: #{_lambda_.15} parent=19 // pred_check_branch
        %133 = sbr.rel (%p131) target = $region24
      $region23: #{_lambda_.15} parent=19 // pred_region
        %s134 = smul.u32 37, %s10
        %p135 = scmp.lt.s32.totalorder %s134, 73
        %s136 = scalar_select %p135, %s134, 73
        %s137 = smul.addr %s136, 4
        %s138 = scalar_lea.vmem %s0, %s137
        %s139 = smul.u32 37, %s10
      $region24: #{_lambda_.15} parent=19 // pred_fallthru
        _
    $region20: #{_lambda_.15} parent=5 // pred_fallthru
      _
    %p140 = scmp.le.s32.totalorder 1, %s10
    %p141 = scmp.lt.s32.totalorder %s10, 3
    %p142 = pnand %p140, %p141
    %p143 = pneg %p142
    // Predicated region
    $region25: #{_lambda_.15} parent=5 // pred_check
      _
    $region26: #{_lambda_.15} parent=5 // pred_check_branch
      %145 = sbr.rel (%p142) target = $region28
    $region27: #{_lambda_.15} parent=5 // pred_region
      %s146 = ssub.s32 %s10, 1
      %s147 = smul.u32 37, %s15
      %p148 = scmp.lt.s32.totalorder %s147, 73
      %s149 = scalar_select %p148, %s147, 73
      %s150 = smul.addr %s149, 4
      %s151 = scalar_lea.vmem %s0, %s150
      %p152 = pneg %p36
      %p153 = pneg %p33
      %p154 = pneg %p57
      %p155 = pneg %p54
      %p156 = pneg %p83
      %p157 = pneg %p80
      %s158 = smul.u32 37, %s15
      %p159 = scmp.lt.s32.totalorder %s158, 73
      %s160 = scalar_select %p159, %s158, 73
      %s161 = smul.addr %s160, 4
      %s162 = scalar_lea.vmem %s2, %s161
      %p163 = pneg %p109
      %p164 = pneg %p106
      %p165 = scmp.lt.s32.totalorder %s15, 1
      %s166 = scalar_select %p165, %s15, 1
      %s167 = smul.addr %s166, 8
      %s168 = scalar_lea.vmem %s3, %s167
      %s169 = smul.u32 37, %s15
      %p170 = scmp.lt.s32.totalorder %s169, 73
      %s171 = scalar_select %p170, %s169, 73
      %s172 = smul.addr %s171, 4
      %s173 = scalar_lea.vmem %s0, %s172
      %s174 = smul.u32 37, %s15
      %s175 = smul.u32 37, %s15
      %p176 = scmp.lt.s32.totalorder %s175, 73
      %s177 = scalar_select %p176, %s175, 73
      %s178 = smul.addr %s177, 4
      %s179 = scalar_lea.vmem %s2, %s178
      %s180 = smul.u32 37, %s15
      %p181 = scmp.lt.s32.totalorder %s15, 1
      %s182 = scalar_select %p181, %s15, 1
      %s183 = smul.addr %s182, 8
      %s184 = scalar_lea.vmem %s3, %s183
      %v186 = vld [vmem:[%s173] sm:$0xf]
      %v187 = vld [vmem:[%s173 + $0x4] sm:$0xf]
      %v188 = vld [vmem:[%s173 + $0x8] sm:$0xf]
      %v189 = vld [vmem:[%s173 + $0xc] sm:$0xf]
      %v190 = vld [vmem:[%s173 + $0x10] sm:$0xf]
      %v191 = vld [vmem:[%s173 + $0x14] sm:$0xf]
      %v192 = vld [vmem:[%s173 + $0x18] sm:$0xf]
      %v193 = vld [vmem:[%s173 + $0x1c] sm:$0xf]
      %v194 = vld [vmem:[%s173 + $0x20] sm:$0xf]
      %v195 = vld [vmem:[%s173 + $0x24] sm:$0xf]
      %v196 = vld [vmem:[%s173 + $0x28] sm:$0xf]
      %v197 = vld [vmem:[%s173 + $0x2c] sm:$0xf]
      %v198 = vld [vmem:[%s173 + $0x30] sm:$0xf]
      %v199 = vld [vmem:[%s173 + $0x34] sm:$0xf]
      %v200 = vld [vmem:[%s173 + $0x38] sm:$0xf]
      %v201 = vld [vmem:[%s173 + $0x3c] sm:$0xf]
      %v202 = vld [vmem:[%s173 + $0x40] sm:$0xf]
      %v203 = vld [vmem:[%s173 + $0x44] sm:$0xf]
      %v204 = vld [vmem:[%s173 + $0x48] sm:$0xf]
      %v205 = vld [vmem:[%s173 + $0x4c] sm:$0xf]
      %v206 = vld [vmem:[%s173 + $0x50] sm:$0xf]
      %v207 = vld [vmem:[%s173 + $0x54] sm:$0xf]
      %v208 = vld [vmem:[%s173 + $0x58] sm:$0xf]
      %v209 = vld [vmem:[%s173 + $0x5c] sm:$0xf]
      %v210 = vld [vmem:[%s173 + $0x60] sm:$0xf]
      %v211 = vld [vmem:[%s173 + $0x64] sm:$0xf]
      %v212 = vld [vmem:[%s173 + $0x68] sm:$0xf]
      %v213 = vld [vmem:[%s173 + $0x6c] sm:$0xf]
      %v214 = vld [vmem:[%s173 + $0x70] sm:$0xf]
      %v215 = vld [vmem:[%s173 + $0x74] sm:$0xf]
      %v216 = vld [vmem:[%s173 + $0x78] sm:$0xf]
      %v217 = vld [vmem:[%s173 + $0x7c] sm:$0xf]
      %v218 = vld [vmem:[%s173 + $0x80] sm:$0xf]
      %v219 = vld [vmem:[%s173 + $0x84] sm:$0xf]
      %v220 = vld [vmem:[%s173 + $0x88] sm:$0xf]
      %v221 = vld [vmem:[%s173 + $0x8c] sm:$0xf]
      %v222 = vld [vmem:[%s173 + $0x90] sm:$0xf]
      %v223 = vld [vmem:[%s1] sm:$0xf]
      %v224 = vld [vmem:[%s1 + $0x4] sm:$0xf]
      %v225 = vld [vmem:[%s1 + $0x8] sm:$0xf]
      %v226 = vld [vmem:[%s1 + $0xc] sm:$0xf]
      %v227 = vld [vmem:[%s1 + $0x10] sm:$0xf]
      %v228 = vld [vmem:[%s1 + $0x14] sm:$0xf]
      %v229 = vld [vmem:[%s1 + $0x18] sm:$0xf]
      %v230 = vld [vmem:[%s1 + $0x1c] sm:$0xf]
      %v231 = vld [vmem:[%s1 + $0x20] sm:$0xf]
      %v232 = vld [vmem:[%s1 + $0x24] sm:$0xf]
      %v233 = vld [vmem:[%s1 + $0x28] sm:$0xf]
      %v234 = vld [vmem:[%s1 + $0x2c] sm:$0xf]
      %v235 = vld [vmem:[%s1 + $0x30] sm:$0xf]
      %v236 = vld [vmem:[%s1 + $0x34] sm:$0xf]
      %v237 = vld [vmem:[%s1 + $0x38] sm:$0xf]
      %v238 = vld [vmem:[%s1 + $0x3c] sm:$0xf]
      %v276 = vunpack.c.l.b16 %v186
      %v277 = vunpack.c.l.b16 %v187
      %v278 = vunpack.c.l.b16 %v188
      %v279 = vunpack.c.l.b16 %v189
      %v280 = vunpack.c.l.b16 %v190
      %v281 = vunpack.c.l.b16 %v191
      %v282 = vunpack.c.l.b16 %v192
      %v283 = vunpack.c.l.b16 %v193
      %v284 = vunpack.c.l.b16 %v194
      %v285 = vunpack.c.l.b16 %v195
      %v286 = vunpack.c.l.b16 %v196
      %v287 = vunpack.c.l.b16 %v197
      %v288 = vunpack.c.l.b16 %v198
      %v289 = vunpack.c.l.b16 %v199
      %v290 = vunpack.c.l.b16 %v200
      %v291 = vunpack.c.l.b16 %v201
      %v292 = vunpack.c.l.b16 %v202
      %v293 = vunpack.c.l.b16 %v203
      %v294 = vunpack.c.l.b16 %v204
      %v295 = vunpack.c.l.b16 %v205
      %v296 = vunpack.c.l.b16 %v206
      %v297 = vunpack.c.l.b16 %v207
      %v298 = vunpack.c.l.b16 %v208
      %v299 = vunpack.c.l.b16 %v209
      %v300 = vunpack.c.l.b16 %v210
      %v301 = vunpack.c.l.b16 %v211
      %v302 = vunpack.c.l.b16 %v212
      %v303 = vunpack.c.l.b16 %v213
      %v304 = vunpack.c.l.b16 %v214
      %v305 = vunpack.c.l.b16 %v215
      %v306 = vunpack.c.l.b16 %v216
      %v307 = vunpack.c.l.b16 %v217
      %v308 = vunpack.c.l.b16 %v218
      %v309 = vunpack.c.l.b16 %v219
      %v310 = vunpack.c.l.b16 %v220
      %v311 = vunpack.c.l.b16 %v221
      %v312 = vunpack.c.l.b16 %v222
      %v313 = vpack.c.b16 %v277, %v276
      %v314 = vpack.c.b16 %v279, %v278
      %v315 = vpack.c.b16 %v281, %v280
      %v316 = vpack.c.b16 %v283, %v282
      %v317 = vpack.c.b16 %v285, %v284
      %v318 = vpack.c.b16 %v287, %v286
      %v319 = vpack.c.b16 %v289, %v288
      %v320 = vpack.c.b16 %v291, %v290
      %v321 = vpack.c.b16 %v293, %v292
      %v322 = vpack.c.b16 %v295, %v294
      %v323 = vpack.c.b16 %v297, %v296
      %v324 = vpack.c.b16 %v299, %v298
      %v325 = vpack.c.b16 %v301, %v300
      %v326 = vpack.c.b16 %v303, %v302
      %v327 = vpack.c.b16 %v305, %v304
      %v328 = vpack.c.b16 %v307, %v306
      %v329 = vpack.c.b16 %v309, %v308
      %v330 = vpack.c.b16 %v311, %v310
      %v331 = vpack.c.b16 %v312, %v312
      %v367 = vunpack.c.l.b16 %v223
      %v368 = vunpack.c.l.b16 %v224
      %v369 = vunpack.c.l.b16 %v225
      %v370 = vunpack.c.l.b16 %v226
      %v371 = vunpack.c.l.b16 %v227
      %v372 = vunpack.c.l.b16 %v228
      %v373 = vunpack.c.l.b16 %v229
      %v374 = vunpack.c.l.b16 %v230
      %v375 = vunpack.c.l.b16 %v231
      %v376 = vunpack.c.l.b16 %v232
      %v377 = vunpack.c.l.b16 %v233
      %v378 = vunpack.c.l.b16 %v234
      %v379 = vunpack.c.l.b16 %v235
      %v380 = vunpack.c.l.b16 %v236
      %v381 = vunpack.c.l.b16 %v237
      %v382 = vunpack.c.l.b16 %v238
      %v383 = vpack.c.b16 %v368, %v367
      %v384 = vpack.c.b16 %v370, %v369
      %v385 = vpack.c.b16 %v372, %v371
      %v386 = vpack.c.b16 %v374, %v373
      %v387 = vpack.c.b16 %v376, %v375
      %v388 = vpack.c.b16 %v378, %v377
      %v389 = vpack.c.b16 %v380, %v379
      %v390 = vpack.c.b16 %v382, %v381
      %399 = vmatprep.subr.bf16.mxu0 0
      %400 = vmatpush1.bf16.msra.mxu0 %v383
      %401 = vmatprep.subr.bf16.mxu0 0
      %402 = vmatpush1.bf16.msra.mxu0 %v384
      %403 = vmatprep.subr.bf16.mxu0 0
      %404 = vmatpush1.bf16.msra.mxu0 %v385
      %405 = vmatprep.subr.bf16.mxu0 0
      %406 = vmatpush1.bf16.msra.mxu0 %v386
      %407 = vmatprep.subr.bf16.mxu0 0
      %408 = vmatpush1.bf16.msra.mxu0 %v387
      %409 = vmatprep.subr.bf16.mxu0 0
      %410 = vmatpush1.bf16.msra.mxu0 %v388
      %411 = vmatprep.subr.bf16.mxu0 0
      %412 = vmatpush1.bf16.msra.mxu0 %v389
      %413 = vmatprep.subr.bf16.mxu0 0
      %414 = vmatpush1.bf16.msra.mxu0 %v390
      %415 = vmatprep.subr.bf16.mxu0 0
      %416 = vmatpush1.bf16.msra.mxu0 0
      %417 = vmatprep.subr.bf16.mxu0 0
      %418 = vmatpush1.bf16.msra.mxu0 0
      %419 = vmatprep.subr.bf16.mxu0 0
      %420 = vmatpush1.bf16.msra.mxu0 0
      %421 = vmatprep.subr.bf16.mxu0 0
      %422 = vmatpush1.bf16.msra.mxu0 0
      %423 = vmatprep.subr.bf16.mxu0 0
      %424 = vmatpush1.bf16.msra.mxu0 0
      %425 = vmatprep.subr.bf16.mxu0 0
      %426 = vmatpush1.bf16.msra.mxu0 0
      %427 = vmatprep.subr.bf16.mxu0 0
      %428 = vmatpush1.bf16.msra.mxu0 0
      %429 = vmatprep.subr.bf16.mxu0 0
      %430 = vmatpush1.bf16.msra.mxu0 0
      %431 = vmatprep.mubr.bf16.mxu0 0
      %432 = vmatmul.mubr.bf16.gmra.mrb[0].mxu0 %v313
      %v433 = vpop.f32.mrb[0].mxu0
      %v434 = vadd.f32 0.0, %v433
      %v435 = vpop.f32.mrb[0].mxu0
      %v436 = vpop.f32.mrb[0].mxu0
      %v437 = vadd.f32 0.0, %v436
      %v438 = vpop.f32.mrb[0].mxu0
      %439 = vmatprep.mubr.bf16.mxu0 0
      %440 = vmatmul.mubr.bf16.gmra.mrb[0].mxu0 %v314
      %v441 = vpop.f32.mrb[0].mxu0
      %v442 = vadd.f32 0.0, %v441
      %v443 = vpop.f32.mrb[0].mxu0
      %v444 = vpop.f32.mrb[0].mxu0
      %v445 = vadd.f32 0.0, %v444
      %v446 = vpop.f32.mrb[0].mxu0
      %447 = vmatprep.mubr.bf16.mxu0 0
      %448 = vmatmul.mubr.bf16.gmra.mrb[0].mxu0 %v315
      %v449 = vpop.f32.mrb[0].mxu0
      %v450 = vadd.f32 0.0, %v449
      %v451 = vpop.f32.mrb[0].mxu0
      %v452 = vpop.f32.mrb[0].mxu0
      %v453 = vadd.f32 0.0, %v452
      %v454 = vpop.f32.mrb[0].mxu0
      %455 = vmatprep.mubr.bf16.mxu0 0
      %456 = vmatmul.mubr.bf16.gmra.mrb[0].mxu0 %v316
      %v457 = vpop.f32.mrb[0].mxu0
      %v458 = vadd.f32 0.0, %v457
      %v459 = vpop.f32.mrb[0].mxu0
      %v460 = vpop.f32.mrb[0].mxu0
      %v461 = vadd.f32 0.0, %v460
      %v462 = vpop.f32.mrb[0].mxu0
      %463 = vmatprep.mubr.bf16.mxu0 0
      %464 = vmatmul.mubr.bf16.gmra.mrb[0].mxu0 %v317
      %v465 = vpop.f32.mrb[0].mxu0
      %v466 = vadd.f32 0.0, %v465
      %v467 = vpop.f32.mrb[0].mxu0
      %v468 = vpop.f32.mrb[0].mxu0
      %v469 = vadd.f32 0.0, %v468
      %v470 = vpop.f32.mrb[0].mxu0
      %471 = vmatprep.mubr.bf16.mxu0 0
      %472 = vmatmul.mubr.bf16.gmra.mrb[0].mxu0 %v318
      %v473 = vpop.f32.mrb[0].mxu0
      %v474 = vadd.f32 0.0, %v473
      %v475 = vpop.f32.mrb[0].mxu0
      %v476 = vpop.f32.mrb[0].mxu0
      %v477 = vadd.f32 0.0, %v476
      %v478 = vpop.f32.mrb[0].mxu0
      %479 = vmatprep.mubr.bf16.mxu0 0
      %480 = vmatmul.mubr.bf16.gmra.mrb[0].mxu0 %v319
      %v481 = vpop.f32.mrb[0].mxu0
      %v482 = vadd.f32 0.0, %v481
      %v483 = vpop.f32.mrb[0].mxu0
      %v484 = vpop.f32.mrb[0].mxu0
      %v485 = vadd.f32 0.0, %v484
      %v486 = vpop.f32.mrb[0].mxu0
      %487 = vmatprep.mubr.bf16.mxu0 0
      %488 = vmatmul.mubr.bf16.gmra.mrb[0].mxu0 %v320
      %v489 = vpop.f32.mrb[0].mxu0
      %v490 = vadd.f32 0.0, %v489
      %v491 = vpop.f32.mrb[0].mxu0
      %v492 = vpop.f32.mrb[0].mxu0
      %v493 = vadd.f32 0.0, %v492
      %v494 = vpop.f32.mrb[0].mxu0
      %495 = vmatprep.mubr.bf16.mxu0 0
      %496 = vmatmul.mubr.bf16.gmra.mrb[0].mxu0 %v321
      %v497 = vpop.f32.mrb[0].mxu0
      %v498 = vadd.f32 0.0, %v497
      %v499 = vpop.f32.mrb[0].mxu0
      %v500 = vpop.f32.mrb[0].mxu0
      %v501 = vadd.f32 0.0, %v500
      %v502 = vpop.f32.mrb[0].mxu0
      %503 = vmatprep.mubr.bf16.mxu0 0
      %504 = vmatmul.mubr.bf16.gmra.mrb[0].mxu0 %v322
      %v505 = vpop.f32.mrb[0].mxu0
      %v506 = vadd.f32 0.0, %v505
      %v507 = vpop.f32.mrb[0].mxu0
      %v508 = vpop.f32.mrb[0].mxu0
      %v509 = vadd.f32 0.0, %v508
      %v510 = vpop.f32.mrb[0].mxu0
      %511 = vmatprep.mubr.bf16.mxu0 0
      %512 = vmatmul.mubr.bf16.gmra.mrb[0].mxu0 %v323
      %v513 = vpop.f32.mrb[0].mxu0
      %v514 = vadd.f32 0.0, %v513
      %v515 = vpop.f32.mrb[0].mxu0
      %v516 = vpop.f32.mrb[0].mxu0
      %v517 = vadd.f32 0.0, %v516
      %v518 = vpop.f32.mrb[0].mxu0
      %519 = vmatprep.mubr.bf16.mxu0 0
      %520 = vmatmul.mubr.bf16.gmra.mrb[0].mxu0 %v324
      %v521 = vpop.f32.mrb[0].mxu0
      %v522 = vadd.f32 0.0, %v521
      %v523 = vpop.f32.mrb[0].mxu0
      %v524 = vpop.f32.mrb[0].mxu0
      %v525 = vadd.f32 0.0, %v524
      %v526 = vpop.f32.mrb[0].mxu0
      %527 = vmatprep.mubr.bf16.mxu0 0
      %528 = vmatmul.mubr.bf16.gmra.mrb[0].mxu0 %v325
      %v529 = vpop.f32.mrb[0].mxu0
      %v530 = vadd.f32 0.0, %v529
      %v531 = vpop.f32.mrb[0].mxu0
      %v532 = vpop.f32.mrb[0].mxu0
      %v533 = vadd.f32 0.0, %v532
      %v534 = vpop.f32.mrb[0].mxu0
      %535 = vmatprep.mubr.bf16.mxu0 0
      %536 = vmatmul.mubr.bf16.gmra.mrb[0].mxu0 %v326
      %v537 = vpop.f32.mrb[0].mxu0
      %v538 = vadd.f32 0.0, %v537
      %v539 = vpop.f32.mrb[0].mxu0
      %v540 = vpop.f32.mrb[0].mxu0
      %v541 = vadd.f32 0.0, %v540
      %v542 = vpop.f32.mrb[0].mxu0
      %543 = vmatprep.mubr.bf16.mxu0 0
      %544 = vmatmul.mubr.bf16.gmra.mrb[0].mxu0 %v327
      %v545 = vpop.f32.mrb[0].mxu0
      %v546 = vadd.f32 0.0, %v545
      %v547 = vpop.f32.mrb[0].mxu0
      %v548 = vpop.f32.mrb[0].mxu0
      %v549 = vadd.f32 0.0, %v548
      %v550 = vpop.f32.mrb[0].mxu0
      %551 = vmatprep.mubr.bf16.mxu0 0
      %552 = vmatmul.mubr.bf16.gmra.mrb[0].mxu0 %v328
      %v553 = vpop.f32.mrb[0].mxu0
      %v554 = vadd.f32 0.0, %v553
      %v555 = vpop.f32.mrb[0].mxu0
      %v556 = vpop.f32.mrb[0].mxu0
      %v557 = vadd.f32 0.0, %v556
      %v558 = vpop.f32.mrb[0].mxu0
      %559 = vmatprep.mubr.bf16.mxu0 0
      %560 = vmatmul.mubr.bf16.gmra.mrb[0].mxu0 %v329
      %v561 = vpop.f32.mrb[0].mxu0
      %v562 = vadd.f32 0.0, %v561
      %v563 = vpop.f32.mrb[0].mxu0
      %v564 = vpop.f32.mrb[0].mxu0
      %v565 = vadd.f32 0.0, %v564
      %v566 = vpop.f32.mrb[0].mxu0
      %567 = vmatprep.mubr.bf16.mxu0 0
      %568 = vmatmul.mubr.bf16.gmra.mrb[0].mxu0 %v330
      %v569 = vpop.f32.mrb[0].mxu0
      %v570 = vadd.f32 0.0, %v569
      %v571 = vpop.f32.mrb[0].mxu0
      %v572 = vpop.f32.mrb[0].mxu0
      %v573 = vadd.f32 0.0, %v572
      %v574 = vpop.f32.mrb[0].mxu0
      %575 = vmatprep.mubr.bf16.mxu0 0
      %576 = vmatmul.mubr.bf16.gmra.mrb[0].mxu0 %v331
      %v577 = vpop.f32.mrb[0].mxu0
      %v578 = vadd.f32 0.0, %v577
      %v579 = vpop.f32.mrb[0].mxu0
      %v580 = vpop.f32.mrb[0].mxu0
      %v581 = vpop.f32.mrb[0].mxu0
      %582 = vdwg.mxu0
      %v583 = vadd.f32 %v434, %v437
      %v584 = vadd.f32 %v583, %v442
      %v585 = vadd.f32 %v584, %v445
      %v586 = vadd.f32 %v585, %v450
      %v587 = vadd.f32 %v586, %v453
      %v588 = vadd.f32 %v587, %v458
      %v589 = vadd.f32 %v588, %v461
      %v590 = vadd.f32 %v589, %v466
      %v591 = vadd.f32 %v590, %v469
      %v592 = vadd.f32 %v591, %v474
      %v593 = vadd.f32 %v592, %v477
      %v594 = vadd.f32 %v593, %v482
      %v595 = vadd.f32 %v594, %v485
      %v596 = vadd.f32 %v595, %v490
      %v597 = vadd.f32 %v596, %v493
      %v598 = vadd.f32 %v597, %v498
      %v599 = vadd.f32 %v598, %v501
      %v600 = vadd.f32 %v599, %v506
      %v601 = vadd.f32 %v600, %v509
      %v602 = vadd.f32 %v601, %v514
      %v603 = vadd.f32 %v602, %v517
      %v604 = vadd.f32 %v603, %v522
      %v605 = vadd.f32 %v604, %v525
      %v606 = vadd.f32 %v605, %v530
      %v607 = vadd.f32 %v606, %v533
      %v608 = vadd.f32 %v607, %v538
      %v609 = vadd.f32 %v608, %v541
      %v610 = vadd.f32 %v609, %v546
      %v611 = vadd.f32 %v610, %v549
      %v612 = vadd.f32 %v611, %v554
      %v613 = vadd.f32 %v612, %v557
      %v614 = vadd.f32 %v613, %v562
      %v615 = vadd.f32 %v614, %v565
      %v616 = vadd.f32 %v615, %v570
      %v617 = vadd.f32 %v616, %v573
      %v618 = vadd.f32 %v617, %v578
      %v619 = vrot.slane %v618, 4
      %v620 = vadd.f32 %v618, %v619
      %v621 = vrot.slane %v620, 2
      %v622 = vadd.f32 %v620, %v621
      %v623 = vrot.slane %v622, 1
      %v624 = vadd.f32 %v622, %v623
      %625 = vst [vmem:[%s184] sm:$0x1] %v624
      %v626 = vmul.f32 %v434, %v434
      %v627 = vmul.f32 %v437, %v437
      %v628 = vmul.f32 %v442, %v442
      %v629 = vmul.f32 %v445, %v445
      %v630 = vmul.f32 %v450, %v450
      %v631 = vmul.f32 %v453, %v453
      %v632 = vmul.f32 %v458, %v458
      %v633 = vmul.f32 %v461, %v461
      %v634 = vmul.f32 %v466, %v466
      %v635 = vmul.f32 %v469, %v469
      %v636 = vmul.f32 %v474, %v474
      %v637 = vmul.f32 %v477, %v477
      %v638 = vmul.f32 %v482, %v482
      %v639 = vmul.f32 %v485, %v485
      %v640 = vmul.f32 %v490, %v490
      %v641 = vmul.f32 %v493, %v493
      %v642 = vmul.f32 %v498, %v498
      %v643 = vmul.f32 %v501, %v501
      %v644 = vmul.f32 %v506, %v506
      %v645 = vmul.f32 %v509, %v509
      %v646 = vmul.f32 %v514, %v514
      %v647 = vmul.f32 %v517, %v517
      %v648 = vmul.f32 %v522, %v522
      %v649 = vmul.f32 %v525, %v525
      %v650 = vmul.f32 %v530, %v530
      %v651 = vmul.f32 %v533, %v533
      %v652 = vmul.f32 %v538, %v538
      %v653 = vmul.f32 %v541, %v541
      %v654 = vmul.f32 %v546, %v546
      %v655 = vmul.f32 %v549, %v549
      %v656 = vmul.f32 %v554, %v554
      %v657 = vmul.f32 %v557, %v557
      %v658 = vmul.f32 %v562, %v562
      %v659 = vmul.f32 %v565, %v565
      %v660 = vmul.f32 %v570, %v570
      %v661 = vmul.f32 %v573, %v573
      %v662 = vmul.f32 %v578, %v578
      %v663 = vadd.f32 %v626, %v627
      %v664 = vadd.f32 %v663, %v628
      %v665 = vadd.f32 %v664, %v629
      %v666 = vadd.f32 %v665, %v630
      %v667 = vadd.f32 %v666, %v631
      %v668 = vadd.f32 %v667, %v632
      %v669 = vadd.f32 %v668, %v633
      %v670 = vadd.f32 %v669, %v634
      %v671 = vadd.f32 %v670, %v635
      %v672 = vadd.f32 %v671, %v636
      %v673 = vadd.f32 %v672, %v637
      %v674 = vadd.f32 %v673, %v638
      %v675 = vadd.f32 %v674, %v639
      %v676 = vadd.f32 %v675, %v640
      %v677 = vadd.f32 %v676, %v641
      %v678 = vadd.f32 %v677, %v642
      %v679 = vadd.f32 %v678, %v643
      %v680 = vadd.f32 %v679, %v644
      %v681 = vadd.f32 %v680, %v645
      %v682 = vadd.f32 %v681, %v646
      %v683 = vadd.f32 %v682, %v647
      %v684 = vadd.f32 %v683, %v648
      %v685 = vadd.f32 %v684, %v649
      %v686 = vadd.f32 %v685, %v650
      %v687 = vadd.f32 %v686, %v651
      %v688 = vadd.f32 %v687, %v652
      %v689 = vadd.f32 %v688, %v653
      %v690 = vadd.f32 %v689, %v654
      %v691 = vadd.f32 %v690, %v655
      %v692 = vadd.f32 %v691, %v656
      %v693 = vadd.f32 %v692, %v657
      %v694 = vadd.f32 %v693, %v658
      %v695 = vadd.f32 %v694, %v659
      %v696 = vadd.f32 %v695, %v660
      %v697 = vadd.f32 %v696, %v661
      %v698 = vadd.f32 %v697, %v662
      %v699 = vrot.slane %v698, 4
      %v700 = vadd.f32 %v698, %v699
      %v701 = vrot.slane %v700, 2
      %v702 = vadd.f32 %v700, %v701
      %v703 = vrot.slane %v702, 1
      %v704 = vadd.f32 %v702, %v703
      %705 = vst [vmem:[%s184 + $0x1] sm:$0x1] %v704
      %v706 = vpack.c.bf16 %v437, %v434
      %v707 = vpack.c.bf16 %v445, %v442
      %v708 = vpack.c.bf16 %v453, %v450
      %v709 = vpack.c.bf16 %v461, %v458
      %v710 = vpack.c.bf16 %v469, %v466
      %v711 = vpack.c.bf16 %v477, %v474
      %v712 = vpack.c.bf16 %v485, %v482
      %v713 = vpack.c.bf16 %v493, %v490
      %v714 = vpack.c.bf16 %v501, %v498
      %v715 = vpack.c.bf16 %v509, %v506
      %v716 = vpack.c.bf16 %v517, %v514
      %v717 = vpack.c.bf16 %v525, %v522
      %v718 = vpack.c.bf16 %v533, %v530
      %v719 = vpack.c.bf16 %v541, %v538
      %v720 = vpack.c.bf16 %v549, %v546
      %v721 = vpack.c.bf16 %v557, %v554
      %v722 = vpack.c.bf16 %v565, %v562
      %v723 = vpack.c.bf16 %v573, %v570
      %v724 = vpack.c.bf16 %v578, %v578
      %v744 = vunpack.c.l.b16 %v706
      %v745 = vunpack.c.h.b16 %v706
      %v746 = vunpack.c.l.b16 %v707
      %v747 = vunpack.c.h.b16 %v707
      %v748 = vunpack.c.l.b16 %v708
      %v749 = vunpack.c.h.b16 %v708
      %v750 = vunpack.c.l.b16 %v709
      %v751 = vunpack.c.h.b16 %v709
      %v752 = vunpack.c.l.b16 %v710
      %v753 = vunpack.c.h.b16 %v710
      %v754 = vunpack.c.l.b16 %v711
      %v755 = vunpack.c.h.b16 %v711
      %v756 = vunpack.c.l.b16 %v712
      %v757 = vunpack.c.h.b16 %v712
      %v758 = vunpack.c.l.b16 %v713
      %v759 = vunpack.c.h.b16 %v713
      %v760 = vunpack.c.l.b16 %v714
      %v761 = vunpack.c.h.b16 %v714
      %v762 = vunpack.c.l.b16 %v715
      %v763 = vunpack.c.h.b16 %v715
      %v764 = vunpack.c.l.b16 %v716
      %v765 = vunpack.c.h.b16 %v716
      %v766 = vunpack.c.l.b16 %v717
      %v767 = vunpack.c.h.b16 %v717
      %v768 = vunpack.c.l.b16 %v718
      %v769 = vunpack.c.h.b16 %v718
      %v770 = vunpack.c.l.b16 %v719
      %v771 = vunpack.c.h.b16 %v719
      %v772 = vunpack.c.l.b16 %v720
      %v773 = vunpack.c.h.b16 %v720
      %v774 = vunpack.c.l.b16 %v721
      %v775 = vunpack.c.h.b16 %v721
      %v776 = vunpack.c.l.b16 %v722
      %v777 = vunpack.c.h.b16 %v722
      %v778 = vunpack.c.l.b16 %v723
      %v779 = vunpack.c.h.b16 %v723
      %v780 = vunpack.c.l.b16 %v724
      %v781 = vpack.c.b16 %v744, %v744
      %v782 = vpack.c.b16 %v745, %v745
      %v783 = vpack.c.b16 %v746, %v746
      %v784 = vpack.c.b16 %v747, %v747
      %v785 = vpack.c.b16 %v748, %v748
      %v786 = vpack.c.b16 %v749, %v749
      %v787 = vpack.c.b16 %v750, %v750
      %v788 = vpack.c.b16 %v751, %v751
      %v789 = vpack.c.b16 %v752, %v752
      %v790 = vpack.c.b16 %v753, %v753
      %v791 = vpack.c.b16 %v754, %v754
      %v792 = vpack.c.b16 %v755, %v755
      %v793 = vpack.c.b16 %v756, %v756
      %v794 = vpack.c.b16 %v757, %v757
      %v795 = vpack.c.b16 %v758, %v758
      %v796 = vpack.c.b16 %v759, %v759
      %v797 = vpack.c.b16 %v760, %v760
      %v798 = vpack.c.b16 %v761, %v761
      %v799 = vpack.c.b16 %v762, %v762
      %v800 = vpack.c.b16 %v763, %v763
      %v801 = vpack.c.b16 %v764, %v764
      %v802 = vpack.c.b16 %v765, %v765
      %v803 = vpack.c.b16 %v766, %v766
      %v804 = vpack.c.b16 %v767, %v767
      %v805 = vpack.c.b16 %v768, %v768
      %v806 = vpack.c.b16 %v769, %v769
      %v807 = vpack.c.b16 %v770, %v770
      %v808 = vpack.c.b16 %v771, %v771
      %v809 = vpack.c.b16 %v772, %v772
      %v810 = vpack.c.b16 %v773, %v773
      %v811 = vpack.c.b16 %v774, %v774
      %v812 = vpack.c.b16 %v775, %v775
      %v813 = vpack.c.b16 %v776, %v776
      %v814 = vpack.c.b16 %v777, %v777
      %v815 = vpack.c.b16 %v778, %v778
      %v816 = vpack.c.b16 %v779, %v779
      %v817 = vpack.c.b16 %v780, %v780
      %855 = vst [vmem:[%s179] sm:$0xf] %v781
      %856 = vst [vmem:[%s179 + $0x4] sm:$0xf] %v782
      %857 = vst [vmem:[%s179 + $0x8] sm:$0xf] %v783
      %858 = vst [vmem:[%s179 + $0xc] sm:$0xf] %v784
      %859 = vst [vmem:[%s179 + $0x10] sm:$0xf] %v785
      %860 = vst [vmem:[%s179 + $0x14] sm:$0xf] %v786
      %861 = vst [vmem:[%s179 + $0x18] sm:$0xf] %v787
      %862 = vst [vmem:[%s179 + $0x1c] sm:$0xf] %v788
      %863 = vst [vmem:[%s179 + $0x20] sm:$0xf] %v789
      %864 = vst [vmem:[%s179 + $0x24] sm:$0xf] %v790
      %865 = vst [vmem:[%s179 + $0x28] sm:$0xf] %v791
      %866 = vst [vmem:[%s179 + $0x2c] sm:$0xf] %v792
      %867 = vst [vmem:[%s179 + $0x30] sm:$0xf] %v793
      %868 = vst [vmem:[%s179 + $0x34] sm:$0xf] %v794
      %869 = vst [vmem:[%s179 + $0x38] sm:$0xf] %v795
      %870 = vst [vmem:[%s179 + $0x3c] sm:$0xf] %v796
      %871 = vst [vmem:[%s179 + $0x40] sm:$0xf] %v797
      %872 = vst [vmem:[%s179 + $0x44] sm:$0xf] %v798
      %873 = vst [vmem:[%s179 + $0x48] sm:$0xf] %v799
      %874 = vst [vmem:[%s179 + $0x4c] sm:$0xf] %v800
      %875 = vst [vmem:[%s179 + $0x50] sm:$0xf] %v801
      %876 = vst [vmem:[%s179 + $0x54] sm:$0xf] %v802
      %877 = vst [vmem:[%s179 + $0x58] sm:$0xf] %v803
      %878 = vst [vmem:[%s179 + $0x5c] sm:$0xf] %v804
      %879 = vst [vmem:[%s179 + $0x60] sm:$0xf] %v805
      %880 = vst [vmem:[%s179 + $0x64] sm:$0xf] %v806
      %881 = vst [vmem:[%s179 + $0x68] sm:$0xf] %v807
      %882 = vst [vmem:[%s179 + $0x6c] sm:$0xf] %v808
      %883 = vst [vmem:[%s179 + $0x70] sm:$0xf] %v809
      %884 = vst [vmem:[%s179 + $0x74] sm:$0xf] %v810
      %885 = vst [vmem:[%s179 + $0x78] sm:$0xf] %v811
      %886 = vst [vmem:[%s179 + $0x7c] sm:$0xf] %v812
      %887 = vst [vmem:[%s179 + $0x80] sm:$0xf] %v813
      %888 = vst [vmem:[%s179 + $0x84] sm:$0xf] %v814
      %889 = vst [vmem:[%s179 + $0x88] sm:$0xf] %v815
      %890 = vst [vmem:[%s179 + $0x8c] sm:$0xf] %v816
      %891 = vst [vmem:[%s179 + $0x90] sm:$0xf] %v817
      %s892 = smul.u32 37, %s15
      %p893 = scmp.lt.s32.totalorder %s892, 73
      %s894 = scalar_select %p893, %s892, 73
      %s895 = smul.addr %s894, 4
      %s896 = scalar_lea.vmem %s2, %s895
      %p897 = scmp.lt.s32.totalorder %s15, 1
      %s898 = scalar_select %p897, %s15, 1
      %s899 = smul.addr %s898, 8
      %s900 = scalar_lea.vmem %s3, %s899
      // Predicated region
      $region29: #{_lambda_.15} parent=27 // pred_check
        %p901 = pneg %p80
      $region30: #{_lambda_.15} parent=27 // pred_check_branch
        %903 = sbr.rel (%p901) target = $region32
      $region31: #{_lambda_.15} parent=27 // pred_region
        %s904 = smul.u32 37, %s15
      $region32: #{_lambda_.15} parent=27 // pred_fallthru
        _
      // Predicated region
      $region33: #{_lambda_.15} parent=27 // pred_check
        %p905 = pneg %p106
      $region34: #{_lambda_.15} parent=27 // pred_check_branch
        %907 = sbr.rel (%p905) target = $region36
      $region35: #{_lambda_.15} parent=27 // pred_region
        _
      $region36: #{_lambda_.15} parent=27 // pred_fallthru
        _
    $region28: #{_lambda_.15} parent=5 // pred_fallthru
      _
    %p908 = scmp.le.s32.totalorder 2, %s10
    // Predicated region
    $region37: #{_lambda_.15} parent=5 // pred_check
      %p909 = pneg %p908
    $region38: #{_lambda_.15} parent=5 // pred_check_branch
      %911 = sbr.rel (%p909) target = $region40
    $region39: #{_lambda_.15} parent=5 // pred_region
      %s912 = ssub.s32 %s10, 2
      // Predicated region
      $region41: #{_lambda_.15} parent=39 // pred_check
        %p913 = pneg %p86
      $region42: #{_lambda_.15} parent=39 // pred_check_branch
        %915 = sbr.rel (%p913) target = $region44
      $region43: #{_lambda_.15} parent=39 // pred_region
        %s916 = smul.u32 37, %s16
        %p917 = scmp.lt.s32.totalorder %s916, 73
        %s918 = scalar_select %p917, %s916, 73
        %s919 = smul.addr %s918, 4
        %s920 = scalar_lea.vmem %s2, %s919
      $region44: #{_lambda_.15} parent=39 // pred_fallthru
        _
      // Predicated region
      $region45: #{_lambda_.15} parent=39 // pred_check
        %p921 = pneg %p112
      $region46: #{_lambda_.15} parent=39 // pred_check_branch
        %923 = sbr.rel (%p921) target = $region48
      $region47: #{_lambda_.15} parent=39 // pred_region
        %p924 = scmp.lt.s32.totalorder %s16, 1
        %s925 = scalar_select %p924, %s16, 1
        %s926 = smul.addr %s925, 8
        %s927 = scalar_lea.vmem %s3, %s926
      $region48: #{_lambda_.15} parent=39 // pred_fallthru
        _
    $region40: #{_lambda_.15} parent=5 // pred_fallthru
      _
  $region6: #{_lambda_.15} parent=0 // loop_footer
    %s14 = sadd.s32 1, %s10
  $region7: #{_lambda_.15} parent=0 // loop_footer_branch
    %9 = sbr.rel target = $region3
  $region8: #{_lambda_.15} parent=0 // loop_exit
    _

// kernel: _lambda_.16
$region0: #{_lambda_.16}
  #allocation0 [shape = 'u32[]', space=smem, size = 0x4, offset = 0x4, fixed_abs, tag = 'smem constant byte address 0x4 - core index']
  #allocation1 [shape = 'u32[144,128]{1,0:T(1,128)}', space=vmem, size = 0x12000, scoped, tag = 'internal scratch']
  %s0 = inlined_call_operand.vmem [shape: bf16[592,128], index: 0, kind: input, shape index: {}]
  %s1 = inlined_call_operand.vmem [shape: f32[1,128], index: 1, kind: input, shape index: {}]
  %s2 = inlined_call_operand.vmem [shape: f32[1,128], index: 2, kind: input, shape index: {}]
  %s3 = inlined_call_operand.vmem [shape: bf16[592,128], index: 3, kind: output, shape index: {}]
  %s4 = sld [smem:[#allocation0]]
  $region45: #{_lambda_.16} parent=0
    _
  %s6 = ssub.s32 1, %s4
  %s7 = scalar_select 0, %s6, %s4
  loop: start=0, step=1, limit=4
  $region2: #{_lambda_.16} parent=0 // loop_pre_header
    _
  $region3: #{_lambda_.16} parent=0 // loop_header
    %s9 = sphi 0, %s13
    %p10 = scmp.ge.s32.totalorder %s9, 4
    %s19 = sphi 0, %s21
    %s22 = sphi 0, %s19
    %s23 = sphi 0, %s22
    %s39 = sphi 0, %s23
    %s43 = sphi 0, %s43
    %s45 = sphi 0, %s43
    %s46 = sphi 0, %s45
    %s60 = sphi 0, %s46
    %s64 = sphi 0, %s64
    %s66 = sphi 0, %s64
    %s67 = sphi 0, %s66
    %s81 = sphi 0, %s67
    %s87 = sphi 0, %s89
    %s90 = sphi 0, %s87
    %s91 = sphi 0, %s90
    %s107 = sphi 0, %s91
  $region4: #{_lambda_.16} parent=0 // loop_header_branch
    %12 = sbr.rel (%p10) target = $region8
  $region5: #{_lambda_.16} parent=0 // loop_body
    %s14 = ssub.s32 %s9, 1
    %s15 = ssub.s32 %s9, 2
    %s16 = sadd.s32 %s9, 1
    %s17 = ssub.s32 %s9, %s16
    %p18 = scmp.eq.s32.totalorder %s17, 0
    %s20 = sadd.s32 %s19, 1
    %s21 = scalar_select %p18, %s19, %s20
    %p24 = pneg %p18
    %p25 = scmp.eq.s32.totalorder %s9, 1
    %p26 = por %p24, %p25
    %p27 = scmp.ne.s32.totalorder %s19, %s22
    %p28 = scmp.eq.s32.totalorder %s9, 0
    %p29 = por %p27, %p28
    %p30 = scmp.ne.s32.totalorder %s19, %s22
    %p31 = scmp.eq.s32.totalorder %s14, 1
    %p32 = por %p30, %p31
    %p33 = scmp.ne.s32.totalorder %s22, %s23
    %p34 = scmp.eq.s32.totalorder %s14, 0
    %p35 = por %p33, %p34
    %p36 = scmp.ne.s32.totalorder %s22, %s23
    %p37 = scmp.eq.s32.totalorder %s15, 1
    %p38 = por %p36, %p37
    %p40 = scmp.ne.s32.totalorder %s23, %s39
    %p41 = scmp.eq.s32.totalorder %s15, 0
    %p42 = por %p40, %p41
    %s44 = sadd.s32 %s43, 1
    %p47 = scmp.eq.s32.totalorder %s9, 1
    %p48 = scmp.ne.s32.totalorder %s43, %s45
    %p49 = scmp.eq.s32.totalorder %s9, 0
    %p50 = por %p48, %p49
    %p51 = scmp.ne.s32.totalorder %s43, %s45
    %p52 = scmp.eq.s32.totalorder %s14, 1
    %p53 = por %p51, %p52
    %p54 = scmp.ne.s32.totalorder %s45, %s46
    %p55 = scmp.eq.s32.totalorder %s14, 0
    %p56 = por %p54, %p55
    %p57 = scmp.ne.s32.totalorder %s45, %s46
    %p58 = scmp.eq.s32.totalorder %s15, 1
    %p59 = por %p57, %p58
    %p61 = scmp.ne.s32.totalorder %s46, %s60
    %p62 = scmp.eq.s32.totalorder %s15, 0
    %p63 = por %p61, %p62
    %s65 = sadd.s32 %s64, 1
    %p68 = scmp.eq.s32.totalorder %s9, 1
    %p69 = scmp.ne.s32.totalorder %s64, %s66
    %p70 = scmp.eq.s32.totalorder %s9, 0
    %p71 = por %p69, %p70
    %p72 = scmp.ne.s32.totalorder %s64, %s66
    %p73 = scmp.eq.s32.totalorder %s14, 1
    %p74 = por %p72, %p73
    %p75 = scmp.ne.s32.totalorder %s66, %s67
    %p76 = scmp.eq.s32.totalorder %s14, 0
    %p77 = por %p75, %p76
    %p78 = scmp.ne.s32.totalorder %s66, %s67
    %p79 = scmp.eq.s32.totalorder %s15, 1
    %p80 = por %p78, %p79
    %p82 = scmp.ne.s32.totalorder %s67, %s81
    %p83 = scmp.eq.s32.totalorder %s15, 0
    %p84 = por %p82, %p83
    %s85 = ssub.s32 %s9, %s16
    %p86 = scmp.eq.s32.totalorder %s85, 0
    %s88 = sadd.s32 %s87, 1
    %s89 = scalar_select %p86, %s87, %s88
    %p92 = pneg %p86
    %p93 = scmp.eq.s32.totalorder %s9, 1
    %p94 = por %p92, %p93
    %p95 = scmp.ne.s32.totalorder %s87, %s90
    %p96 = scmp.eq.s32.totalorder %s9, 0
    %p97 = por %p95, %p96
    %p98 = scmp.ne.s32.totalorder %s87, %s90
    %p99 = scmp.eq.s32.totalorder %s14, 1
    %p100 = por %p98, %p99
    %p101 = scmp.ne.s32.totalorder %s90, %s91
    %p102 = scmp.eq.s32.totalorder %s14, 0
    %p103 = por %p101, %p102
    %p104 = scmp.ne.s32.totalorder %s90, %s91
    %p105 = scmp.eq.s32.totalorder %s15, 1
    %p106 = por %p104, %p105
    %p108 = scmp.ne.s32.totalorder %s91, %s107
    %p109 = scmp.eq.s32.totalorder %s15, 0
    %p110 = por %p108, %p109
    %p111 = scmp.le.s32.totalorder 1, %s9
    %p112 = scmp.lt.s32.totalorder %s9, 3
    %p113 = pnand %p111, %p112
    %p114 = pneg %p113
    // Predicated region
    $region9: #{_lambda_.16} parent=5 // pred_check
      _
    $region10: #{_lambda_.16} parent=5 // pred_check_branch
      %116 = sbr.rel (%p113) target = $region12
    $region11: #{_lambda_.16} parent=5 // pred_region
      %s117 = ssub.s32 %s9, 1
      // Predicated region
      $region13: #{_lambda_.16} parent=11 // pred_check
        %p118 = pneg %p56
      $region14: #{_lambda_.16} parent=11 // pred_check_branch
        %120 = sbr.rel (%p118) target = $region16
      $region15: #{_lambda_.16} parent=11 // pred_region
        _
      $region16: #{_lambda_.16} parent=11 // pred_fallthru
        _
      // Predicated region
      $region17: #{_lambda_.16} parent=11 // pred_check
        %p121 = pneg %p77
      $region18: #{_lambda_.16} parent=11 // pred_check_branch
        %123 = sbr.rel (%p121) target = $region20
      $region19: #{_lambda_.16} parent=11 // pred_region
        _
      $region20: #{_lambda_.16} parent=11 // pred_fallthru
        _
    $region12: #{_lambda_.16} parent=5 // pred_fallthru
      _
    %p124 = scmp.lt.s32.totalorder %s9, 2
    // Predicated region
    $region21: #{_lambda_.16} parent=5 // pred_check
      %p125 = pneg %p124
    $region22: #{_lambda_.16} parent=5 // pred_check_branch
      %127 = sbr.rel (%p125) target = $region24
    $region23: #{_lambda_.16} parent=5 // pred_region
      // Predicated region
      $region25: #{_lambda_.16} parent=23 // pred_check
        %p128 = pneg %p29
      $region26: #{_lambda_.16} parent=23 // pred_check_branch
        %130 = sbr.rel (%p128) target = $region28
      $region27: #{_lambda_.16} parent=23 // pred_region
        %s131 = smul.u32 37, %s9
        %p132 = scmp.lt.s32.totalorder %s131, 73
        %s133 = scalar_select %p132, %s131, 73
        %s134 = smul.addr %s133, 4
        %s135 = scalar_lea.vmem %s0, %s134
        %s136 = smul.u32 37, %s9
      $region28: #{_lambda_.16} parent=23 // pred_fallthru
        _
    $region24: #{_lambda_.16} parent=5 // pred_fallthru
      _
    %p137 = scmp.le.s32.totalorder 1, %s9
    %p138 = scmp.lt.s32.totalorder %s9, 3
    %p139 = pnand %p137, %p138
    %p140 = pneg %p139
    // Predicated region
    $region29: #{_lambda_.16} parent=5 // pred_check
      _
    $region30: #{_lambda_.16} parent=5 // pred_check_branch
      %142 = sbr.rel (%p139) target = $region32
    $region31: #{_lambda_.16} parent=5 // pred_region
      %s143 = ssub.s32 %s9, 1
      %s144 = smul.u32 37, %s14
      %p145 = scmp.lt.s32.totalorder %s144, 73
      %s146 = scalar_select %p145, %s144, 73
      %s147 = smul.addr %s146, 4
      %s148 = scalar_lea.vmem %s0, %s147
      %p149 = pneg %p35
      %p150 = pneg %p32
      %p151 = pneg %p56
      %p152 = pneg %p53
      %p153 = pneg %p77
      %p154 = pneg %p74
      %p155 = pneg %p103
      %p156 = pneg %p100
      %s157 = smul.u32 37, %s14
      %p158 = scmp.lt.s32.totalorder %s157, 73
      %s159 = scalar_select %p158, %s157, 73
      %s160 = smul.addr %s159, 4
      %s161 = scalar_lea.vmem %s3, %s160
      %s162 = smul.u32 37, %s14
      %p163 = scmp.lt.s32.totalorder %s162, 73
      %s164 = scalar_select %p163, %s162, 73
      %s165 = smul.addr %s164, 4
      %s166 = scalar_lea.vmem %s0, %s165
      %s167 = smul.u32 37, %s14
      %s168 = smul.u32 37, %s14
      %p169 = scmp.lt.s32.totalorder %s168, 73
      %s170 = scalar_select %p169, %s168, 73
      %s171 = smul.addr %s170, 4
      %s172 = scalar_lea.vmem %s3, %s171
      %s173 = smul.u32 37, %s14
      %v174 = vld [vmem:[%s166] sm:$0xf]
      %v175 = vld [vmem:[%s166 + $0x4] sm:$0xf]
      %v176 = vld [vmem:[%s166 + $0x8] sm:$0xf]
      %v177 = vld [vmem:[%s166 + $0xc] sm:$0xf]
      %v178 = vld [vmem:[%s166 + $0x10] sm:$0xf]
      %v179 = vld [vmem:[%s166 + $0x14] sm:$0xf]
      %v180 = vld [vmem:[%s166 + $0x18] sm:$0xf]
      %v181 = vld [vmem:[%s166 + $0x1c] sm:$0xf]
      %v182 = vld [vmem:[%s166 + $0x20] sm:$0xf]
      %v183 = vld [vmem:[%s166 + $0x24] sm:$0xf]
      %v184 = vld [vmem:[%s166 + $0x28] sm:$0xf]
      %v185 = vld [vmem:[%s166 + $0x2c] sm:$0xf]
      %v186 = vld [vmem:[%s166 + $0x30] sm:$0xf]
      %v187 = vld [vmem:[%s166 + $0x34] sm:$0xf]
      %v188 = vld [vmem:[%s166 + $0x38] sm:$0xf]
      %v189 = vld [vmem:[%s166 + $0x3c] sm:$0xf]
      %v190 = vld [vmem:[%s166 + $0x40] sm:$0xf]
      %v191 = vld [vmem:[%s166 + $0x44] sm:$0xf]
      %v192 = vld [vmem:[%s166 + $0x48] sm:$0xf]
      %v193 = vld [vmem:[%s166 + $0x4c] sm:$0xf]
      %v194 = vld [vmem:[%s166 + $0x50] sm:$0xf]
      %v195 = vld [vmem:[%s166 + $0x54] sm:$0xf]
      %v196 = vld [vmem:[%s166 + $0x58] sm:$0xf]
      %v197 = vld [vmem:[%s166 + $0x5c] sm:$0xf]
      %v198 = vld [vmem:[%s166 + $0x60] sm:$0xf]
      %v199 = vld [vmem:[%s166 + $0x64] sm:$0xf]
      %v200 = vld [vmem:[%s166 + $0x68] sm:$0xf]
      %v201 = vld [vmem:[%s166 + $0x6c] sm:$0xf]
      %v202 = vld [vmem:[%s166 + $0x70] sm:$0xf]
      %v203 = vld [vmem:[%s166 + $0x74] sm:$0xf]
      %v204 = vld [vmem:[%s166 + $0x78] sm:$0xf]
      %v205 = vld [vmem:[%s166 + $0x7c] sm:$0xf]
      %v206 = vld [vmem:[%s166 + $0x80] sm:$0xf]
      %v207 = vld [vmem:[%s166 + $0x84] sm:$0xf]
      %v208 = vld [vmem:[%s166 + $0x88] sm:$0xf]
      %v209 = vld [vmem:[%s166 + $0x8c] sm:$0xf]
      %v210 = vld [vmem:[%s166 + $0x90] sm:$0xf]
      %v211 = vunpack.c.l.bf16 %v174
      %v212 = vunpack.c.l.bf16 %v175
      %v213 = vunpack.c.l.bf16 %v176
      %v214 = vunpack.c.l.bf16 %v177
      %v215 = vunpack.c.l.bf16 %v178
      %v216 = vunpack.c.l.bf16 %v179
      %v217 = vunpack.c.l.bf16 %v180
      %v218 = vunpack.c.l.bf16 %v181
      %v219 = vunpack.c.l.bf16 %v182
      %v220 = vunpack.c.l.bf16 %v183
      %v221 = vunpack.c.l.bf16 %v184
      %v222 = vunpack.c.l.bf16 %v185
      %v223 = vunpack.c.l.bf16 %v186
      %v224 = vunpack.c.l.bf16 %v187
      %v225 = vunpack.c.l.bf16 %v188
      %v226 = vunpack.c.l.bf16 %v189
      %v227 = vunpack.c.l.bf16 %v190
      %v228 = vunpack.c.l.bf16 %v191
      %v229 = vunpack.c.l.bf16 %v192
      %v230 = vunpack.c.l.bf16 %v193
      %v231 = vunpack.c.l.bf16 %v194
      %v232 = vunpack.c.l.bf16 %v195
      %v233 = vunpack.c.l.bf16 %v196
      %v234 = vunpack.c.l.bf16 %v197
      %v235 = vunpack.c.l.bf16 %v198
      %v236 = vunpack.c.l.bf16 %v199
      %v237 = vunpack.c.l.bf16 %v200
      %v238 = vunpack.c.l.bf16 %v201
      %v239 = vunpack.c.l.bf16 %v202
      %v240 = vunpack.c.l.bf16 %v203
      %v241 = vunpack.c.l.bf16 %v204
      %v242 = vunpack.c.l.bf16 %v205
      %v243 = vunpack.c.l.bf16 %v206
      %v244 = vunpack.c.l.bf16 %v207
      %v245 = vunpack.c.l.bf16 %v208
      %v246 = vunpack.c.l.bf16 %v209
      %v247 = vunpack.c.l.bf16 %v210
      %v248 = vld [vmem:[%s1] sm:$0x1]
      %v250 = vlaneseq
      %v251 = vshrl.u32 %v250, 7
      %v252 = vsub.s32 0, %v251
      %v253 = vrot.slane %v248, %v252
      %v255 = vmul.f32 %v211, %v253
      %v256 = vmul.f32 %v212, %v253
      %v257 = vmul.f32 %v213, %v253
      %v258 = vmul.f32 %v214, %v253
      %v259 = vmul.f32 %v215, %v253
      %v260 = vmul.f32 %v216, %v253
      %v261 = vmul.f32 %v217, %v253
      %v262 = vmul.f32 %v218, %v253
      %v263 = vmul.f32 %v219, %v253
      %v264 = vmul.f32 %v220, %v253
      %v265 = vmul.f32 %v221, %v253
      %v266 = vmul.f32 %v222, %v253
      %v267 = vmul.f32 %v223, %v253
      %v268 = vmul.f32 %v224, %v253
      %v269 = vmul.f32 %v225, %v253
      %v270 = vmul.f32 %v226, %v253
      %v271 = vmul.f32 %v227, %v253
      %v272 = vmul.f32 %v228, %v253
      %v273 = vmul.f32 %v229, %v253
      %v274 = vmul.f32 %v230, %v253
      %v275 = vmul.f32 %v231, %v253
      %v276 = vmul.f32 %v232, %v253
      %v277 = vmul.f32 %v233, %v253
      %v278 = vmul.f32 %v234, %v253
      %v279 = vmul.f32 %v235, %v253
      %v280 = vmul.f32 %v236, %v253
      %v281 = vmul.f32 %v237, %v253
      %v282 = vmul.f32 %v238, %v253
      %v283 = vmul.f32 %v239, %v253
      %v284 = vmul.f32 %v240, %v253
      %v285 = vmul.f32 %v241, %v253
      %v286 = vmul.f32 %v242, %v253
      %v287 = vmul.f32 %v243, %v253
      %v288 = vmul.f32 %v244, %v253
      %v289 = vmul.f32 %v245, %v253
      %v290 = vmul.f32 %v246, %v253
      %v291 = vmul.f32 %v247, %v253
      %v292 = vld [vmem:[%s2] sm:$0x1]
      %v294 = vlaneseq
      %v295 = vshrl.u32 %v294, 7
      %v296 = vsub.s32 0, %v295
      %v297 = vrot.slane %v292, %v296
      %v299 = vadd.f32 %v255, %v297
      %v300 = vadd.f32 %v256, %v297
      %v301 = vadd.f32 %v257, %v297
      %v302 = vadd.f32 %v258, %v297
      %v303 = vadd.f32 %v259, %v297
      %v304 = vadd.f32 %v260, %v297
      %v305 = vadd.f32 %v261, %v297
      %v306 = vadd.f32 %v262, %v297
      %v307 = vadd.f32 %v263, %v297
      %v308 = vadd.f32 %v264, %v297
      %v309 = vadd.f32 %v265, %v297
      %v310 = vadd.f32 %v266, %v297
      %v311 = vadd.f32 %v267, %v297
      %v312 = vadd.f32 %v268, %v297
      %v313 = vadd.f32 %v269, %v297
      %v314 = vadd.f32 %v270, %v297
      %v315 = vadd.f32 %v271, %v297
      %v316 = vadd.f32 %v272, %v297
      %v317 = vadd.f32 %v273, %v297
      %v318 = vadd.f32 %v274, %v297
      %v319 = vadd.f32 %v275, %v297
      %v320 = vadd.f32 %v276, %v297
      %v321 = vadd.f32 %v277, %v297
      %v322 = vadd.f32 %v278, %v297
      %v323 = vadd.f32 %v279, %v297
      %v324 = vadd.f32 %v280, %v297
      %v325 = vadd.f32 %v281, %v297
      %v326 = vadd.f32 %v282, %v297
      %v327 = vadd.f32 %v283, %v297
      %v328 = vadd.f32 %v284, %v297
      %v329 = vadd.f32 %v285, %v297
      %v330 = vadd.f32 %v286, %v297
      %v331 = vadd.f32 %v287, %v297
      %v332 = vadd.f32 %v288, %v297
      %v333 = vadd.f32 %v289, %v297
      %v334 = vadd.f32 %v290, %v297
      %v335 = vadd.f32 %v291, %v297
      %v336 = vmax.f32 %v299, 0.0
      %v337 = vmax.f32 %v300, 0.0
      %v338 = vmax.f32 %v301, 0.0
      %v339 = vmax.f32 %v302, 0.0
      %v340 = vmax.f32 %v303, 0.0
      %v341 = vmax.f32 %v304, 0.0
      %v342 = vmax.f32 %v305, 0.0
      %v343 = vmax.f32 %v306, 0.0
      %v344 = vmax.f32 %v307, 0.0
      %v345 = vmax.f32 %v308, 0.0
      %v346 = vmax.f32 %v309, 0.0
      %v347 = vmax.f32 %v310, 0.0
      %v348 = vmax.f32 %v311, 0.0
      %v349 = vmax.f32 %v312, 0.0
      %v350 = vmax.f32 %v313, 0.0
      %v351 = vmax.f32 %v314, 0.0
      %v352 = vmax.f32 %v315, 0.0
      %v353 = vmax.f32 %v316, 0.0
      %v354 = vmax.f32 %v317, 0.0
      %v355 = vmax.f32 %v318, 0.0
      %v356 = vmax.f32 %v319, 0.0
      %v357 = vmax.f32 %v320, 0.0
      %v358 = vmax.f32 %v321, 0.0
      %v359 = vmax.f32 %v322, 0.0
      %v360 = vmax.f32 %v323, 0.0
      %v361 = vmax.f32 %v324, 0.0
      %v362 = vmax.f32 %v325, 0.0
      %v363 = vmax.f32 %v326, 0.0
      %v364 = vmax.f32 %v327, 0.0
      %v365 = vmax.f32 %v328, 0.0
      %v366 = vmax.f32 %v329, 0.0
      %v367 = vmax.f32 %v330, 0.0
      %v368 = vmax.f32 %v331, 0.0
      %v369 = vmax.f32 %v332, 0.0
      %v370 = vmax.f32 %v333, 0.0
      %v371 = vmax.f32 %v334, 0.0
      %v372 = vmax.f32 %v335, 0.0
      %v373 = vpack.c.bf16 %v337, %v336
      %v374 = vpack.c.bf16 %v339, %v338
      %v375 = vpack.c.bf16 %v341, %v340
      %v376 = vpack.c.bf16 %v343, %v342
      %v377 = vpack.c.bf16 %v345, %v344
      %v378 = vpack.c.bf16 %v347, %v346
      %v379 = vpack.c.bf16 %v349, %v348
      %v380 = vpack.c.bf16 %v351, %v350
      %v381 = vpack.c.bf16 %v353, %v352
      %v382 = vpack.c.bf16 %v355, %v354
      %v383 = vpack.c.bf16 %v357, %v356
      %v384 = vpack.c.bf16 %v359, %v358
      %v385 = vpack.c.bf16 %v361, %v360
      %v386 = vpack.c.bf16 %v363, %v362
      %v387 = vpack.c.bf16 %v365, %v364
      %v388 = vpack.c.bf16 %v367, %v366
      %v389 = vpack.c.bf16 %v369, %v368
      %v390 = vpack.c.bf16 %v371, %v370
      %v391 = vpack.c.bf16 %v372, %v372
      %v411 = vunpack.c.l.b16 %v373
      %v412 = vunpack.c.h.b16 %v373
      %v413 = vunpack.c.l.b16 %v374
      %v414 = vunpack.c.h.b16 %v374
      %v415 = vunpack.c.l.b16 %v375
      %v416 = vunpack.c.h.b16 %v375
      %v417 = vunpack.c.l.b16 %v376
      %v418 = vunpack.c.h.b16 %v376
      %v419 = vunpack.c.l.b16 %v377
      %v420 = vunpack.c.h.b16 %v377
      %v421 = vunpack.c.l.b16 %v378
      %v422 = vunpack.c.h.b16 %v378
      %v423 = vunpack.c.l.b16 %v379
      %v424 = vunpack.c.h.b16 %v379
      %v425 = vunpack.c.l.b16 %v380
      %v426 = vunpack.c.h.b16 %v380
      %v427 = vunpack.c.l.b16 %v381
      %v428 = vunpack.c.h.b16 %v381
      %v429 = vunpack.c.l.b16 %v382
      %v430 = vunpack.c.h.b16 %v382
      %v431 = vunpack.c.l.b16 %v383
      %v432 = vunpack.c.h.b16 %v383
      %v433 = vunpack.c.l.b16 %v384
      %v434 = vunpack.c.h.b16 %v384
      %v435 = vunpack.c.l.b16 %v385
      %v436 = vunpack.c.h.b16 %v385
      %v437 = vunpack.c.l.b16 %v386
      %v438 = vunpack.c.h.b16 %v386
      %v439 = vunpack.c.l.b16 %v387
      %v440 = vunpack.c.h.b16 %v387
      %v441 = vunpack.c.l.b16 %v388
      %v442 = vunpack.c.h.b16 %v388
      %v443 = vunpack.c.l.b16 %v389
      %v444 = vunpack.c.h.b16 %v389
      %v445 = vunpack.c.l.b16 %v390
      %v446 = vunpack.c.h.b16 %v390
      %v447 = vunpack.c.l.b16 %v391
      %v448 = vpack.c.b16 %v411, %v411
      %v449 = vpack.c.b16 %v412, %v412
      %v450 = vpack.c.b16 %v413, %v413
      %v451 = vpack.c.b16 %v414, %v414
      %v452 = vpack.c.b16 %v415, %v415
      %v453 = vpack.c.b16 %v416, %v416
      %v454 = vpack.c.b16 %v417, %v417
      %v455 = vpack.c.b16 %v418, %v418
      %v456 = vpack.c.b16 %v419, %v419
      %v457 = vpack.c.b16 %v420, %v420
      %v458 = vpack.c.b16 %v421, %v421
      %v459 = vpack.c.b16 %v422, %v422
      %v460 = vpack.c.b16 %v423, %v423
      %v461 = vpack.c.b16 %v424, %v424
      %v462 = vpack.c.b16 %v425, %v425
      %v463 = vpack.c.b16 %v426, %v426
      %v464 = vpack.c.b16 %v427, %v427
      %v465 = vpack.c.b16 %v428, %v428
      %v466 = vpack.c.b16 %v429, %v429
      %v467 = vpack.c.b16 %v430, %v430
      %v468 = vpack.c.b16 %v431, %v431
      %v469 = vpack.c.b16 %v432, %v432
      %v470 = vpack.c.b16 %v433, %v433
      %v471 = vpack.c.b16 %v434, %v434
      %v472 = vpack.c.b16 %v435, %v435
      %v473 = vpack.c.b16 %v436, %v436
      %v474 = vpack.c.b16 %v437, %v437
      %v475 = vpack.c.b16 %v438, %v438
      %v476 = vpack.c.b16 %v439, %v439
      %v477 = vpack.c.b16 %v440, %v440
      %v478 = vpack.c.b16 %v441, %v441
      %v479 = vpack.c.b16 %v442, %v442
      %v480 = vpack.c.b16 %v443, %v443
      %v481 = vpack.c.b16 %v444, %v444
      %v482 = vpack.c.b16 %v445, %v445
      %v483 = vpack.c.b16 %v446, %v446
      %v484 = vpack.c.b16 %v447, %v447
      %522 = vst [vmem:[%s172] sm:$0xf] %v448
      %523 = vst [vmem:[%s172 + $0x4] sm:$0xf] %v449
      %524 = vst [vmem:[%s172 + $0x8] sm:$0xf] %v450
      %525 = vst [vmem:[%s172 + $0xc] sm:$0xf] %v451
      %526 = vst [vmem:[%s172 + $0x10] sm:$0xf] %v452
      %527 = vst [vmem:[%s172 + $0x14] sm:$0xf] %v453
      %528 = vst [vmem:[%s172 + $0x18] sm:$0xf] %v454
      %529 = vst [vmem:[%s172 + $0x1c] sm:$0xf] %v455
      %530 = vst [vmem:[%s172 + $0x20] sm:$0xf] %v456
      %531 = vst [vmem:[%s172 + $0x24] sm:$0xf] %v457
      %532 = vst [vmem:[%s172 + $0x28] sm:$0xf] %v458
      %533 = vst [vmem:[%s172 + $0x2c] sm:$0xf] %v459
      %534 = vst [vmem:[%s172 + $0x30] sm:$0xf] %v460
      %535 = vst [vmem:[%s172 + $0x34] sm:$0xf] %v461
      %536 = vst [vmem:[%s172 + $0x38] sm:$0xf] %v462
      %537 = vst [vmem:[%s172 + $0x3c] sm:$0xf] %v463
      %538 = vst [vmem:[%s172 + $0x40] sm:$0xf] %v464
      %539 = vst [vmem:[%s172 + $0x44] sm:$0xf] %v465
      %540 = vst [vmem:[%s172 + $0x48] sm:$0xf] %v466
      %541 = vst [vmem:[%s172 + $0x4c] sm:$0xf] %v467
      %542 = vst [vmem:[%s172 + $0x50] sm:$0xf] %v468
      %543 = vst [vmem:[%s172 + $0x54] sm:$0xf] %v469
      %544 = vst [vmem:[%s172 + $0x58] sm:$0xf] %v470
      %545 = vst [vmem:[%s172 + $0x5c] sm:$0xf] %v471
      %546 = vst [vmem:[%s172 + $0x60] sm:$0xf] %v472
      %547 = vst [vmem:[%s172 + $0x64] sm:$0xf] %v473
      %548 = vst [vmem:[%s172 + $0x68] sm:$0xf] %v474
      %549 = vst [vmem:[%s172 + $0x6c] sm:$0xf] %v475
      %550 = vst [vmem:[%s172 + $0x70] sm:$0xf] %v476
      %551 = vst [vmem:[%s172 + $0x74] sm:$0xf] %v477
      %552 = vst [vmem:[%s172 + $0x78] sm:$0xf] %v478
      %553 = vst [vmem:[%s172 + $0x7c] sm:$0xf] %v479
      %554 = vst [vmem:[%s172 + $0x80] sm:$0xf] %v480
      %555 = vst [vmem:[%s172 + $0x84] sm:$0xf] %v481
      %556 = vst [vmem:[%s172 + $0x88] sm:$0xf] %v482
      %557 = vst [vmem:[%s172 + $0x8c] sm:$0xf] %v483
      %558 = vst [vmem:[%s172 + $0x90] sm:$0xf] %v484
      %s559 = smul.u32 37, %s14
      %p560 = scmp.lt.s32.totalorder %s559, 73
      %s561 = scalar_select %p560, %s559, 73
      %s562 = smul.addr %s561, 4
      %s563 = scalar_lea.vmem %s3, %s562
      // Predicated region
      $region33: #{_lambda_.16} parent=31 // pred_check
        %p564 = pneg %p100
      $region34: #{_lambda_.16} parent=31 // pred_check_branch
        %566 = sbr.rel (%p564) target = $region36
      $region35: #{_lambda_.16} parent=31 // pred_region
        %s567 = smul.u32 37, %s14
      $region36: #{_lambda_.16} parent=31 // pred_fallthru
        _
    $region32: #{_lambda_.16} parent=5 // pred_fallthru
      _
    %p568 = scmp.le.s32.totalorder 2, %s9
    // Predicated region
    $region37: #{_lambda_.16} parent=5 // pred_check
      %p569 = pneg %p568
    $region38: #{_lambda_.16} parent=5 // pred_check_branch
      %571 = sbr.rel (%p569) target = $region40
    $region39: #{_lambda_.16} parent=5 // pred_region
      %s572 = ssub.s32 %s9, 2
      // Predicated region
      $region41: #{_lambda_.16} parent=39 // pred_check
        %p573 = pneg %p106
      $region42: #{_lambda_.16} parent=39 // pred_check_branch
        %575 = sbr.rel (%p573) target = $region44
      $region43: #{_lambda_.16} parent=39 // pred_region
        %s576 = smul.u32 37, %s15
        %p577 = scmp.lt.s32.totalorder %s576, 73
        %s578 = scalar_select %p577, %s576, 73
        %s579 = smul.addr %s578, 4
        %s580 = scalar_lea.vmem %s3, %s579
      $region44: #{_lambda_.16} parent=39 // pred_fallthru
        _
    $region40: #{_lambda_.16} parent=5 // pred_fallthru
      _
  $region6: #{_lambda_.16} parent=0 // loop_footer
    %s13 = sadd.s32 1, %s9
  $region7: #{_lambda_.16} parent=0 // loop_footer_branch
    %8 = sbr.rel target = $region3
  $region8: #{_lambda_.16} parent=0 // loop_exit
    _

// kernel: _lambda_.17
$region0: #{_lambda_.17}
  #allocation0 [shape = 'u32[]', space=smem, size = 0x4, offset = 0x4, fixed_abs, tag = 'smem constant byte address 0x4 - core index']
  #allocation1 [shape = 'u32[144,128]{1,0:T(1,128)}', space=vmem, size = 0x12000, scoped, tag = 'internal scratch']
  %s0 = inlined_call_operand.vmem [shape: bf16[2192,64], index: 0, kind: input, shape index: {}]
  %s1 = inlined_call_operand.vmem [shape: bf16[64,128], index: 1, kind: input, shape index: {}]
  %s2 = inlined_call_operand.vmem [shape: f32[1,128], index: 2, kind: input, shape index: {}]
  %s3 = inlined_call_operand.vmem [shape: bf16[2192,128], index: 3, kind: output, shape index: {}]
  %s4 = sld [smem:[#allocation0]]
  $region45: #{_lambda_.17} parent=0
    _
  %s6 = ssub.s32 1, %s4
  %s7 = scalar_select 0, %s6, %s4
  loop: start=0, step=1, limit=4
  $region2: #{_lambda_.17} parent=0 // loop_pre_header
    _
  $region3: #{_lambda_.17} parent=0 // loop_header
    %s9 = sphi 0, %s13
    %p10 = scmp.ge.s32.totalorder %s9, 4
    %s19 = sphi 0, %s21
    %s22 = sphi 0, %s19
    %s23 = sphi 0, %s22
    %s39 = sphi 0, %s23
    %s43 = sphi 0, %s43
    %s45 = sphi 0, %s43
    %s46 = sphi 0, %s45
    %s60 = sphi 0, %s46
    %s64 = sphi 0, %s64
    %s66 = sphi 0, %s64
    %s67 = sphi 0, %s66
    %s81 = sphi 0, %s67
    %s87 = sphi 0, %s89
    %s90 = sphi 0, %s87
    %s91 = sphi 0, %s90
    %s107 = sphi 0, %s91
  $region4: #{_lambda_.17} parent=0 // loop_header_branch
    %12 = sbr.rel (%p10) target = $region8
  $region5: #{_lambda_.17} parent=0 // loop_body
    %s14 = ssub.s32 %s9, 1
    %s15 = ssub.s32 %s9, 2
    %s16 = sadd.s32 %s9, 1
    %s17 = ssub.s32 %s9, %s16
    %p18 = scmp.eq.s32.totalorder %s17, 0
    %s20 = sadd.s32 %s19, 1
    %s21 = scalar_select %p18, %s19, %s20
    %p24 = pneg %p18
    %p25 = scmp.eq.s32.totalorder %s9, 1
    %p26 = por %p24, %p25
    %p27 = scmp.ne.s32.totalorder %s19, %s22
    %p28 = scmp.eq.s32.totalorder %s9, 0
    %p29 = por %p27, %p28
    %p30 = scmp.ne.s32.totalorder %s19, %s22
    %p31 = scmp.eq.s32.totalorder %s14, 1
    %p32 = por %p30, %p31
    %p33 = scmp.ne.s32.totalorder %s22, %s23
    %p34 = scmp.eq.s32.totalorder %s14, 0
    %p35 = por %p33, %p34
    %p36 = scmp.ne.s32.totalorder %s22, %s23
    %p37 = scmp.eq.s32.totalorder %s15, 1
    %p38 = por %p36, %p37
    %p40 = scmp.ne.s32.totalorder %s23, %s39
    %p41 = scmp.eq.s32.totalorder %s15, 0
    %p42 = por %p40, %p41
    %s44 = sadd.s32 %s43, 1
    %p47 = scmp.eq.s32.totalorder %s9, 1
    %p48 = scmp.ne.s32.totalorder %s43, %s45
    %p49 = scmp.eq.s32.totalorder %s9, 0
    %p50 = por %p48, %p49
    %p51 = scmp.ne.s32.totalorder %s43, %s45
    %p52 = scmp.eq.s32.totalorder %s14, 1
    %p53 = por %p51, %p52
    %p54 = scmp.ne.s32.totalorder %s45, %s46
    %p55 = scmp.eq.s32.totalorder %s14, 0
    %p56 = por %p54, %p55
    %p57 = scmp.ne.s32.totalorder %s45, %s46
    %p58 = scmp.eq.s32.totalorder %s15, 1
    %p59 = por %p57, %p58
    %p61 = scmp.ne.s32.totalorder %s46, %s60
    %p62 = scmp.eq.s32.totalorder %s15, 0
    %p63 = por %p61, %p62
    %s65 = sadd.s32 %s64, 1
    %p68 = scmp.eq.s32.totalorder %s9, 1
    %p69 = scmp.ne.s32.totalorder %s64, %s66
    %p70 = scmp.eq.s32.totalorder %s9, 0
    %p71 = por %p69, %p70
    %p72 = scmp.ne.s32.totalorder %s64, %s66
    %p73 = scmp.eq.s32.totalorder %s14, 1
    %p74 = por %p72, %p73
    %p75 = scmp.ne.s32.totalorder %s66, %s67
    %p76 = scmp.eq.s32.totalorder %s14, 0
    %p77 = por %p75, %p76
    %p78 = scmp.ne.s32.totalorder %s66, %s67
    %p79 = scmp.eq.s32.totalorder %s15, 1
    %p80 = por %p78, %p79
    %p82 = scmp.ne.s32.totalorder %s67, %s81
    %p83 = scmp.eq.s32.totalorder %s15, 0
    %p84 = por %p82, %p83
    %s85 = ssub.s32 %s9, %s16
    %p86 = scmp.eq.s32.totalorder %s85, 0
    %s88 = sadd.s32 %s87, 1
    %s89 = scalar_select %p86, %s87, %s88
    %p92 = pneg %p86
    %p93 = scmp.eq.s32.totalorder %s9, 1
    %p94 = por %p92, %p93
    %p95 = scmp.ne.s32.totalorder %s87, %s90
    %p96 = scmp.eq.s32.totalorder %s9, 0
    %p97 = por %p95, %p96
    %p98 = scmp.ne.s32.totalorder %s87, %s90
    %p99 = scmp.eq.s32.totalorder %s14, 1
    %p100 = por %p98, %p99
    %p101 = scmp.ne.s32.totalorder %s90, %s91
    %p102 = scmp.eq.s32.totalorder %s14, 0
    %p103 = por %p101, %p102
    %p104 = scmp.ne.s32.totalorder %s90, %s91
    %p105 = scmp.eq.s32.totalorder %s15, 1
    %p106 = por %p104, %p105
    %p108 = scmp.ne.s32.totalorder %s91, %s107
    %p109 = scmp.eq.s32.totalorder %s15, 0
    %p110 = por %p108, %p109
    %p111 = scmp.le.s32.totalorder 1, %s9
    %p112 = scmp.lt.s32.totalorder %s9, 3
    %p113 = pnand %p111, %p112
    %p114 = pneg %p113
    // Predicated region
    $region9: #{_lambda_.17} parent=5 // pred_check
      _
    $region10: #{_lambda_.17} parent=5 // pred_check_branch
      %116 = sbr.rel (%p113) target = $region12
    $region11: #{_lambda_.17} parent=5 // pred_region
      %s117 = ssub.s32 %s9, 1
      // Predicated region
      $region13: #{_lambda_.17} parent=11 // pred_check
        %p118 = pneg %p56
      $region14: #{_lambda_.17} parent=11 // pred_check_branch
        %120 = sbr.rel (%p118) target = $region16
      $region15: #{_lambda_.17} parent=11 // pred_region
        _
      $region16: #{_lambda_.17} parent=11 // pred_fallthru
        _
      // Predicated region
      $region17: #{_lambda_.17} parent=11 // pred_check
        %p121 = pneg %p77
      $region18: #{_lambda_.17} parent=11 // pred_check_branch
        %123 = sbr.rel (%p121) target = $region20
      $region19: #{_lambda_.17} parent=11 // pred_region
        _
      $region20: #{_lambda_.17} parent=11 // pred_fallthru
        _
    $region12: #{_lambda_.17} parent=5 // pred_fallthru
      _
    %p124 = scmp.lt.s32.totalorder %s9, 2
    // Predicated region
    $region21: #{_lambda_.17} parent=5 // pred_check
      %p125 = pneg %p124
    $region22: #{_lambda_.17} parent=5 // pred_check_branch
      %127 = sbr.rel (%p125) target = $region24
    $region23: #{_lambda_.17} parent=5 // pred_region
      // Predicated region
      $region25: #{_lambda_.17} parent=23 // pred_check
        %p128 = pneg %p29
      $region26: #{_lambda_.17} parent=23 // pred_check_branch
        %130 = sbr.rel (%p128) target = $region28
      $region27: #{_lambda_.17} parent=23 // pred_region
        %s131 = smul.u32 137, %s9
        %p132 = scmp.lt.s32.totalorder %s131, 273
        %s133 = scalar_select %p132, %s131, 273
        %s134 = smul.addr %s133, 4
        %s135 = scalar_lea.vmem %s0, %s134
        %s136 = smul.u32 137, %s9
      $region28: #{_lambda_.17} parent=23 // pred_fallthru
        _
    $region24: #{_lambda_.17} parent=5 // pred_fallthru
      _
    %p137 = scmp.le.s32.totalorder 1, %s9
    %p138 = scmp.lt.s32.totalorder %s9, 3
    %p139 = pnand %p137, %p138
    %p140 = pneg %p139
    // Predicated region
    $region29: #{_lambda_.17} parent=5 // pred_check
      _
    $region30: #{_lambda_.17} parent=5 // pred_check_branch
      %142 = sbr.rel (%p139) target = $region32
    $region31: #{_lambda_.17} parent=5 // pred_region
      %s143 = ssub.s32 %s9, 1
      %s144 = smul.u32 137, %s14
      %p145 = scmp.lt.s32.totalorder %s144, 273
      %s146 = scalar_select %p145, %s144, 273
      %s147 = smul.addr %s146, 4
      %s148 = scalar_lea.vmem %s0, %s147
      %p149 = pneg %p35
      %p150 = pneg %p32
      %p151 = pneg %p56
      %p152 = pneg %p53
      %p153 = pneg %p77
      %p154 = pneg %p74
      %p155 = pneg %p103
      %p156 = pneg %p100
      %s157 = smul.u32 137, %s14
      %p158 = scmp.lt.s32.totalorder %s157, 273
      %s159 = scalar_select %p158, %s157, 273
      %s160 = smul.addr %s159, 4
      %s161 = scalar_lea.vmem %s3, %s160
      %s162 = smul.u32 137, %s14
      %p163 = scmp.lt.s32.totalorder %s162, 273
      %s164 = scalar_select %p163, %s162, 273
      %s165 = smul.addr %s164, 4
      %s166 = scalar_lea.vmem %s0, %s165
      %s167 = smul.u32 137, %s14
      %s168 = smul.u32 137, %s14
      %p169 = scmp.lt.s32.totalorder %s168, 273
      %s170 = scalar_select %p169, %s168, 273
      %s171 = smul.addr %s170, 4
      %s172 = scalar_lea.vmem %s3, %s171
      %s173 = smul.u32 137, %s14
      %v175 = vld [vmem:[%s166] sm:$0xf]
      %v176 = vld [vmem:[%s166 + $0x4] sm:$0xf]
      %v177 = vld [vmem:[%s166 + $0x8] sm:$0xf]
      %v178 = vld [vmem:[%s166 + $0xc] sm:$0xf]
      %v179 = vld [vmem:[%s166 + $0x10] sm:$0xf]
      %v180 = vld [vmem:[%s166 + $0x14] sm:$0xf]
      %v181 = vld [vmem:[%s166 + $0x18] sm:$0xf]
      %v182 = vld [vmem:[%s166 + $0x1c] sm:$0xf]
      %v183 = vld [vmem:[%s166 + $0x20] sm:$0xf]
      %v184 = vld [vmem:[%s166 + $0x24] sm:$0xf]
      %v185 = vld [vmem:[%s166 + $0x28] sm:$0xf]
      %v186 = vld [vmem:[%s166 + $0x2c] sm:$0xf]
      %v187 = vld [vmem:[%s166 + $0x30] sm:$0xf]
      %v188 = vld [vmem:[%s166 + $0x34] sm:$0xf]
      %v189 = vld [vmem:[%s166 + $0x38] sm:$0xf]
      %v190 = vld [vmem:[%s166 + $0x3c] sm:$0xf]
      %v191 = vld [vmem:[%s166 + $0x40] sm:$0xf]
      %v192 = vld [vmem:[%s166 + $0x44] sm:$0xf]
      %v193 = vld [vmem:[%s166 + $0x48] sm:$0xf]
      %v194 = vld [vmem:[%s166 + $0x4c] sm:$0xf]
      %v195 = vld [vmem:[%s166 + $0x50] sm:$0xf]
      %v196 = vld [vmem:[%s166 + $0x54] sm:$0xf]
      %v197 = vld [vmem:[%s166 + $0x58] sm:$0xf]
      %v198 = vld [vmem:[%s166 + $0x5c] sm:$0xf]
      %v199 = vld [vmem:[%s166 + $0x60] sm:$0xf]
      %v200 = vld [vmem:[%s166 + $0x64] sm:$0xf]
      %v201 = vld [vmem:[%s166 + $0x68] sm:$0xf]
      %v202 = vld [vmem:[%s166 + $0x6c] sm:$0xf]
      %v203 = vld [vmem:[%s166 + $0x70] sm:$0xf]
      %v204 = vld [vmem:[%s166 + $0x74] sm:$0xf]
      %v205 = vld [vmem:[%s166 + $0x78] sm:$0xf]
      %v206 = vld [vmem:[%s166 + $0x7c] sm:$0xf]
      %v207 = vld [vmem:[%s166 + $0x80] sm:$0xf]
      %v208 = vld [vmem:[%s166 + $0x84] sm:$0xf]
      %v209 = vld [vmem:[%s166 + $0x88] sm:$0xf]
      %v210 = vld [vmem:[%s166 + $0x8c] sm:$0xf]
      %v211 = vld [vmem:[%s166 + $0x90] sm:$0xf]
      %v212 = vld [vmem:[%s166 + $0x94] sm:$0xf]
      %v213 = vld [vmem:[%s166 + $0x98] sm:$0xf]
      %v214 = vld [vmem:[%s166 + $0x9c] sm:$0xf]
      %v215 = vld [vmem:[%s166 + $0xa0] sm:$0xf]
      %v216 = vld [vmem:[%s166 + $0xa4] sm:$0xf]
      %v217 = vld [vmem:[%s166 + $0xa8] sm:$0xf]
      %v218 = vld [vmem:[%s166 + $0xac] sm:$0xf]
      %v219 = vld [vmem:[%s166 + $0xb0] sm:$0xf]
      %v220 = vld [vmem:[%s166 + $0xb4] sm:$0xf]
      %v221 = vld [vmem:[%s166 + $0xb8] sm:$0xf]
      %v222 = vld [vmem:[%s166 + $0xbc] sm:$0xf]
      %v223 = vld [vmem:[%s166 + $0xc0] sm:$0xf]
      %v224 = vld [vmem:[%s166 + $0xc4] sm:$0xf]
      %v225 = vld [vmem:[%s166 + $0xc8] sm:$0xf]
      %v226 = vld [vmem:[%s166 + $0xcc] sm:$0xf]
      %v227 = vld [vmem:[%s166 + $0xd0] sm:$0xf]
      %v228 = vld [vmem:[%s166 + $0xd4] sm:$0xf]
      %v229 = vld [vmem:[%s166 + $0xd8] sm:$0xf]
      %v230 = vld [vmem:[%s166 + $0xdc] sm:$0xf]
      %v231 = vld [vmem:[%s166 + $0xe0] sm:$0xf]
      %v232 = vld [vmem:[%s166 + $0xe4] sm:$0xf]
      %v233 = vld [vmem:[%s166 + $0xe8] sm:$0xf]
      %v234 = vld [vmem:[%s166 + $0xec] sm:$0xf]
      %v235 = vld [vmem:[%s166 + $0xf0] sm:$0xf]
      %v236 = vld [vmem:[%s166 + $0xf4] sm:$0xf]
      %v237 = vld [vmem:[%s166 + $0xf8] sm:$0xf]
      %v238 = vld [vmem:[%s166 + $0xfc] sm:$0xf]
      %v239 = vld [vmem:[%s166 + $0x100] sm:$0xf]
      %v240 = vld [vmem:[%s166 + $0x104] sm:$0xf]
      %v241 = vld [vmem:[%s166 + $0x108] sm:$0xf]
      %v242 = vld [vmem:[%s166 + $0x10c] sm:$0xf]
      %v243 = vld [vmem:[%s166 + $0x110] sm:$0xf]
      %v244 = vld [vmem:[%s166 + $0x114] sm:$0xf]
      %v245 = vld [vmem:[%s166 + $0x118] sm:$0xf]
      %v246 = vld [vmem:[%s166 + $0x11c] sm:$0xf]
      %v247 = vld [vmem:[%s166 + $0x120] sm:$0xf]
      %v248 = vld [vmem:[%s166 + $0x124] sm:$0xf]
      %v249 = vld [vmem:[%s166 + $0x128] sm:$0xf]
      %v250 = vld [vmem:[%s166 + $0x12c] sm:$0xf]
      %v251 = vld [vmem:[%s166 + $0x130] sm:$0xf]
      %v252 = vld [vmem:[%s166 + $0x134] sm:$0xf]
      %v253 = vld [vmem:[%s166 + $0x138] sm:$0xf]
      %v254 = vld [vmem:[%s166 + $0x13c] sm:$0xf]
      %v255 = vld [vmem:[%s166 + $0x140] sm:$0xf]
      %v256 = vld [vmem:[%s166 + $0x144] sm:$0xf]
      %v257 = vld [vmem:[%s166 + $0x148] sm:$0xf]
      %v258 = vld [vmem:[%s166 + $0x14c] sm:$0xf]
      %v259 = vld [vmem:[%s166 + $0x150] sm:$0xf]
      %v260 = vld [vmem:[%s166 + $0x154] sm:$0xf]
      %v261 = vld [vmem:[%s166 + $0x158] sm:$0xf]
      %v262 = vld [vmem:[%s166 + $0x15c] sm:$0xf]
      %v263 = vld [vmem:[%s166 + $0x160] sm:$0xf]
      %v264 = vld [vmem:[%s166 + $0x164] sm:$0xf]
      %v265 = vld [vmem:[%s166 + $0x168] sm:$0xf]
      %v266 = vld [vmem:[%s166 + $0x16c] sm:$0xf]
      %v267 = vld [vmem:[%s166 + $0x170] sm:$0xf]
      %v268 = vld [vmem:[%s166 + $0x174] sm:$0xf]
      %v269 = vld [vmem:[%s166 + $0x178] sm:$0xf]
      %v270 = vld [vmem:[%s166 + $0x17c] sm:$0xf]
      %v271 = vld [vmem:[%s166 + $0x180] sm:$0xf]
      %v272 = vld [vmem:[%s166 + $0x184] sm:$0xf]
      %v273 = vld [vmem:[%s166 + $0x188] sm:$0xf]
      %v274 = vld [vmem:[%s166 + $0x18c] sm:$0xf]
      %v275 = vld [vmem:[%s166 + $0x190] sm:$0xf]
      %v276 = vld [vmem:[%s166 + $0x194] sm:$0xf]
      %v277 = vld [vmem:[%s166 + $0x198] sm:$0xf]
      %v278 = vld [vmem:[%s166 + $0x19c] sm:$0xf]
      %v279 = vld [vmem:[%s166 + $0x1a0] sm:$0xf]
      %v280 = vld [vmem:[%s166 + $0x1a4] sm:$0xf]
      %v281 = vld [vmem:[%s166 + $0x1a8] sm:$0xf]
      %v282 = vld [vmem:[%s166 + $0x1ac] sm:$0xf]
      %v283 = vld [vmem:[%s166 + $0x1b0] sm:$0xf]
      %v284 = vld [vmem:[%s166 + $0x1b4] sm:$0xf]
      %v285 = vld [vmem:[%s166 + $0x1b8] sm:$0xf]
      %v286 = vld [vmem:[%s166 + $0x1bc] sm:$0xf]
      %v287 = vld [vmem:[%s166 + $0x1c0] sm:$0xf]
      %v288 = vld [vmem:[%s166 + $0x1c4] sm:$0xf]
      %v289 = vld [vmem:[%s166 + $0x1c8] sm:$0xf]
      %v290 = vld [vmem:[%s166 + $0x1cc] sm:$0xf]
      %v291 = vld [vmem:[%s166 + $0x1d0] sm:$0xf]
      %v292 = vld [vmem:[%s166 + $0x1d4] sm:$0xf]
      %v293 = vld [vmem:[%s166 + $0x1d8] sm:$0xf]
      %v294 = vld [vmem:[%s166 + $0x1dc] sm:$0xf]
      %v295 = vld [vmem:[%s166 + $0x1e0] sm:$0xf]
      %v296 = vld [vmem:[%s166 + $0x1e4] sm:$0xf]
      %v297 = vld [vmem:[%s166 + $0x1e8] sm:$0xf]
      %v298 = vld [vmem:[%s166 + $0x1ec] sm:$0xf]
      %v299 = vld [vmem:[%s166 + $0x1f0] sm:$0xf]
      %v300 = vld [vmem:[%s166 + $0x1f4] sm:$0xf]
      %v301 = vld [vmem:[%s166 + $0x1f8] sm:$0xf]
      %v302 = vld [vmem:[%s166 + $0x1fc] sm:$0xf]
      %v303 = vld [vmem:[%s166 + $0x200] sm:$0xf]
      %v304 = vld [vmem:[%s166 + $0x204] sm:$0xf]
      %v305 = vld [vmem:[%s166 + $0x208] sm:$0xf]
      %v306 = vld [vmem:[%s166 + $0x20c] sm:$0xf]
      %v307 = vld [vmem:[%s166 + $0x210] sm:$0xf]
      %v308 = vld [vmem:[%s166 + $0x214] sm:$0xf]
      %v309 = vld [vmem:[%s166 + $0x218] sm:$0xf]
      %v310 = vld [vmem:[%s166 + $0x21c] sm:$0xf]
      %v311 = vld [vmem:[%s166 + $0x220] sm:$0xf]
      %v312 = vld [vmem:[%s1] sm:$0xf]
      %v313 = vld [vmem:[%s1 + $0x4] sm:$0xf]
      %v314 = vld [vmem:[%s1 + $0x8] sm:$0xf]
      %v315 = vld [vmem:[%s1 + $0xc] sm:$0xf]
      %v316 = vld [vmem:[%s1 + $0x10] sm:$0xf]
      %v317 = vld [vmem:[%s1 + $0x14] sm:$0xf]
      %v318 = vld [vmem:[%s1 + $0x18] sm:$0xf]
      %v319 = vld [vmem:[%s1 + $0x1c] sm:$0xf]
      %v320 = vld [vmem:[%s2] sm:$0x1]
      %v322 = vlaneseq
      %v323 = vshrl.u32 %v322, 7
      %v324 = vsub.s32 0, %v323
      %v325 = vrot.slane %v320, %v324
      %v464 = vunpack.c.l.b16 %v175
      %v465 = vunpack.c.l.b16 %v176
      %v466 = vunpack.c.l.b16 %v177
      %v467 = vunpack.c.l.b16 %v178
      %v468 = vunpack.c.l.b16 %v179
      %v469 = vunpack.c.l.b16 %v180
      %v470 = vunpack.c.l.b16 %v181
      %v471 = vunpack.c.l.b16 %v182
      %v472 = vunpack.c.l.b16 %v183
      %v473 = vunpack.c.l.b16 %v184
      %v474 = vunpack.c.l.b16 %v185
      %v475 = vunpack.c.l.b16 %v186
      %v476 = vunpack.c.l.b16 %v187
      %v477 = vunpack.c.l.b16 %v188
      %v478 = vunpack.c.l.b16 %v189
      %v479 = vunpack.c.l.b16 %v190
      %v480 = vunpack.c.l.b16 %v191
      %v481 = vunpack.c.l.b16 %v192
      %v482 = vunpack.c.l.b16 %v193
      %v483 = vunpack.c.l.b16 %v194
      %v484 = vunpack.c.l.b16 %v195
      %v485 = vunpack.c.l.b16 %v196
      %v486 = vunpack.c.l.b16 %v197
      %v487 = vunpack.c.l.b16 %v198
      %v488 = vunpack.c.l.b16 %v199
      %v489 = vunpack.c.l.b16 %v200
      %v490 = vunpack.c.l.b16 %v201
      %v491 = vunpack.c.l.b16 %v202
      %v492 = vunpack.c.l.b16 %v203
      %v493 = vunpack.c.l.b16 %v204
      %v494 = vunpack.c.l.b16 %v205
      %v495 = vunpack.c.l.b16 %v206
      %v496 = vunpack.c.l.b16 %v207
      %v497 = vunpack.c.l.b16 %v208
      %v498 = vunpack.c.l.b16 %v209
      %v499 = vunpack.c.l.b16 %v210
      %v500 = vunpack.c.l.b16 %v211
      %v501 = vunpack.c.l.b16 %v212
      %v502 = vunpack.c.l.b16 %v213
      %v503 = vunpack.c.l.b16 %v214
      %v504 = vunpack.c.l.b16 %v215
      %v505 = vunpack.c.l.b16 %v216
      %v506 = vunpack.c.l.b16 %v217
      %v507 = vunpack.c.l.b16 %v218
      %v508 = vunpack.c.l.b16 %v219
      %v509 = vunpack.c.l.b16 %v220
      %v510 = vunpack.c.l.b16 %v221
      %v511 = vunpack.c.l.b16 %v222
      %v512 = vunpack.c.l.b16 %v223
      %v513 = vunpack.c.l.b16 %v224
      %v514 = vunpack.c.l.b16 %v225
      %v515 = vunpack.c.l.b16 %v226
      %v516 = vunpack.c.l.b16 %v227
      %v517 = vunpack.c.l.b16 %v228
      %v518 = vunpack.c.l.b16 %v229
      %v519 = vunpack.c.l.b16 %v230
      %v520 = vunpack.c.l.b16 %v231
      %v521 = vunpack.c.l.b16 %v232
      %v522 = vunpack.c.l.b16 %v233
      %v523 = vunpack.c.l.b16 %v234
      %v524 = vunpack.c.l.b16 %v235
      %v525 = vunpack.c.l.b16 %v236
      %v526 = vunpack.c.l.b16 %v237
      %v527 = vunpack.c.l.b16 %v238
      %v528 = vunpack.c.l.b16 %v239
      %v529 = vunpack.c.l.b16 %v240
      %v530 = vunpack.c.l.b16 %v241
      %v531 = vunpack.c.l.b16 %v242
      %v532 = vunpack.c.l.b16 %v243
      %v533 = vunpack.c.l.b16 %v244
      %v534 = vunpack.c.l.b16 %v245
      %v535 = vunpack.c.l.b16 %v246
      %v536 = vunpack.c.l.b16 %v247
      %v537 = vunpack.c.l.b16 %v248
      %v538 = vunpack.c.l.b16 %v249
      %v539 = vunpack.c.l.b16 %v250
      %v540 = vunpack.c.l.b16 %v251
      %v541 = vunpack.c.l.b16 %v252
      %v542 = vunpack.c.l.b16 %v253
      %v543 = vunpack.c.l.b16 %v254
      %v544 = vunpack.c.l.b16 %v255
      %v545 = vunpack.c.l.b16 %v256
      %v546 = vunpack.c.l.b16 %v257
      %v547 = vunpack.c.l.b16 %v258
      %v548 = vunpack.c.l.b16 %v259
      %v549 = vunpack.c.l.b16 %v260
      %v550 = vunpack.c.l.b16 %v261
      %v551 = vunpack.c.l.b16 %v262
      %v552 = vunpack.c.l.b16 %v263
      %v553 = vunpack.c.l.b16 %v264
      %v554 = vunpack.c.l.b16 %v265
      %v555 = vunpack.c.l.b16 %v266
      %v556 = vunpack.c.l.b16 %v267
      %v557 = vunpack.c.l.b16 %v268
      %v558 = vunpack.c.l.b16 %v269
      %v559 = vunpack.c.l.b16 %v270
      %v560 = vunpack.c.l.b16 %v271
      %v561 = vunpack.c.l.b16 %v272
      %v562 = vunpack.c.l.b16 %v273
      %v563 = vunpack.c.l.b16 %v274
      %v564 = vunpack.c.l.b16 %v275
      %v565 = vunpack.c.l.b16 %v276
      %v566 = vunpack.c.l.b16 %v277
      %v567 = vunpack.c.l.b16 %v278
      %v568 = vunpack.c.l.b16 %v279
      %v569 = vunpack.c.l.b16 %v280
      %v570 = vunpack.c.l.b16 %v281
      %v571 = vunpack.c.l.b16 %v282
      %v572 = vunpack.c.l.b16 %v283
      %v573 = vunpack.c.l.b16 %v284
      %v574 = vunpack.c.l.b16 %v285
      %v575 = vunpack.c.l.b16 %v286
      %v576 = vunpack.c.l.b16 %v287
      %v577 = vunpack.c.l.b16 %v288
      %v578 = vunpack.c.l.b16 %v289
      %v579 = vunpack.c.l.b16 %v290
      %v580 = vunpack.c.l.b16 %v291
      %v581 = vunpack.c.l.b16 %v292
      %v582 = vunpack.c.l.b16 %v293
      %v583 = vunpack.c.l.b16 %v294
      %v584 = vunpack.c.l.b16 %v295
      %v585 = vunpack.c.l.b16 %v296
      %v586 = vunpack.c.l.b16 %v297
      %v587 = vunpack.c.l.b16 %v298
      %v588 = vunpack.c.l.b16 %v299
      %v589 = vunpack.c.l.b16 %v300
      %v590 = vunpack.c.l.b16 %v301
      %v591 = vunpack.c.l.b16 %v302
      %v592 = vunpack.c.l.b16 %v303
      %v593 = vunpack.c.l.b16 %v304
      %v594 = vunpack.c.l.b16 %v305
      %v595 = vunpack.c.l.b16 %v306
      %v596 = vunpack.c.l.b16 %v307
      %v597 = vunpack.c.l.b16 %v308
      %v598 = vunpack.c.l.b16 %v309
      %v599 = vunpack.c.l.b16 %v310
      %v600 = vunpack.c.l.b16 %v311
      %v601 = vpack.c.b16 %v465, %v464
      %v602 = vpack.c.b16 %v467, %v466
      %v603 = vpack.c.b16 %v469, %v468
      %v604 = vpack.c.b16 %v471, %v470
      %v605 = vpack.c.b16 %v473, %v472
      %v606 = vpack.c.b16 %v475, %v474
      %v607 = vpack.c.b16 %v477, %v476
      %v608 = vpack.c.b16 %v479, %v478
      %v609 = vpack.c.b16 %v481, %v480
      %v610 = vpack.c.b16 %v483, %v482
      %v611 = vpack.c.b16 %v485, %v484
      %v612 = vpack.c.b16 %v487, %v486
      %v613 = vpack.c.b16 %v489, %v488
      %v614 = vpack.c.b16 %v491, %v490
      %v615 = vpack.c.b16 %v493, %v492
      %v616 = vpack.c.b16 %v495, %v494
      %v617 = vpack.c.b16 %v497, %v496
      %v618 = vpack.c.b16 %v499, %v498
      %v619 = vpack.c.b16 %v501, %v500
      %v620 = vpack.c.b16 %v503, %v502
      %v621 = vpack.c.b16 %v505, %v504
      %v622 = vpack.c.b16 %v507, %v506
      %v623 = vpack.c.b16 %v509, %v508
      %v624 = vpack.c.b16 %v511, %v510
      %v625 = vpack.c.b16 %v513, %v512
      %v626 = vpack.c.b16 %v515, %v514
      %v627 = vpack.c.b16 %v517, %v516
      %v628 = vpack.c.b16 %v519, %v518
      %v629 = vpack.c.b16 %v521, %v520
      %v630 = vpack.c.b16 %v523, %v522
      %v631 = vpack.c.b16 %v525, %v524
      %v632 = vpack.c.b16 %v527, %v526
      %v633 = vpack.c.b16 %v529, %v528
      %v634 = vpack.c.b16 %v531, %v530
      %v635 = vpack.c.b16 %v533, %v532
      %v636 = vpack.c.b16 %v535, %v534
      %v637 = vpack.c.b16 %v537, %v536
      %v638 = vpack.c.b16 %v539, %v538
      %v639 = vpack.c.b16 %v541, %v540
      %v640 = vpack.c.b16 %v543, %v542
      %v641 = vpack.c.b16 %v545, %v544
      %v642 = vpack.c.b16 %v547, %v546
      %v643 = vpack.c.b16 %v549, %v548
      %v644 = vpack.c.b16 %v551, %v550
      %v645 = vpack.c.b16 %v553, %v552
      %v646 = vpack.c.b16 %v555, %v554
      %v647 = vpack.c.b16 %v557, %v556
      %v648 = vpack.c.b16 %v559, %v558
      %v649 = vpack.c.b16 %v561, %v560
      %v650 = vpack.c.b16 %v563, %v562
      %v651 = vpack.c.b16 %v565, %v564
      %v652 = vpack.c.b16 %v567, %v566
      %v653 = vpack.c.b16 %v569, %v568
      %v654 = vpack.c.b16 %v571, %v570
      %v655 = vpack.c.b16 %v573, %v572
      %v656 = vpack.c.b16 %v575, %v574
      %v657 = vpack.c.b16 %v577, %v576
      %v658 = vpack.c.b16 %v579, %v578
      %v659 = vpack.c.b16 %v581, %v580
      %v660 = vpack.c.b16 %v583, %v582
      %v661 = vpack.c.b16 %v585, %v584
      %v662 = vpack.c.b16 %v587, %v586
      %v663 = vpack.c.b16 %v589, %v588
      %v664 = vpack.c.b16 %v591, %v590
      %v665 = vpack.c.b16 %v593, %v592
      %v666 = vpack.c.b16 %v595, %v594
      %v667 = vpack.c.b16 %v597, %v596
      %v668 = vpack.c.b16 %v599, %v598
      %v669 = vpack.c.b16 %v600, %v600
      %v678 = vunpack.c.l.b16 %v312
      %v679 = vunpack.c.l.b16 %v313
      %v680 = vunpack.c.l.b16 %v314
      %v681 = vunpack.c.l.b16 %v315
      %v682 = vunpack.c.l.b16 %v316
      %v683 = vunpack.c.l.b16 %v317
      %v684 = vunpack.c.l.b16 %v318
      %v685 = vunpack.c.l.b16 %v319
      %v686 = vpack.c.b16 %v679, %v678
      %v687 = vpack.c.b16 %v681, %v680
      %v688 = vpack.c.b16 %v683, %v682
      %v689 = vpack.c.b16 %v685, %v684
      %vm694 = vcmask 523264
      %v696 = vsel %vm694, %v601, 0
      %v699 = vsel %vm694, %v602, 0
      %v702 = vsel %vm694, %v603, 0
      %v705 = vsel %vm694, %v604, 0
      %v708 = vsel %vm694, %v605, 0
      %v711 = vsel %vm694, %v606, 0
      %v714 = vsel %vm694, %v607, 0
      %v717 = vsel %vm694, %v608, 0
      %v720 = vsel %vm694, %v609, 0
      %v723 = vsel %vm694, %v610, 0
      %v726 = vsel %vm694, %v611, 0
      %v729 = vsel %vm694, %v612, 0
      %v732 = vsel %vm694, %v613, 0
      %v735 = vsel %vm694, %v614, 0
      %v738 = vsel %vm694, %v615, 0
      %v741 = vsel %vm694, %v616, 0
      %v744 = vsel %vm694, %v617, 0
      %v747 = vsel %vm694, %v618, 0
      %v750 = vsel %vm694, %v619, 0
      %v753 = vsel %vm694, %v620, 0
      %v756 = vsel %vm694, %v621, 0
      %v759 = vsel %vm694, %v622, 0
      %v762 = vsel %vm694, %v623, 0
      %v765 = vsel %vm694, %v624, 0
      %v768 = vsel %vm694, %v625, 0
      %v771 = vsel %vm694, %v626, 0
      %v774 = vsel %vm694, %v627, 0
      %v777 = vsel %vm694, %v628, 0
      %v780 = vsel %vm694, %v629, 0
      %v783 = vsel %vm694, %v630, 0
      %v786 = vsel %vm694, %v631, 0
      %v789 = vsel %vm694, %v632, 0
      %v792 = vsel %vm694, %v633, 0
      %v795 = vsel %vm694, %v634, 0
      %v798 = vsel %vm694, %v635, 0
      %v801 = vsel %vm694, %v636, 0
      %v804 = vsel %vm694, %v637, 0
      %v807 = vsel %vm694, %v638, 0
      %v810 = vsel %vm694, %v639, 0
      %v813 = vsel %vm694, %v640, 0
      %v816 = vsel %vm694, %v641, 0
      %v819 = vsel %vm694, %v642, 0
      %v822 = vsel %vm694, %v643, 0
      %v825 = vsel %vm694, %v644, 0
      %v828 = vsel %vm694, %v645, 0
      %v831 = vsel %vm694, %v646, 0
      %v834 = vsel %vm694, %v647, 0
      %v837 = vsel %vm694, %v648, 0
      %v840 = vsel %vm694, %v649, 0
      %v843 = vsel %vm694, %v650, 0
      %v846 = vsel %vm694, %v651, 0
      %v849 = vsel %vm694, %v652, 0
      %v852 = vsel %vm694, %v653, 0
      %v855 = vsel %vm694, %v654, 0
      %v858 = vsel %vm694, %v655, 0
      %v861 = vsel %vm694, %v656, 0
      %v864 = vsel %vm694, %v657, 0
      %v867 = vsel %vm694, %v658, 0
      %v870 = vsel %vm694, %v659, 0
      %v873 = vsel %vm694, %v660, 0
      %v876 = vsel %vm694, %v661, 0
      %v879 = vsel %vm694, %v662, 0
      %v882 = vsel %vm694, %v663, 0
      %v885 = vsel %vm694, %v664, 0
      %v888 = vsel %vm694, %v665, 0
      %v891 = vsel %vm694, %v666, 0
      %v894 = vsel %vm694, %v667, 0
      %v897 = vsel %vm694, %v668, 0
      %v900 = vsel %vm694, %v669, 0
      %902 = vmatprep.subr.bf16.mxu0 0
      %903 = vmatpush1.bf16.msra.mxu0 %v686
      %904 = vmatprep.subr.bf16.mxu0 0
      %905 = vmatpush1.bf16.msra.mxu0 %v687
      %906 = vmatprep.subr.bf16.mxu0 0
      %907 = vmatpush1.bf16.msra.mxu0 %v688
      %908 = vmatprep.subr.bf16.mxu0 0
      %909 = vmatpush1.bf16.msra.mxu0 %v689
      %910 = vmatprep.subr.bf16.mxu0 0
      %911 = vmatpush1.bf16.msra.mxu0 0
      %912 = vmatprep.subr.bf16.mxu0 0
      %913 = vmatpush1.bf16.msra.mxu0 0
      %914 = vmatprep.subr.bf16.mxu0 0
      %915 = vmatpush1.bf16.msra.mxu0 0
      %916 = vmatprep.subr.bf16.mxu0 0
      %917 = vmatpush1.bf16.msra.mxu0 0
      %918 = vmatprep.subr.bf16.mxu0 0
      %919 = vmatpush1.bf16.msra.mxu0 0
      %920 = vmatprep.subr.bf16.mxu0 0
      %921 = vmatpush1.bf16.msra.mxu0 0
      %922 = vmatprep.subr.bf16.mxu0 0
      %923 = vmatpush1.bf16.msra.mxu0 0
      %924 = vmatprep.subr.bf16.mxu0 0
      %925 = vmatpush1.bf16.msra.mxu0 0
      %926 = vmatprep.subr.bf16.mxu0 0
      %927 = vmatpush1.bf16.msra.mxu0 0
      %928 = vmatprep.subr.bf16.mxu0 0
      %929 = vmatpush1.bf16.msra.mxu0 0
      %930 = vmatprep.subr.bf16.mxu0 0
      %931 = vmatpush1.bf16.msra.mxu0 0
      %932 = vmatprep.subr.bf16.mxu0 0
      %933 = vmatpush1.bf16.msra.mxu0 0
      %934 = vmatprep.mubr.bf16.mxu0 0
      %935 = vmatmul.mubr.bf16.gmra.mrb[0].mxu0 %v696
      %v936 = vpop.f32.mrb[0].mxu0
      %v937 = vadd.f32 %v325, %v936
      %v938 = vpop.f32.mrb[0].mxu0
      %v939 = vpop.f32.mrb[0].mxu0
      %v940 = vadd.f32 %v325, %v939
      %v941 = vpop.f32.mrb[0].mxu0
      %942 = vmatprep.mubr.bf16.mxu0 0
      %943 = vmatmul.mubr.bf16.gmra.mrb[0].mxu0 %v699
      %v944 = vpop.f32.mrb[0].mxu0
      %v945 = vadd.f32 %v325, %v944
      %v946 = vpop.f32.mrb[0].mxu0
      %v947 = vpop.f32.mrb[0].mxu0
      %v948 = vadd.f32 %v325, %v947
      %v949 = vpop.f32.mrb[0].mxu0
      %950 = vmatprep.mubr.bf16.mxu0 0
      %951 = vmatmul.mubr.bf16.gmra.mrb[0].mxu0 %v702
      %v952 = vpop.f32.mrb[0].mxu0
      %v953 = vadd.f32 %v325, %v952
      %v954 = vpop.f32.mrb[0].mxu0
      %v955 = vpop.f32.mrb[0].mxu0
      %v956 = vadd.f32 %v325, %v955
      %v957 = vpop.f32.mrb[0].mxu0
      %958 = vmatprep.mubr.bf16.mxu0 0
      %959 = vmatmul.mubr.bf16.gmra.mrb[0].mxu0 %v705
      %v960 = vpop.f32.mrb[0].mxu0
      %v961 = vadd.f32 %v325, %v960
      %v962 = vpop.f32.mrb[0].mxu0
      %v963 = vpop.f32.mrb[0].mxu0
      %v964 = vadd.f32 %v325, %v963
      %v965 = vpop.f32.mrb[0].mxu0
      %966 = vmatprep.mubr.bf16.mxu0 0
      %967 = vmatmul.mubr.bf16.gmra.mrb[0].mxu0 %v708
      %v968 = vpop.f32.mrb[0].mxu0
      %v969 = vadd.f32 %v325, %v968
      %v970 = vpop.f32.mrb[0].mxu0
      %v971 = vpop.f32.mrb[0].mxu0
      %v972 = vadd.f32 %v325, %v971
      %v973 = vpop.f32.mrb[0].mxu0
      %974 = vmatprep.mubr.bf16.mxu0 0
      %975 = vmatmul.mubr.bf16.gmra.mrb[0].mxu0 %v711
      %v976 = vpop.f32.mrb[0].mxu0
      %v977 = vadd.f32 %v325, %v976
      %v978 = vpop.f32.mrb[0].mxu0
      %v979 = vpop.f32.mrb[0].mxu0
      %v980 = vadd.f32 %v325, %v979
      %v981 = vpop.f32.mrb[0].mxu0
      %982 = vmatprep.mubr.bf16.mxu0 0
      %983 = vmatmul.mubr.bf16.gmra.mrb[0].mxu0 %v714
      %v984 = vpop.f32.mrb[0].mxu0
      %v985 = vadd.f32 %v325, %v984
      %v986 = vpop.f32.mrb[0].mxu0
      %v987 = vpop.f32.mrb[0].mxu0
      %v988 = vadd.f32 %v325, %v987
      %v989 = vpop.f32.mrb[0].mxu0
      %990 = vmatprep.mubr.bf16.mxu0 0
      %991 = vmatmul.mubr.bf16.gmra.mrb[0].mxu0 %v717
      %v992 = vpop.f32.mrb[0].mxu0
      %v993 = vadd.f32 %v325, %v992
      %v994 = vpop.f32.mrb[0].mxu0
      %v995 = vpop.f32.mrb[0].mxu0
      %v996 = vadd.f32 %v325, %v995
      %v997 = vpop.f32.mrb[0].mxu0
      %998 = vmatprep.mubr.bf16.mxu0 0
      %999 = vmatmul.mubr.bf16.gmra.mrb[0].mxu0 %v720
      %v1000 = vpop.f32.mrb[0].mxu0
      %v1001 = vadd.f32 %v325, %v1000
      %v1002 = vpop.f32.mrb[0].mxu0
      %v1003 = vpop.f32.mrb[0].mxu0
      %v1004 = vadd.f32 %v325, %v1003
      %v1005 = vpop.f32.mrb[0].mxu0
      %1006 = vmatprep.mubr.bf16.mxu0 0
      %1007 = vmatmul.mubr.bf16.gmra.mrb[0].mxu0 %v723
      %v1008 = vpop.f32.mrb[0].mxu0
      %v1009 = vadd.f32 %v325, %v1008
      %v1010 = vpop.f32.mrb[0].mxu0
      %v1011 = vpop.f32.mrb[0].mxu0
      %v1012 = vadd.f32 %v325, %v1011
      %v1013 = vpop.f32.mrb[0].mxu0
      %1014 = vmatprep.mubr.bf16.mxu0 0
      %1015 = vmatmul.mubr.bf16.gmra.mrb[0].mxu0 %v726
      %v1016 = vpop.f32.mrb[0].mxu0
      %v1017 = vadd.f32 %v325, %v1016
      %v1018 = vpop.f32.mrb[0].mxu0
      %v1019 = vpop.f32.mrb[0].mxu0
      %v1020 = vadd.f32 %v325, %v1019
      %v1021 = vpop.f32.mrb[0].mxu0
      %1022 = vmatprep.mubr.bf16.mxu0 0
      %1023 = vmatmul.mubr.bf16.gmra.mrb[0].mxu0 %v729
      %v1024 = vpop.f32.mrb[0].mxu0
      %v1025 = vadd.f32 %v325, %v1024
      %v1026 = vpop.f32.mrb[0].mxu0
      %v1027 = vpop.f32.mrb[0].mxu0
      %v1028 = vadd.f32 %v325, %v1027
      %v1029 = vpop.f32.mrb[0].mxu0
      %1030 = vmatprep.mubr.bf16.mxu0 0
      %1031 = vmatmul.mubr.bf16.gmra.mrb[0].mxu0 %v732
      %v1032 = vpop.f32.mrb[0].mxu0
      %v1033 = vadd.f32 %v325, %v1032
      %v1034 = vpop.f32.mrb[0].mxu0
      %v1035 = vpop.f32.mrb[0].mxu0
      %v1036 = vadd.f32 %v325, %v1035
      %v1037 = vpop.f32.mrb[0].mxu0
      %1038 = vmatprep.mubr.bf16.mxu0 0
      %1039 = vmatmul.mubr.bf16.gmra.mrb[0].mxu0 %v735
      %v1040 = vpop.f32.mrb[0].mxu0
      %v1041 = vadd.f32 %v325, %v1040
      %v1042 = vpop.f32.mrb[0].mxu0
      %v1043 = vpop.f32.mrb[0].mxu0
      %v1044 = vadd.f32 %v325, %v1043
      %v1045 = vpop.f32.mrb[0].mxu0
      %1046 = vmatprep.mubr.bf16.mxu0 0
      %1047 = vmatmul.mubr.bf16.gmra.mrb[0].mxu0 %v738
      %v1048 = vpop.f32.mrb[0].mxu0
      %v1049 = vadd.f32 %v325, %v1048
      %v1050 = vpop.f32.mrb[0].mxu0
      %v1051 = vpop.f32.mrb[0].mxu0
      %v1052 = vadd.f32 %v325, %v1051
      %v1053 = vpop.f32.mrb[0].mxu0
      %1054 = vmatprep.mubr.bf16.mxu0 0
      %1055 = vmatmul.mubr.bf16.gmra.mrb[0].mxu0 %v741
      %v1056 = vpop.f32.mrb[0].mxu0
      %v1057 = vadd.f32 %v325, %v1056
      %v1058 = vpop.f32.mrb[0].mxu0
      %v1059 = vpop.f32.mrb[0].mxu0
      %v1060 = vadd.f32 %v325, %v1059
      %v1061 = vpop.f32.mrb[0].mxu0
      %1062 = vmatprep.mubr.bf16.mxu0 0
      %1063 = vmatmul.mubr.bf16.gmra.mrb[0].mxu0 %v744
      %v1064 = vpop.f32.mrb[0].mxu0
      %v1065 = vadd.f32 %v325, %v1064
      %v1066 = vpop.f32.mrb[0].mxu0
      %v1067 = vpop.f32.mrb[0].mxu0
      %v1068 = vadd.f32 %v325, %v1067
      %v1069 = vpop.f32.mrb[0].mxu0
      %1070 = vmatprep.mubr.bf16.mxu0 0
      %1071 = vmatmul.mubr.bf16.gmra.mrb[0].mxu0 %v747
      %v1072 = vpop.f32.mrb[0].mxu0
      %v1073 = vadd.f32 %v325, %v1072
      %v1074 = vpop.f32.mrb[0].mxu0
      %v1075 = vpop.f32.mrb[0].mxu0
      %v1076 = vadd.f32 %v325, %v1075
      %v1077 = vpop.f32.mrb[0].mxu0
      %1078 = vmatprep.mubr.bf16.mxu0 0
      %1079 = vmatmul.mubr.bf16.gmra.mrb[0].mxu0 %v750
      %v1080 = vpop.f32.mrb[0].mxu0
      %v1081 = vadd.f32 %v325, %v1080
      %v1082 = vpop.f32.mrb[0].mxu0
      %v1083 = vpop.f32.mrb[0].mxu0
      %v1084 = vadd.f32 %v325, %v1083
      %v1085 = vpop.f32.mrb[0].mxu0
      %1086 = vmatprep.mubr.bf16.mxu0 0
      %1087 = vmatmul.mubr.bf16.gmra.mrb[0].mxu0 %v753
      %v1088 = vpop.f32.mrb[0].mxu0
      %v1089 = vadd.f32 %v325, %v1088
      %v1090 = vpop.f32.mrb[0].mxu0
      %v1091 = vpop.f32.mrb[0].mxu0
      %v1092 = vadd.f32 %v325, %v1091
      %v1093 = vpop.f32.mrb[0].mxu0
      %1094 = vmatprep.mubr.bf16.mxu0 0
      %1095 = vmatmul.mubr.bf16.gmra.mrb[0].mxu0 %v756
      %v1096 = vpop.f32.mrb[0].mxu0
      %v1097 = vadd.f32 %v325, %v1096
      %v1098 = vpop.f32.mrb[0].mxu0
      %v1099 = vpop.f32.mrb[0].mxu0
      %v1100 = vadd.f32 %v325, %v1099
      %v1101 = vpop.f32.mrb[0].mxu0
      %1102 = vmatprep.mubr.bf16.mxu0 0
      %1103 = vmatmul.mubr.bf16.gmra.mrb[0].mxu0 %v759
      %v1104 = vpop.f32.mrb[0].mxu0
      %v1105 = vadd.f32 %v325, %v1104
      %v1106 = vpop.f32.mrb[0].mxu0
      %v1107 = vpop.f32.mrb[0].mxu0
      %v1108 = vadd.f32 %v325, %v1107
      %v1109 = vpop.f32.mrb[0].mxu0
      %1110 = vmatprep.mubr.bf16.mxu0 0
      %1111 = vmatmul.mubr.bf16.gmra.mrb[0].mxu0 %v762
      %v1112 = vpop.f32.mrb[0].mxu0
      %v1113 = vadd.f32 %v325, %v1112
      %v1114 = vpop.f32.mrb[0].mxu0
      %v1115 = vpop.f32.mrb[0].mxu0
      %v1116 = vadd.f32 %v325, %v1115
      %v1117 = vpop.f32.mrb[0].mxu0
      %1118 = vmatprep.mubr.bf16.mxu0 0
      %1119 = vmatmul.mubr.bf16.gmra.mrb[0].mxu0 %v765
      %v1120 = vpop.f32.mrb[0].mxu0
      %v1121 = vadd.f32 %v325, %v1120
      %v1122 = vpop.f32.mrb[0].mxu0
      %v1123 = vpop.f32.mrb[0].mxu0
      %v1124 = vadd.f32 %v325, %v1123
      %v1125 = vpop.f32.mrb[0].mxu0
      %1126 = vmatprep.mubr.bf16.mxu0 0
      %1127 = vmatmul.mubr.bf16.gmra.mrb[0].mxu0 %v768
      %v1128 = vpop.f32.mrb[0].mxu0
      %v1129 = vadd.f32 %v325, %v1128
      %v1130 = vpop.f32.mrb[0].mxu0
      %v1131 = vpop.f32.mrb[0].mxu0
      %v1132 = vadd.f32 %v325, %v1131
      %v1133 = vpop.f32.mrb[0].mxu0
      %1134 = vmatprep.mubr.bf16.mxu0 0
      %1135 = vmatmul.mubr.bf16.gmra.mrb[0].mxu0 %v771
      %v1136 = vpop.f32.mrb[0].mxu0
      %v1137 = vadd.f32 %v325, %v1136
      %v1138 = vpop.f32.mrb[0].mxu0
      %v1139 = vpop.f32.mrb[0].mxu0
      %v1140 = vadd.f32 %v325, %v1139
      %v1141 = vpop.f32.mrb[0].mxu0
      %1142 = vmatprep.mubr.bf16.mxu0 0
      %1143 = vmatmul.mubr.bf16.gmra.mrb[0].mxu0 %v774
      %v1144 = vpop.f32.mrb[0].mxu0
      %v1145 = vadd.f32 %v325, %v1144
      %v1146 = vpop.f32.mrb[0].mxu0
      %v1147 = vpop.f32.mrb[0].mxu0
      %v1148 = vadd.f32 %v325, %v1147
      %v1149 = vpop.f32.mrb[0].mxu0
      %1150 = vmatprep.mubr.bf16.mxu0 0
      %1151 = vmatmul.mubr.bf16.gmra.mrb[0].mxu0 %v777
      %v1152 = vpop.f32.mrb[0].mxu0
      %v1153 = vadd.f32 %v325, %v1152
      %v1154 = vpop.f32.mrb[0].mxu0
      %v1155 = vpop.f32.mrb[0].mxu0
      %v1156 = vadd.f32 %v325, %v1155
      %v1157 = vpop.f32.mrb[0].mxu0
      %1158 = vmatprep.mubr.bf16.mxu0 0
      %1159 = vmatmul.mubr.bf16.gmra.mrb[0].mxu0 %v780
      %v1160 = vpop.f32.mrb[0].mxu0
      %v1161 = vadd.f32 %v325, %v1160
      %v1162 = vpop.f32.mrb[0].mxu0
      %v1163 = vpop.f32.mrb[0].mxu0
      %v1164 = vadd.f32 %v325, %v1163
      %v1165 = vpop.f32.mrb[0].mxu0
      %1166 = vmatprep.mubr.bf16.mxu0 0
      %1167 = vmatmul.mubr.bf16.gmra.mrb[0].mxu0 %v783
      %v1168 = vpop.f32.mrb[0].mxu0
      %v1169 = vadd.f32 %v325, %v1168
      %v1170 = vpop.f32.mrb[0].mxu0
      %v1171 = vpop.f32.mrb[0].mxu0
      %v1172 = vadd.f32 %v325, %v1171
      %v1173 = vpop.f32.mrb[0].mxu0
      %1174 = vmatprep.mubr.bf16.mxu0 0
      %1175 = vmatmul.mubr.bf16.gmra.mrb[0].mxu0 %v786
      %v1176 = vpop.f32.mrb[0].mxu0
      %v1177 = vadd.f32 %v325, %v1176
      %v1178 = vpop.f32.mrb[0].mxu0
      %v1179 = vpop.f32.mrb[0].mxu0
      %v1180 = vadd.f32 %v325, %v1179
      %v1181 = vpop.f32.mrb[0].mxu0
      %1182 = vmatprep.mubr.bf16.mxu0 0
      %1183 = vmatmul.mubr.bf16.gmra.mrb[0].mxu0 %v789
      %v1184 = vpop.f32.mrb[0].mxu0
      %v1185 = vadd.f32 %v325, %v1184
      %v1186 = vpop.f32.mrb[0].mxu0
      %v1187 = vpop.f32.mrb[0].mxu0
      %v1188 = vadd.f32 %v325, %v1187
      %v1189 = vpop.f32.mrb[0].mxu0
      %1190 = vmatprep.mubr.bf16.mxu0 0
      %1191 = vmatmul.mubr.bf16.gmra.mrb[0].mxu0 %v792
      %v1192 = vpop.f32.mrb[0].mxu0
      %v1193 = vadd.f32 %v325, %v1192
      %v1194 = vpop.f32.mrb[0].mxu0
      %v1195 = vpop.f32.mrb[0].mxu0
      %v1196 = vadd.f32 %v325, %v1195
      %v1197 = vpop.f32.mrb[0].mxu0
      %1198 = vmatprep.mubr.bf16.mxu0 0
      %1199 = vmatmul.mubr.bf16.gmra.mrb[0].mxu0 %v795
      %v1200 = vpop.f32.mrb[0].mxu0
      %v1201 = vadd.f32 %v325, %v1200
      %v1202 = vpop.f32.mrb[0].mxu0
      %v1203 = vpop.f32.mrb[0].mxu0
      %v1204 = vadd.f32 %v325, %v1203
      %v1205 = vpop.f32.mrb[0].mxu0
      %1206 = vmatprep.mubr.bf16.mxu0 0
      %1207 = vmatmul.mubr.bf16.gmra.mrb[0].mxu0 %v798
      %v1208 = vpop.f32.mrb[0].mxu0
      %v1209 = vadd.f32 %v325, %v1208
      %v1210 = vpop.f32.mrb[0].mxu0
      %v1211 = vpop.f32.mrb[0].mxu0
      %v1212 = vadd.f32 %v325, %v1211
      %v1213 = vpop.f32.mrb[0].mxu0
      %1214 = vmatprep.mubr.bf16.mxu0 0
      %1215 = vmatmul.mubr.bf16.gmra.mrb[0].mxu0 %v801
      %v1216 = vpop.f32.mrb[0].mxu0
      %v1217 = vadd.f32 %v325, %v1216
      %v1218 = vpop.f32.mrb[0].mxu0
      %v1219 = vpop.f32.mrb[0].mxu0
      %v1220 = vadd.f32 %v325, %v1219
      %v1221 = vpop.f32.mrb[0].mxu0
      %1222 = vmatprep.mubr.bf16.mxu0 0
      %1223 = vmatmul.mubr.bf16.gmra.mrb[0].mxu0 %v804
      %v1224 = vpop.f32.mrb[0].mxu0
      %v1225 = vadd.f32 %v325, %v1224
      %v1226 = vpop.f32.mrb[0].mxu0
      %v1227 = vpop.f32.mrb[0].mxu0
      %v1228 = vadd.f32 %v325, %v1227
      %v1229 = vpop.f32.mrb[0].mxu0
      %1230 = vmatprep.mubr.bf16.mxu0 0
      %1231 = vmatmul.mubr.bf16.gmra.mrb[0].mxu0 %v807
      %v1232 = vpop.f32.mrb[0].mxu0
      %v1233 = vadd.f32 %v325, %v1232
      %v1234 = vpop.f32.mrb[0].mxu0
      %v1235 = vpop.f32.mrb[0].mxu0
      %v1236 = vadd.f32 %v325, %v1235
      %v1237 = vpop.f32.mrb[0].mxu0
      %1238 = vmatprep.mubr.bf16.mxu0 0
      %1239 = vmatmul.mubr.bf16.gmra.mrb[0].mxu0 %v810
      %v1240 = vpop.f32.mrb[0].mxu0
      %v1241 = vadd.f32 %v325, %v1240
      %v1242 = vpop.f32.mrb[0].mxu0
      %v1243 = vpop.f32.mrb[0].mxu0
      %v1244 = vadd.f32 %v325, %v1243
      %v1245 = vpop.f32.mrb[0].mxu0
      %1246 = vmatprep.mubr.bf16.mxu0 0
      %1247 = vmatmul.mubr.bf16.gmra.mrb[0].mxu0 %v813
      %v1248 = vpop.f32.mrb[0].mxu0
      %v1249 = vadd.f32 %v325, %v1248
      %v1250 = vpop.f32.mrb[0].mxu0
      %v1251 = vpop.f32.mrb[0].mxu0
      %v1252 = vadd.f32 %v325, %v1251
      %v1253 = vpop.f32.mrb[0].mxu0
      %1254 = vmatprep.mubr.bf16.mxu0 0
      %1255 = vmatmul.mubr.bf16.gmra.mrb[0].mxu0 %v816
      %v1256 = vpop.f32.mrb[0].mxu0
      %v1257 = vadd.f32 %v325, %v1256
      %v1258 = vpop.f32.mrb[0].mxu0
      %v1259 = vpop.f32.mrb[0].mxu0
      %v1260 = vadd.f32 %v325, %v1259
      %v1261 = vpop.f32.mrb[0].mxu0
      %1262 = vmatprep.mubr.bf16.mxu0 0
      %1263 = vmatmul.mubr.bf16.gmra.mrb[0].mxu0 %v819
      %v1264 = vpop.f32.mrb[0].mxu0
      %v1265 = vadd.f32 %v325, %v1264
      %v1266 = vpop.f32.mrb[0].mxu0
      %v1267 = vpop.f32.mrb[0].mxu0
      %v1268 = vadd.f32 %v325, %v1267
      %v1269 = vpop.f32.mrb[0].mxu0
      %1270 = vmatprep.mubr.bf16.mxu0 0
      %1271 = vmatmul.mubr.bf16.gmra.mrb[0].mxu0 %v822
      %v1272 = vpop.f32.mrb[0].mxu0
      %v1273 = vadd.f32 %v325, %v1272
      %v1274 = vpop.f32.mrb[0].mxu0
      %v1275 = vpop.f32.mrb[0].mxu0
      %v1276 = vadd.f32 %v325, %v1275
      %v1277 = vpop.f32.mrb[0].mxu0
      %1278 = vmatprep.mubr.bf16.mxu0 0
      %1279 = vmatmul.mubr.bf16.gmra.mrb[0].mxu0 %v825
      %v1280 = vpop.f32.mrb[0].mxu0
      %v1281 = vadd.f32 %v325, %v1280
      %v1282 = vpop.f32.mrb[0].mxu0
      %v1283 = vpop.f32.mrb[0].mxu0
      %v1284 = vadd.f32 %v325, %v1283
      %v1285 = vpop.f32.mrb[0].mxu0
      %1286 = vmatprep.mubr.bf16.mxu0 0
      %1287 = vmatmul.mubr.bf16.gmra.mrb[0].mxu0 %v828
      %v1288 = vpop.f32.mrb[0].mxu0
      %v1289 = vadd.f32 %v325, %v1288
      %v1290 = vpop.f32.mrb[0].mxu0
      %v1291 = vpop.f32.mrb[0].mxu0
      %v1292 = vadd.f32 %v325, %v1291
      %v1293 = vpop.f32.mrb[0].mxu0
      %1294 = vmatprep.mubr.bf16.mxu0 0
      %1295 = vmatmul.mubr.bf16.gmra.mrb[0].mxu0 %v831
      %v1296 = vpop.f32.mrb[0].mxu0
      %v1297 = vadd.f32 %v325, %v1296
      %v1298 = vpop.f32.mrb[0].mxu0
      %v1299 = vpop.f32.mrb[0].mxu0
      %v1300 = vadd.f32 %v325, %v1299
      %v1301 = vpop.f32.mrb[0].mxu0
      %1302 = vmatprep.mubr.bf16.mxu0 0
      %1303 = vmatmul.mubr.bf16.gmra.mrb[0].mxu0 %v834
      %v1304 = vpop.f32.mrb[0].mxu0
      %v1305 = vadd.f32 %v325, %v1304
      %v1306 = vpop.f32.mrb[0].mxu0
      %v1307 = vpop.f32.mrb[0].mxu0
      %v1308 = vadd.f32 %v325, %v1307
      %v1309 = vpop.f32.mrb[0].mxu0
      %1310 = vmatprep.mubr.bf16.mxu0 0
      %1311 = vmatmul.mubr.bf16.gmra.mrb[0].mxu0 %v837
      %v1312 = vpop.f32.mrb[0].mxu0
      %v1313 = vadd.f32 %v325, %v1312
      %v1314 = vpop.f32.mrb[0].mxu0
      %v1315 = vpop.f32.mrb[0].mxu0
      %v1316 = vadd.f32 %v325, %v1315
      %v1317 = vpop.f32.mrb[0].mxu0
      %1318 = vmatprep.mubr.bf16.mxu0 0
      %1319 = vmatmul.mubr.bf16.gmra.mrb[0].mxu0 %v840
      %v1320 = vpop.f32.mrb[0].mxu0
      %v1321 = vadd.f32 %v325, %v1320
      %v1322 = vpop.f32.mrb[0].mxu0
      %v1323 = vpop.f32.mrb[0].mxu0
      %v1324 = vadd.f32 %v325, %v1323
      %v1325 = vpop.f32.mrb[0].mxu0
      %1326 = vmatprep.mubr.bf16.mxu0 0
      %1327 = vmatmul.mubr.bf16.gmra.mrb[0].mxu0 %v843
      %v1328 = vpop.f32.mrb[0].mxu0
      %v1329 = vadd.f32 %v325, %v1328
      %v1330 = vpop.f32.mrb[0].mxu0
      %v1331 = vpop.f32.mrb[0].mxu0
      %v1332 = vadd.f32 %v325, %v1331
      %v1333 = vpop.f32.mrb[0].mxu0
      %1334 = vmatprep.mubr.bf16.mxu0 0
      %1335 = vmatmul.mubr.bf16.gmra.mrb[0].mxu0 %v846
      %v1336 = vpop.f32.mrb[0].mxu0
      %v1337 = vadd.f32 %v325, %v1336
      %v1338 = vpop.f32.mrb[0].mxu0
      %v1339 = vpop.f32.mrb[0].mxu0
      %v1340 = vadd.f32 %v325, %v1339
      %v1341 = vpop.f32.mrb[0].mxu0
      %1342 = vmatprep.mubr.bf16.mxu0 0
      %1343 = vmatmul.mubr.bf16.gmra.mrb[0].mxu0 %v849
      %v1344 = vpop.f32.mrb[0].mxu0
      %v1345 = vadd.f32 %v325, %v1344
      %v1346 = vpop.f32.mrb[0].mxu0
      %v1347 = vpop.f32.mrb[0].mxu0
      %v1348 = vadd.f32 %v325, %v1347
      %v1349 = vpop.f32.mrb[0].mxu0
      %1350 = vmatprep.mubr.bf16.mxu0 0
      %1351 = vmatmul.mubr.bf16.gmra.mrb[0].mxu0 %v852
      %v1352 = vpop.f32.mrb[0].mxu0
      %v1353 = vadd.f32 %v325, %v1352
      %v1354 = vpop.f32.mrb[0].mxu0
      %v1355 = vpop.f32.mrb[0].mxu0
      %v1356 = vadd.f32 %v325, %v1355
      %v1357 = vpop.f32.mrb[0].mxu0
      %1358 = vmatprep.mubr.bf16.mxu0 0
      %1359 = vmatmul.mubr.bf16.gmra.mrb[0].mxu0 %v855
      %v1360 = vpop.f32.mrb[0].mxu0
      %v1361 = vadd.f32 %v325, %v1360
      %v1362 = vpop.f32.mrb[0].mxu0
      %v1363 = vpop.f32.mrb[0].mxu0
      %v1364 = vadd.f32 %v325, %v1363
      %v1365 = vpop.f32.mrb[0].mxu0
      %1366 = vmatprep.mubr.bf16.mxu0 0
      %1367 = vmatmul.mubr.bf16.gmra.mrb[0].mxu0 %v858
      %v1368 = vpop.f32.mrb[0].mxu0
      %v1369 = vadd.f32 %v325, %v1368
      %v1370 = vpop.f32.mrb[0].mxu0
      %v1371 = vpop.f32.mrb[0].mxu0
      %v1372 = vadd.f32 %v325, %v1371
      %v1373 = vpop.f32.mrb[0].mxu0
      %1374 = vmatprep.mubr.bf16.mxu0 0
      %1375 = vmatmul.mubr.bf16.gmra.mrb[0].mxu0 %v861
      %v1376 = vpop.f32.mrb[0].mxu0
      %v1377 = vadd.f32 %v325, %v1376
      %v1378 = vpop.f32.mrb[0].mxu0
      %v1379 = vpop.f32.mrb[0].mxu0
      %v1380 = vadd.f32 %v325, %v1379
      %v1381 = vpop.f32.mrb[0].mxu0
      %1382 = vmatprep.mubr.bf16.mxu0 0
      %1383 = vmatmul.mubr.bf16.gmra.mrb[0].mxu0 %v864
      %v1384 = vpop.f32.mrb[0].mxu0
      %v1385 = vadd.f32 %v325, %v1384
      %v1386 = vpop.f32.mrb[0].mxu0
      %v1387 = vpop.f32.mrb[0].mxu0
      %v1388 = vadd.f32 %v325, %v1387
      %v1389 = vpop.f32.mrb[0].mxu0
      %1390 = vmatprep.mubr.bf16.mxu0 0
      %1391 = vmatmul.mubr.bf16.gmra.mrb[0].mxu0 %v867
      %v1392 = vpop.f32.mrb[0].mxu0
      %v1393 = vadd.f32 %v325, %v1392
      %v1394 = vpop.f32.mrb[0].mxu0
      %v1395 = vpop.f32.mrb[0].mxu0
      %v1396 = vadd.f32 %v325, %v1395
      %v1397 = vpop.f32.mrb[0].mxu0
      %1398 = vmatprep.mubr.bf16.mxu0 0
      %1399 = vmatmul.mubr.bf16.gmra.mrb[0].mxu0 %v870
      %v1400 = vpop.f32.mrb[0].mxu0
      %v1401 = vadd.f32 %v325, %v1400
      %v1402 = vpop.f32.mrb[0].mxu0
      %v1403 = vpop.f32.mrb[0].mxu0
      %v1404 = vadd.f32 %v325, %v1403
      %v1405 = vpop.f32.mrb[0].mxu0
      %1406 = vmatprep.mubr.bf16.mxu0 0
      %1407 = vmatmul.mubr.bf16.gmra.mrb[0].mxu0 %v873
      %v1408 = vpop.f32.mrb[0].mxu0
      %v1409 = vadd.f32 %v325, %v1408
      %v1410 = vpop.f32.mrb[0].mxu0
      %v1411 = vpop.f32.mrb[0].mxu0
      %v1412 = vadd.f32 %v325, %v1411
      %v1413 = vpop.f32.mrb[0].mxu0
      %1414 = vmatprep.mubr.bf16.mxu0 0
      %1415 = vmatmul.mubr.bf16.gmra.mrb[0].mxu0 %v876
      %v1416 = vpop.f32.mrb[0].mxu0
      %v1417 = vadd.f32 %v325, %v1416
      %v1418 = vpop.f32.mrb[0].mxu0
      %v1419 = vpop.f32.mrb[0].mxu0
      %v1420 = vadd.f32 %v325, %v1419
      %v1421 = vpop.f32.mrb[0].mxu0
      %1422 = vmatprep.mubr.bf16.mxu0 0
      %1423 = vmatmul.mubr.bf16.gmra.mrb[0].mxu0 %v879
      %v1424 = vpop.f32.mrb[0].mxu0
      %v1425 = vadd.f32 %v325, %v1424
      %v1426 = vpop.f32.mrb[0].mxu0
      %v1427 = vpop.f32.mrb[0].mxu0
      %v1428 = vadd.f32 %v325, %v1427
      %v1429 = vpop.f32.mrb[0].mxu0
      %1430 = vmatprep.mubr.bf16.mxu0 0
      %1431 = vmatmul.mubr.bf16.gmra.mrb[0].mxu0 %v882
      %v1432 = vpop.f32.mrb[0].mxu0
      %v1433 = vadd.f32 %v325, %v1432
      %v1434 = vpop.f32.mrb[0].mxu0
      %v1435 = vpop.f32.mrb[0].mxu0
      %v1436 = vadd.f32 %v325, %v1435
      %v1437 = vpop.f32.mrb[0].mxu0
      %1438 = vmatprep.mubr.bf16.mxu0 0
      %1439 = vmatmul.mubr.bf16.gmra.mrb[0].mxu0 %v885
      %v1440 = vpop.f32.mrb[0].mxu0
      %v1441 = vadd.f32 %v325, %v1440
      %v1442 = vpop.f32.mrb[0].mxu0
      %v1443 = vpop.f32.mrb[0].mxu0
      %v1444 = vadd.f32 %v325, %v1443
      %v1445 = vpop.f32.mrb[0].mxu0
      %1446 = vmatprep.mubr.bf16.mxu0 0
      %1447 = vmatmul.mubr.bf16.gmra.mrb[0].mxu0 %v888
      %v1448 = vpop.f32.mrb[0].mxu0
      %v1449 = vadd.f32 %v325, %v1448
      %v1450 = vpop.f32.mrb[0].mxu0
      %v1451 = vpop.f32.mrb[0].mxu0
      %v1452 = vadd.f32 %v325, %v1451
      %v1453 = vpop.f32.mrb[0].mxu0
      %1454 = vmatprep.mubr.bf16.mxu0 0
      %1455 = vmatmul.mubr.bf16.gmra.mrb[0].mxu0 %v891
      %v1456 = vpop.f32.mrb[0].mxu0
      %v1457 = vadd.f32 %v325, %v1456
      %v1458 = vpop.f32.mrb[0].mxu0
      %v1459 = vpop.f32.mrb[0].mxu0
      %v1460 = vadd.f32 %v325, %v1459
      %v1461 = vpop.f32.mrb[0].mxu0
      %1462 = vmatprep.mubr.bf16.mxu0 0
      %1463 = vmatmul.mubr.bf16.gmra.mrb[0].mxu0 %v894
      %v1464 = vpop.f32.mrb[0].mxu0
      %v1465 = vadd.f32 %v325, %v1464
      %v1466 = vpop.f32.mrb[0].mxu0
      %v1467 = vpop.f32.mrb[0].mxu0
      %v1468 = vadd.f32 %v325, %v1467
      %v1469 = vpop.f32.mrb[0].mxu0
      %1470 = vmatprep.mubr.bf16.mxu0 0
      %1471 = vmatmul.mubr.bf16.gmra.mrb[0].mxu0 %v897
      %v1472 = vpop.f32.mrb[0].mxu0
      %v1473 = vadd.f32 %v325, %v1472
      %v1474 = vpop.f32.mrb[0].mxu0
      %v1475 = vpop.f32.mrb[0].mxu0
      %v1476 = vadd.f32 %v325, %v1475
      %v1477 = vpop.f32.mrb[0].mxu0
      %1478 = vmatprep.mubr.bf16.mxu0 0
      %1479 = vmatmul.mubr.bf16.gmra.mrb[0].mxu0 %v900
      %v1480 = vpop.f32.mrb[0].mxu0
      %v1481 = vadd.f32 %v325, %v1480
      %v1482 = vpop.f32.mrb[0].mxu0
      %v1483 = vpop.f32.mrb[0].mxu0
      %v1484 = vpop.f32.mrb[0].mxu0
      %1485 = vdwg.mxu0
      %v1486 = vtanh.pop %v937
      %v1487 = vtanh.pop %v940
      %v1488 = vtanh.pop %v945
      %v1489 = vtanh.pop %v948
      %v1490 = vtanh.pop %v953
      %v1491 = vtanh.pop %v956
      %v1492 = vtanh.pop %v961
      %v1493 = vtanh.pop %v964
      %v1494 = vtanh.pop %v969
      %v1495 = vtanh.pop %v972
      %v1496 = vtanh.pop %v977
      %v1497 = vtanh.pop %v980
      %v1498 = vtanh.pop %v985
      %v1499 = vtanh.pop %v988
      %v1500 = vtanh.pop %v993
      %v1501 = vtanh.pop %v996
      %v1502 = vtanh.pop %v1001
      %v1503 = vtanh.pop %v1004
      %v1504 = vtanh.pop %v1009
      %v1505 = vtanh.pop %v1012
      %v1506 = vtanh.pop %v1017
      %v1507 = vtanh.pop %v1020
      %v1508 = vtanh.pop %v1025
      %v1509 = vtanh.pop %v1028
      %v1510 = vtanh.pop %v1033
      %v1511 = vtanh.pop %v1036
      %v1512 = vtanh.pop %v1041
      %v1513 = vtanh.pop %v1044
      %v1514 = vtanh.pop %v1049
      %v1515 = vtanh.pop %v1052
      %v1516 = vtanh.pop %v1057
      %v1517 = vtanh.pop %v1060
      %v1518 = vtanh.pop %v1065
      %v1519 = vtanh.pop %v1068
      %v1520 = vtanh.pop %v1073
      %v1521 = vtanh.pop %v1076
      %v1522 = vtanh.pop %v1081
      %v1523 = vtanh.pop %v1084
      %v1524 = vtanh.pop %v1089
      %v1525 = vtanh.pop %v1092
      %v1526 = vtanh.pop %v1097
      %v1527 = vtanh.pop %v1100
      %v1528 = vtanh.pop %v1105
      %v1529 = vtanh.pop %v1108
      %v1530 = vtanh.pop %v1113
      %v1531 = vtanh.pop %v1116
      %v1532 = vtanh.pop %v1121
      %v1533 = vtanh.pop %v1124
      %v1534 = vtanh.pop %v1129
      %v1535 = vtanh.pop %v1132
      %v1536 = vtanh.pop %v1137
      %v1537 = vtanh.pop %v1140
      %v1538 = vtanh.pop %v1145
      %v1539 = vtanh.pop %v1148
      %v1540 = vtanh.pop %v1153
      %v1541 = vtanh.pop %v1156
      %v1542 = vtanh.pop %v1161
      %v1543 = vtanh.pop %v1164
      %v1544 = vtanh.pop %v1169
      %v1545 = vtanh.pop %v1172
      %v1546 = vtanh.pop %v1177
      %v1547 = vtanh.pop %v1180
      %v1548 = vtanh.pop %v1185
      %v1549 = vtanh.pop %v1188
      %v1550 = vtanh.pop %v1193
      %v1551 = vtanh.pop %v1196
      %v1552 = vtanh.pop %v1201
      %v1553 = vtanh.pop %v1204
      %v1554 = vtanh.pop %v1209
      %v1555 = vtanh.pop %v1212
      %v1556 = vtanh.pop %v1217
      %v1557 = vtanh.pop %v1220
      %v1558 = vtanh.pop %v1225
      %v1559 = vtanh.pop %v1228
      %v1560 = vtanh.pop %v1233
      %v1561 = vtanh.pop %v1236
      %v1562 = vtanh.pop %v1241
      %v1563 = vtanh.pop %v1244
      %v1564 = vtanh.pop %v1249
      %v1565 = vtanh.pop %v1252
      %v1566 = vtanh.pop %v1257
      %v1567 = vtanh.pop %v1260
      %v1568 = vtanh.pop %v1265
      %v1569 = vtanh.pop %v1268
      %v1570 = vtanh.pop %v1273
      %v1571 = vtanh.pop %v1276
      %v1572 = vtanh.pop %v1281
      %v1573 = vtanh.pop %v1284
      %v1574 = vtanh.pop %v1289
      %v1575 = vtanh.pop %v1292
      %v1576 = vtanh.pop %v1297
      %v1577 = vtanh.pop %v1300
      %v1578 = vtanh.pop %v1305
      %v1579 = vtanh.pop %v1308
      %v1580 = vtanh.pop %v1313
      %v1581 = vtanh.pop %v1316
      %v1582 = vtanh.pop %v1321
      %v1583 = vtanh.pop %v1324
      %v1584 = vtanh.pop %v1329
      %v1585 = vtanh.pop %v1332
      %v1586 = vtanh.pop %v1337
      %v1587 = vtanh.pop %v1340
      %v1588 = vtanh.pop %v1345
      %v1589 = vtanh.pop %v1348
      %v1590 = vtanh.pop %v1353
      %v1591 = vtanh.pop %v1356
      %v1592 = vtanh.pop %v1361
      %v1593 = vtanh.pop %v1364
      %v1594 = vtanh.pop %v1369
      %v1595 = vtanh.pop %v1372
      %v1596 = vtanh.pop %v1377
      %v1597 = vtanh.pop %v1380
      %v1598 = vtanh.pop %v1385
      %v1599 = vtanh.pop %v1388
      %v1600 = vtanh.pop %v1393
      %v1601 = vtanh.pop %v1396
      %v1602 = vtanh.pop %v1401
      %v1603 = vtanh.pop %v1404
      %v1604 = vtanh.pop %v1409
      %v1605 = vtanh.pop %v1412
      %v1606 = vtanh.pop %v1417
      %v1607 = vtanh.pop %v1420
      %v1608 = vtanh.pop %v1425
      %v1609 = vtanh.pop %v1428
      %v1610 = vtanh.pop %v1433
      %v1611 = vtanh.pop %v1436
      %v1612 = vtanh.pop %v1441
      %v1613 = vtanh.pop %v1444
      %v1614 = vtanh.pop %v1449
      %v1615 = vtanh.pop %v1452
      %v1616 = vtanh.pop %v1457
      %v1617 = vtanh.pop %v1460
      %v1618 = vtanh.pop %v1465
      %v1619 = vtanh.pop %v1468
      %v1620 = vtanh.pop %v1473
      %v1621 = vtanh.pop %v1476
      %v1622 = vtanh.pop %v1481
      %v1623 = vpack.c.bf16 %v1487, %v1486
      %v1624 = vpack.c.bf16 %v1489, %v1488
      %v1625 = vpack.c.bf16 %v1491, %v1490
      %v1626 = vpack.c.bf16 %v1493, %v1492
      %v1627 = vpack.c.bf16 %v1495, %v1494
      %v1628 = vpack.c.bf16 %v1497, %v1496
      %v1629 = vpack.c.bf16 %v1499, %v1498
      %v1630 = vpack.c.bf16 %v1501, %v1500
      %v1631 = vpack.c.bf16 %v1503, %v1502
      %v1632 = vpack.c.bf16 %v1505, %v1504
      %v1633 = vpack.c.bf16 %v1507, %v1506
      %v1634 = vpack.c.bf16 %v1509, %v1508
      %v1635 = vpack.c.bf16 %v1511, %v1510
      %v1636 = vpack.c.bf16 %v1513, %v1512
      %v1637 = vpack.c.bf16 %v1515, %v1514
      %v1638 = vpack.c.bf16 %v1517, %v1516
      %v1639 = vpack.c.bf16 %v1519, %v1518
      %v1640 = vpack.c.bf16 %v1521, %v1520
      %v1641 = vpack.c.bf16 %v1523, %v1522
      %v1642 = vpack.c.bf16 %v1525, %v1524
      %v1643 = vpack.c.bf16 %v1527, %v1526
      %v1644 = vpack.c.bf16 %v1529, %v1528
      %v1645 = vpack.c.bf16 %v1531, %v1530
      %v1646 = vpack.c.bf16 %v1533, %v1532
      %v1647 = vpack.c.bf16 %v1535, %v1534
      %v1648 = vpack.c.bf16 %v1537, %v1536
      %v1649 = vpack.c.bf16 %v1539, %v1538
      %v1650 = vpack.c.bf16 %v1541, %v1540
      %v1651 = vpack.c.bf16 %v1543, %v1542
      %v1652 = vpack.c.bf16 %v1545, %v1544
      %v1653 = vpack.c.bf16 %v1547, %v1546
      %v1654 = vpack.c.bf16 %v1549, %v1548
      %v1655 = vpack.c.bf16 %v1551, %v1550
      %v1656 = vpack.c.bf16 %v1553, %v1552
      %v1657 = vpack.c.bf16 %v1555, %v1554
      %v1658 = vpack.c.bf16 %v1557, %v1556
      %v1659 = vpack.c.bf16 %v1559, %v1558
      %v1660 = vpack.c.bf16 %v1561, %v1560
      %v1661 = vpack.c.bf16 %v1563, %v1562
      %v1662 = vpack.c.bf16 %v1565, %v1564
      %v1663 = vpack.c.bf16 %v1567, %v1566
      %v1664 = vpack.c.bf16 %v1569, %v1568
      %v1665 = vpack.c.bf16 %v1571, %v1570
      %v1666 = vpack.c.bf16 %v1573, %v1572
      %v1667 = vpack.c.bf16 %v1575, %v1574
      %v1668 = vpack.c.bf16 %v1577, %v1576
      %v1669 = vpack.c.bf16 %v1579, %v1578
      %v1670 = vpack.c.bf16 %v1581, %v1580
      %v1671 = vpack.c.bf16 %v1583, %v1582
      %v1672 = vpack.c.bf16 %v1585, %v1584
      %v1673 = vpack.c.bf16 %v1587, %v1586
      %v1674 = vpack.c.bf16 %v1589, %v1588
      %v1675 = vpack.c.bf16 %v1591, %v1590
      %v1676 = vpack.c.bf16 %v1593, %v1592
      %v1677 = vpack.c.bf16 %v1595, %v1594
      %v1678 = vpack.c.bf16 %v1597, %v1596
      %v1679 = vpack.c.bf16 %v1599, %v1598
      %v1680 = vpack.c.bf16 %v1601, %v1600
      %v1681 = vpack.c.bf16 %v1603, %v1602
      %v1682 = vpack.c.bf16 %v1605, %v1604
      %v1683 = vpack.c.bf16 %v1607, %v1606
      %v1684 = vpack.c.bf16 %v1609, %v1608
      %v1685 = vpack.c.bf16 %v1611, %v1610
      %v1686 = vpack.c.bf16 %v1613, %v1612
      %v1687 = vpack.c.bf16 %v1615, %v1614
      %v1688 = vpack.c.bf16 %v1617, %v1616
      %v1689 = vpack.c.bf16 %v1619, %v1618
      %v1690 = vpack.c.bf16 %v1621, %v1620
      %v1691 = vpack.c.bf16 %v1622, %v1622
      %v1761 = vunpack.c.l.b16 %v1623
      %v1762 = vunpack.c.h.b16 %v1623
      %v1763 = vunpack.c.l.b16 %v1624
      %v1764 = vunpack.c.h.b16 %v1624
      %v1765 = vunpack.c.l.b16 %v1625
      %v1766 = vunpack.c.h.b16 %v1625
      %v1767 = vunpack.c.l.b16 %v1626
      %v1768 = vunpack.c.h.b16 %v1626
      %v1769 = vunpack.c.l.b16 %v1627
      %v1770 = vunpack.c.h.b16 %v1627
      %v1771 = vunpack.c.l.b16 %v1628
      %v1772 = vunpack.c.h.b16 %v1628
      %v1773 = vunpack.c.l.b16 %v1629
      %v1774 = vunpack.c.h.b16 %v1629
      %v1775 = vunpack.c.l.b16 %v1630
      %v1776 = vunpack.c.h.b16 %v1630
      %v1777 = vunpack.c.l.b16 %v1631
      %v1778 = vunpack.c.h.b16 %v1631
      %v1779 = vunpack.c.l.b16 %v1632
      %v1780 = vunpack.c.h.b16 %v1632
      %v1781 = vunpack.c.l.b16 %v1633
      %v1782 = vunpack.c.h.b16 %v1633
      %v1783 = vunpack.c.l.b16 %v1634
      %v1784 = vunpack.c.h.b16 %v1634
      %v1785 = vunpack.c.l.b16 %v1635
      %v1786 = vunpack.c.h.b16 %v1635
      %v1787 = vunpack.c.l.b16 %v1636
      %v1788 = vunpack.c.h.b16 %v1636
      %v1789 = vunpack.c.l.b16 %v1637
      %v1790 = vunpack.c.h.b16 %v1637
      %v1791 = vunpack.c.l.b16 %v1638
      %v1792 = vunpack.c.h.b16 %v1638
      %v1793 = vunpack.c.l.b16 %v1639
      %v1794 = vunpack.c.h.b16 %v1639
      %v1795 = vunpack.c.l.b16 %v1640
      %v1796 = vunpack.c.h.b16 %v1640
      %v1797 = vunpack.c.l.b16 %v1641
      %v1798 = vunpack.c.h.b16 %v1641
      %v1799 = vunpack.c.l.b16 %v1642
      %v1800 = vunpack.c.h.b16 %v1642
      %v1801 = vunpack.c.l.b16 %v1643
      %v1802 = vunpack.c.h.b16 %v1643
      %v1803 = vunpack.c.l.b16 %v1644
      %v1804 = vunpack.c.h.b16 %v1644
      %v1805 = vunpack.c.l.b16 %v1645
      %v1806 = vunpack.c.h.b16 %v1645
      %v1807 = vunpack.c.l.b16 %v1646
      %v1808 = vunpack.c.h.b16 %v1646
      %v1809 = vunpack.c.l.b16 %v1647
      %v1810 = vunpack.c.h.b16 %v1647
      %v1811 = vunpack.c.l.b16 %v1648
      %v1812 = vunpack.c.h.b16 %v1648
      %v1813 = vunpack.c.l.b16 %v1649
      %v1814 = vunpack.c.h.b16 %v1649
      %v1815 = vunpack.c.l.b16 %v1650
      %v1816 = vunpack.c.h.b16 %v1650
      %v1817 = vunpack.c.l.b16 %v1651
      %v1818 = vunpack.c.h.b16 %v1651
      %v1819 = vunpack.c.l.b16 %v1652
      %v1820 = vunpack.c.h.b16 %v1652
      %v1821 = vunpack.c.l.b16 %v1653
      %v1822 = vunpack.c.h.b16 %v1653
      %v1823 = vunpack.c.l.b16 %v1654
      %v1824 = vunpack.c.h.b16 %v1654
      %v1825 = vunpack.c.l.b16 %v1655
      %v1826 = vunpack.c.h.b16 %v1655
      %v1827 = vunpack.c.l.b16 %v1656
      %v1828 = vunpack.c.h.b16 %v1656
      %v1829 = vunpack.c.l.b16 %v1657
      %v1830 = vunpack.c.h.b16 %v1657
      %v1831 = vunpack.c.l.b16 %v1658
      %v1832 = vunpack.c.h.b16 %v1658
      %v1833 = vunpack.c.l.b16 %v1659
      %v1834 = vunpack.c.h.b16 %v1659
      %v1835 = vunpack.c.l.b16 %v1660
      %v1836 = vunpack.c.h.b16 %v1660
      %v1837 = vunpack.c.l.b16 %v1661
      %v1838 = vunpack.c.h.b16 %v1661
      %v1839 = vunpack.c.l.b16 %v1662
      %v1840 = vunpack.c.h.b16 %v1662
      %v1841 = vunpack.c.l.b16 %v1663
      %v1842 = vunpack.c.h.b16 %v1663
      %v1843 = vunpack.c.l.b16 %v1664
      %v1844 = vunpack.c.h.b16 %v1664
      %v1845 = vunpack.c.l.b16 %v1665
      %v1846 = vunpack.c.h.b16 %v1665
      %v1847 = vunpack.c.l.b16 %v1666
      %v1848 = vunpack.c.h.b16 %v1666
      %v1849 = vunpack.c.l.b16 %v1667
      %v1850 = vunpack.c.h.b16 %v1667
      %v1851 = vunpack.c.l.b16 %v1668
      %v1852 = vunpack.c.h.b16 %v1668
      %v1853 = vunpack.c.l.b16 %v1669
      %v1854 = vunpack.c.h.b16 %v1669
      %v1855 = vunpack.c.l.b16 %v1670
      %v1856 = vunpack.c.h.b16 %v1670
      %v1857 = vunpack.c.l.b16 %v1671
      %v1858 = vunpack.c.h.b16 %v1671
      %v1859 = vunpack.c.l.b16 %v1672
      %v1860 = vunpack.c.h.b16 %v1672
      %v1861 = vunpack.c.l.b16 %v1673
      %v1862 = vunpack.c.h.b16 %v1673
      %v1863 = vunpack.c.l.b16 %v1674
      %v1864 = vunpack.c.h.b16 %v1674
      %v1865 = vunpack.c.l.b16 %v1675
      %v1866 = vunpack.c.h.b16 %v1675
      %v1867 = vunpack.c.l.b16 %v1676
      %v1868 = vunpack.c.h.b16 %v1676
      %v1869 = vunpack.c.l.b16 %v1677
      %v1870 = vunpack.c.h.b16 %v1677
      %v1871 = vunpack.c.l.b16 %v1678
      %v1872 = vunpack.c.h.b16 %v1678
      %v1873 = vunpack.c.l.b16 %v1679
      %v1874 = vunpack.c.h.b16 %v1679
      %v1875 = vunpack.c.l.b16 %v1680
      %v1876 = vunpack.c.h.b16 %v1680
      %v1877 = vunpack.c.l.b16 %v1681
      %v1878 = vunpack.c.h.b16 %v1681
      %v1879 = vunpack.c.l.b16 %v1682
      %v1880 = vunpack.c.h.b16 %v1682
      %v1881 = vunpack.c.l.b16 %v1683
      %v1882 = vunpack.c.h.b16 %v1683
      %v1883 = vunpack.c.l.b16 %v1684
      %v1884 = vunpack.c.h.b16 %v1684
      %v1885 = vunpack.c.l.b16 %v1685
      %v1886 = vunpack.c.h.b16 %v1685
      %v1887 = vunpack.c.l.b16 %v1686
      %v1888 = vunpack.c.h.b16 %v1686
      %v1889 = vunpack.c.l.b16 %v1687
      %v1890 = vunpack.c.h.b16 %v1687
      %v1891 = vunpack.c.l.b16 %v1688
      %v1892 = vunpack.c.h.b16 %v1688
      %v1893 = vunpack.c.l.b16 %v1689
      %v1894 = vunpack.c.h.b16 %v1689
      %v1895 = vunpack.c.l.b16 %v1690
      %v1896 = vunpack.c.h.b16 %v1690
      %v1897 = vunpack.c.l.b16 %v1691
      %v1898 = vpack.c.b16 %v1761, %v1761
      %v1899 = vpack.c.b16 %v1762, %v1762
      %v1900 = vpack.c.b16 %v1763, %v1763
      %v1901 = vpack.c.b16 %v1764, %v1764
      %v1902 = vpack.c.b16 %v1765, %v1765
      %v1903 = vpack.c.b16 %v1766, %v1766
      %v1904 = vpack.c.b16 %v1767, %v1767
      %v1905 = vpack.c.b16 %v1768, %v1768
      %v1906 = vpack.c.b16 %v1769, %v1769
      %v1907 = vpack.c.b16 %v1770, %v1770
      %v1908 = vpack.c.b16 %v1771, %v1771
      %v1909 = vpack.c.b16 %v1772, %v1772
      %v1910 = vpack.c.b16 %v1773, %v1773
      %v1911 = vpack.c.b16 %v1774, %v1774
      %v1912 = vpack.c.b16 %v1775, %v1775
      %v1913 = vpack.c.b16 %v1776, %v1776
      %v1914 = vpack.c.b16 %v1777, %v1777
      %v1915 = vpack.c.b16 %v1778, %v1778
      %v1916 = vpack.c.b16 %v1779, %v1779
      %v1917 = vpack.c.b16 %v1780, %v1780
      %v1918 = vpack.c.b16 %v1781, %v1781
      %v1919 = vpack.c.b16 %v1782, %v1782
      %v1920 = vpack.c.b16 %v1783, %v1783
      %v1921 = vpack.c.b16 %v1784, %v1784
      %v1922 = vpack.c.b16 %v1785, %v1785
      %v1923 = vpack.c.b16 %v1786, %v1786
      %v1924 = vpack.c.b16 %v1787, %v1787
      %v1925 = vpack.c.b16 %v1788, %v1788
      %v1926 = vpack.c.b16 %v1789, %v1789
      %v1927 = vpack.c.b16 %v1790, %v1790
      %v1928 = vpack.c.b16 %v1791, %v1791
      %v1929 = vpack.c.b16 %v1792, %v1792
      %v1930 = vpack.c.b16 %v1793, %v1793
      %v1931 = vpack.c.b16 %v1794, %v1794
      %v1932 = vpack.c.b16 %v1795, %v1795
      %v1933 = vpack.c.b16 %v1796, %v1796
      %v1934 = vpack.c.b16 %v1797, %v1797
      %v1935 = vpack.c.b16 %v1798, %v1798
      %v1936 = vpack.c.b16 %v1799, %v1799
      %v1937 = vpack.c.b16 %v1800, %v1800
      %v1938 = vpack.c.b16 %v1801, %v1801
      %v1939 = vpack.c.b16 %v1802, %v1802
      %v1940 = vpack.c.b16 %v1803, %v1803
      %v1941 = vpack.c.b16 %v1804, %v1804
      %v1942 = vpack.c.b16 %v1805, %v1805
      %v1943 = vpack.c.b16 %v1806, %v1806
      %v1944 = vpack.c.b16 %v1807, %v1807
      %v1945 = vpack.c.b16 %v1808, %v1808
      %v1946 = vpack.c.b16 %v1809, %v1809
      %v1947 = vpack.c.b16 %v1810, %v1810
      %v1948 = vpack.c.b16 %v1811, %v1811
      %v1949 = vpack.c.b16 %v1812, %v1812
      %v1950 = vpack.c.b16 %v1813, %v1813
      %v1951 = vpack.c.b16 %v1814, %v1814
      %v1952 = vpack.c.b16 %v1815, %v1815
      %v1953 = vpack.c.b16 %v1816, %v1816
      %v1954 = vpack.c.b16 %v1817, %v1817
      %v1955 = vpack.c.b16 %v1818, %v1818
      %v1956 = vpack.c.b16 %v1819, %v1819
      %v1957 = vpack.c.b16 %v1820, %v1820
      %v1958 = vpack.c.b16 %v1821, %v1821
      %v1959 = vpack.c.b16 %v1822, %v1822
      %v1960 = vpack.c.b16 %v1823, %v1823
      %v1961 = vpack.c.b16 %v1824, %v1824
      %v1962 = vpack.c.b16 %v1825, %v1825
      %v1963 = vpack.c.b16 %v1826, %v1826
      %v1964 = vpack.c.b16 %v1827, %v1827
      %v1965 = vpack.c.b16 %v1828, %v1828
      %v1966 = vpack.c.b16 %v1829, %v1829
      %v1967 = vpack.c.b16 %v1830, %v1830
      %v1968 = vpack.c.b16 %v1831, %v1831
      %v1969 = vpack.c.b16 %v1832, %v1832
      %v1970 = vpack.c.b16 %v1833, %v1833
      %v1971 = vpack.c.b16 %v1834, %v1834
      %v1972 = vpack.c.b16 %v1835, %v1835
      %v1973 = vpack.c.b16 %v1836, %v1836
      %v1974 = vpack.c.b16 %v1837, %v1837
      %v1975 = vpack.c.b16 %v1838, %v1838
      %v1976 = vpack.c.b16 %v1839, %v1839
      %v1977 = vpack.c.b16 %v1840, %v1840
      %v1978 = vpack.c.b16 %v1841, %v1841
      %v1979 = vpack.c.b16 %v1842, %v1842
      %v1980 = vpack.c.b16 %v1843, %v1843
      %v1981 = vpack.c.b16 %v1844, %v1844
      %v1982 = vpack.c.b16 %v1845, %v1845
      %v1983 = vpack.c.b16 %v1846, %v1846
      %v1984 = vpack.c.b16 %v1847, %v1847
      %v1985 = vpack.c.b16 %v1848, %v1848
      %v1986 = vpack.c.b16 %v1849, %v1849
      %v1987 = vpack.c.b16 %v1850, %v1850
      %v1988 = vpack.c.b16 %v1851, %v1851
      %v1989 = vpack.c.b16 %v1852, %v1852
      %v1990 = vpack.c.b16 %v1853, %v1853
      %v1991 = vpack.c.b16 %v1854, %v1854
      %v1992 = vpack.c.b16 %v1855, %v1855
      %v1993 = vpack.c.b16 %v1856, %v1856
      %v1994 = vpack.c.b16 %v1857, %v1857
      %v1995 = vpack.c.b16 %v1858, %v1858
      %v1996 = vpack.c.b16 %v1859, %v1859
      %v1997 = vpack.c.b16 %v1860, %v1860
      %v1998 = vpack.c.b16 %v1861, %v1861
      %v1999 = vpack.c.b16 %v1862, %v1862
      %v2000 = vpack.c.b16 %v1863, %v1863
      %v2001 = vpack.c.b16 %v1864, %v1864
      %v2002 = vpack.c.b16 %v1865, %v1865
      %v2003 = vpack.c.b16 %v1866, %v1866
      %v2004 = vpack.c.b16 %v1867, %v1867
      %v2005 = vpack.c.b16 %v1868, %v1868
      %v2006 = vpack.c.b16 %v1869, %v1869
      %v2007 = vpack.c.b16 %v1870, %v1870
      %v2008 = vpack.c.b16 %v1871, %v1871
      %v2009 = vpack.c.b16 %v1872, %v1872
      %v2010 = vpack.c.b16 %v1873, %v1873
      %v2011 = vpack.c.b16 %v1874, %v1874
      %v2012 = vpack.c.b16 %v1875, %v1875
      %v2013 = vpack.c.b16 %v1876, %v1876
      %v2014 = vpack.c.b16 %v1877, %v1877
      %v2015 = vpack.c.b16 %v1878, %v1878
      %v2016 = vpack.c.b16 %v1879, %v1879
      %v2017 = vpack.c.b16 %v1880, %v1880
      %v2018 = vpack.c.b16 %v1881, %v1881
      %v2019 = vpack.c.b16 %v1882, %v1882
      %v2020 = vpack.c.b16 %v1883, %v1883
      %v2021 = vpack.c.b16 %v1884, %v1884
      %v2022 = vpack.c.b16 %v1885, %v1885
      %v2023 = vpack.c.b16 %v1886, %v1886
      %v2024 = vpack.c.b16 %v1887, %v1887
      %v2025 = vpack.c.b16 %v1888, %v1888
      %v2026 = vpack.c.b16 %v1889, %v1889
      %v2027 = vpack.c.b16 %v1890, %v1890
      %v2028 = vpack.c.b16 %v1891, %v1891
      %v2029 = vpack.c.b16 %v1892, %v1892
      %v2030 = vpack.c.b16 %v1893, %v1893
      %v2031 = vpack.c.b16 %v1894, %v1894
      %v2032 = vpack.c.b16 %v1895, %v1895
      %v2033 = vpack.c.b16 %v1896, %v1896
      %v2034 = vpack.c.b16 %v1897, %v1897
      %2172 = vst [vmem:[%s172] sm:$0xf] %v1898
      %2173 = vst [vmem:[%s172 + $0x4] sm:$0xf] %v1899
      %2174 = vst [vmem:[%s172 + $0x8] sm:$0xf] %v1900
      %2175 = vst [vmem:[%s172 + $0xc] sm:$0xf] %v1901
      %2176 = vst [vmem:[%s172 + $0x10] sm:$0xf] %v1902
      %2177 = vst [vmem:[%s172 + $0x14] sm:$0xf] %v1903
      %2178 = vst [vmem:[%s172 + $0x18] sm:$0xf] %v1904
      %2179 = vst [vmem:[%s172 + $0x1c] sm:$0xf] %v1905
      %2180 = vst [vmem:[%s172 + $0x20] sm:$0xf] %v1906
      %2181 = vst [vmem:[%s172 + $0x24] sm:$0xf] %v1907
      %2182 = vst [vmem:[%s172 + $0x28] sm:$0xf] %v1908
      %2183 = vst [vmem:[%s172 + $0x2c] sm:$0xf] %v1909
      %2184 = vst [vmem:[%s172 + $0x30] sm:$0xf] %v1910
      %2185 = vst [vmem:[%s172 + $0x34] sm:$0xf] %v1911
      %2186 = vst [vmem:[%s172 + $0x38] sm:$0xf] %v1912
      %2187 = vst [vmem:[%s172 + $0x3c] sm:$0xf] %v1913
      %2188 = vst [vmem:[%s172 + $0x40] sm:$0xf] %v1914
      %2189 = vst [vmem:[%s172 + $0x44] sm:$0xf] %v1915
      %2190 = vst [vmem:[%s172 + $0x48] sm:$0xf] %v1916
      %2191 = vst [vmem:[%s172 + $0x4c] sm:$0xf] %v1917
      %2192 = vst [vmem:[%s172 + $0x50] sm:$0xf] %v1918
      %2193 = vst [vmem:[%s172 + $0x54] sm:$0xf] %v1919
      %2194 = vst [vmem:[%s172 + $0x58] sm:$0xf] %v1920
      %2195 = vst [vmem:[%s172 + $0x5c] sm:$0xf] %v1921
      %2196 = vst [vmem:[%s172 + $0x60] sm:$0xf] %v1922
      %2197 = vst [vmem:[%s172 + $0x64] sm:$0xf] %v1923
      %2198 = vst [vmem:[%s172 + $0x68] sm:$0xf] %v1924
      %2199 = vst [vmem:[%s172 + $0x6c] sm:$0xf] %v1925
      %2200 = vst [vmem:[%s172 + $0x70] sm:$0xf] %v1926
      %2201 = vst [vmem:[%s172 + $0x74] sm:$0xf] %v1927
      %2202 = vst [vmem:[%s172 + $0x78] sm:$0xf] %v1928
      %2203 = vst [vmem:[%s172 + $0x7c] sm:$0xf] %v1929
      %2204 = vst [vmem:[%s172 + $0x80] sm:$0xf] %v1930
      %2205 = vst [vmem:[%s172 + $0x84] sm:$0xf] %v1931
      %2206 = vst [vmem:[%s172 + $0x88] sm:$0xf] %v1932
      %2207 = vst [vmem:[%s172 + $0x8c] sm:$0xf] %v1933
      %2208 = vst [vmem:[%s172 + $0x90] sm:$0xf] %v1934
      %2209 = vst [vmem:[%s172 + $0x94] sm:$0xf] %v1935
      %2210 = vst [vmem:[%s172 + $0x98] sm:$0xf] %v1936
      %2211 = vst [vmem:[%s172 + $0x9c] sm:$0xf] %v1937
      %2212 = vst [vmem:[%s172 + $0xa0] sm:$0xf] %v1938
      %2213 = vst [vmem:[%s172 + $0xa4] sm:$0xf] %v1939
      %2214 = vst [vmem:[%s172 + $0xa8] sm:$0xf] %v1940
      %2215 = vst [vmem:[%s172 + $0xac] sm:$0xf] %v1941
      %2216 = vst [vmem:[%s172 + $0xb0] sm:$0xf] %v1942
      %2217 = vst [vmem:[%s172 + $0xb4] sm:$0xf] %v1943
      %2218 = vst [vmem:[%s172 + $0xb8] sm:$0xf] %v1944
      %2219 = vst [vmem:[%s172 + $0xbc] sm:$0xf] %v1945
      %2220 = vst [vmem:[%s172 + $0xc0] sm:$0xf] %v1946
      %2221 = vst [vmem:[%s172 + $0xc4] sm:$0xf] %v1947
      %2222 = vst [vmem:[%s172 + $0xc8] sm:$0xf] %v1948
      %2223 = vst [vmem:[%s172 + $0xcc] sm:$0xf] %v1949
      %2224 = vst [vmem:[%s172 + $0xd0] sm:$0xf] %v1950
      %2225 = vst [vmem:[%s172 + $0xd4] sm:$0xf] %v1951
      %2226 = vst [vmem:[%s172 + $0xd8] sm:$0xf] %v1952
      %2227 = vst [vmem:[%s172 + $0xdc] sm:$0xf] %v1953
      %2228 = vst [vmem:[%s172 + $0xe0] sm:$0xf] %v1954
      %2229 = vst [vmem:[%s172 + $0xe4] sm:$0xf] %v1955
      %2230 = vst [vmem:[%s172 + $0xe8] sm:$0xf] %v1956
      %2231 = vst [vmem:[%s172 + $0xec] sm:$0xf] %v1957
      %2232 = vst [vmem:[%s172 + $0xf0] sm:$0xf] %v1958
      %2233 = vst [vmem:[%s172 + $0xf4] sm:$0xf] %v1959
      %2234 = vst [vmem:[%s172 + $0xf8] sm:$0xf] %v1960
      %2235 = vst [vmem:[%s172 + $0xfc] sm:$0xf] %v1961
      %2236 = vst [vmem:[%s172 + $0x100] sm:$0xf] %v1962
      %2237 = vst [vmem:[%s172 + $0x104] sm:$0xf] %v1963
      %2238 = vst [vmem:[%s172 + $0x108] sm:$0xf] %v1964
      %2239 = vst [vmem:[%s172 + $0x10c] sm:$0xf] %v1965
      %2240 = vst [vmem:[%s172 + $0x110] sm:$0xf] %v1966
      %2241 = vst [vmem:[%s172 + $0x114] sm:$0xf] %v1967
      %2242 = vst [vmem:[%s172 + $0x118] sm:$0xf] %v1968
      %2243 = vst [vmem:[%s172 + $0x11c] sm:$0xf] %v1969
      %2244 = vst [vmem:[%s172 + $0x120] sm:$0xf] %v1970
      %2245 = vst [vmem:[%s172 + $0x124] sm:$0xf] %v1971
      %2246 = vst [vmem:[%s172 + $0x128] sm:$0xf] %v1972
      %2247 = vst [vmem:[%s172 + $0x12c] sm:$0xf] %v1973
      %2248 = vst [vmem:[%s172 + $0x130] sm:$0xf] %v1974
      %2249 = vst [vmem:[%s172 + $0x134] sm:$0xf] %v1975
      %2250 = vst [vmem:[%s172 + $0x138] sm:$0xf] %v1976
      %2251 = vst [vmem:[%s172 + $0x13c] sm:$0xf] %v1977
      %2252 = vst [vmem:[%s172 + $0x140] sm:$0xf] %v1978
      %2253 = vst [vmem:[%s172 + $0x144] sm:$0xf] %v1979
      %2254 = vst [vmem:[%s172 + $0x148] sm:$0xf] %v1980
      %2255 = vst [vmem:[%s172 + $0x14c] sm:$0xf] %v1981
      %2256 = vst [vmem:[%s172 + $0x150] sm:$0xf] %v1982
      %2257 = vst [vmem:[%s172 + $0x154] sm:$0xf] %v1983
      %2258 = vst [vmem:[%s172 + $0x158] sm:$0xf] %v1984
      %2259 = vst [vmem:[%s172 + $0x15c] sm:$0xf] %v1985
      %2260 = vst [vmem:[%s172 + $0x160] sm:$0xf] %v1986
      %2261 = vst [vmem:[%s172 + $0x164] sm:$0xf] %v1987
      %2262 = vst [vmem:[%s172 + $0x168] sm:$0xf] %v1988
      %2263 = vst [vmem:[%s172 + $0x16c] sm:$0xf] %v1989
      %2264 = vst [vmem:[%s172 + $0x170] sm:$0xf] %v1990
      %2265 = vst [vmem:[%s172 + $0x174] sm:$0xf] %v1991
      %2266 = vst [vmem:[%s172 + $0x178] sm:$0xf] %v1992
      %2267 = vst [vmem:[%s172 + $0x17c] sm:$0xf] %v1993
      %2268 = vst [vmem:[%s172 + $0x180] sm:$0xf] %v1994
      %2269 = vst [vmem:[%s172 + $0x184] sm:$0xf] %v1995
      %2270 = vst [vmem:[%s172 + $0x188] sm:$0xf] %v1996
      %2271 = vst [vmem:[%s172 + $0x18c] sm:$0xf] %v1997
      %2272 = vst [vmem:[%s172 + $0x190] sm:$0xf] %v1998
      %2273 = vst [vmem:[%s172 + $0x194] sm:$0xf] %v1999
      %2274 = vst [vmem:[%s172 + $0x198] sm:$0xf] %v2000
      %2275 = vst [vmem:[%s172 + $0x19c] sm:$0xf] %v2001
      %2276 = vst [vmem:[%s172 + $0x1a0] sm:$0xf] %v2002
      %2277 = vst [vmem:[%s172 + $0x1a4] sm:$0xf] %v2003
      %2278 = vst [vmem:[%s172 + $0x1a8] sm:$0xf] %v2004
      %2279 = vst [vmem:[%s172 + $0x1ac] sm:$0xf] %v2005
      %2280 = vst [vmem:[%s172 + $0x1b0] sm:$0xf] %v2006
      %2281 = vst [vmem:[%s172 + $0x1b4] sm:$0xf] %v2007
      %2282 = vst [vmem:[%s172 + $0x1b8] sm:$0xf] %v2008
      %2283 = vst [vmem:[%s172 + $0x1bc] sm:$0xf] %v2009
      %2284 = vst [vmem:[%s172 + $0x1c0] sm:$0xf] %v2010
      %2285 = vst [vmem:[%s172 + $0x1c4] sm:$0xf] %v2011
      %2286 = vst [vmem:[%s172 + $0x1c8] sm:$0xf] %v2012
      %2287 = vst [vmem:[%s172 + $0x1cc] sm:$0xf] %v2013
      %2288 = vst [vmem:[%s172 + $0x1d0] sm:$0xf] %v2014
      %2289 = vst [vmem:[%s172 + $0x1d4] sm:$0xf] %v2015
      %2290 = vst [vmem:[%s172 + $0x1d8] sm:$0xf] %v2016
      %2291 = vst [vmem:[%s172 + $0x1dc] sm:$0xf] %v2017
      %2292 = vst [vmem:[%s172 + $0x1e0] sm:$0xf] %v2018
      %2293 = vst [vmem:[%s172 + $0x1e4] sm:$0xf] %v2019
      %2294 = vst [vmem:[%s172 + $0x1e8] sm:$0xf] %v2020
      %2295 = vst [vmem:[%s172 + $0x1ec] sm:$0xf] %v2021
      %2296 = vst [vmem:[%s172 + $0x1f0] sm:$0xf] %v2022
      %2297 = vst [vmem:[%s172 + $0x1f4] sm:$0xf] %v2023
      %2298 = vst [vmem:[%s172 + $0x1f8] sm:$0xf] %v2024
      %2299 = vst [vmem:[%s172 + $0x1fc] sm:$0xf] %v2025
      %2300 = vst [vmem:[%s172 + $0x200] sm:$0xf] %v2026
      %2301 = vst [vmem:[%s172 + $0x204] sm:$0xf] %v2027
      %2302 = vst [vmem:[%s172 + $0x208] sm:$0xf] %v2028
      %2303 = vst [vmem:[%s172 + $0x20c] sm:$0xf] %v2029
      %2304 = vst [vmem:[%s172 + $0x210] sm:$0xf] %v2030
      %2305 = vst [vmem:[%s172 + $0x214] sm:$0xf] %v2031
      %2306 = vst [vmem:[%s172 + $0x218] sm:$0xf] %v2032
      %2307 = vst [vmem:[%s172 + $0x21c] sm:$0xf] %v2033
      %2308 = vst [vmem:[%s172 + $0x220] sm:$0xf] %v2034
      %s2309 = smul.u32 137, %s14
      %p2310 = scmp.lt.s32.totalorder %s2309, 273
      %s2311 = scalar_select %p2310, %s2309, 273
      %s2312 = smul.addr %s2311, 4
      %s2313 = scalar_lea.vmem %s3, %s2312
      // Predicated region
      $region33: #{_lambda_.17} parent=31 // pred_check
        %p2314 = pneg %p100
      $region34: #{_lambda_.17} parent=31 // pred_check_branch
        %2316 = sbr.rel (%p2314) target = $region36
      $region35: #{_lambda_.17} parent=31 // pred_region
        %s2317 = smul.u32 137, %s14
      $region36: #{_lambda_.17} parent=31 // pred_fallthru
        _
    $region32: #{_lambda_.17} parent=5 // pred_fallthru
      _
    %p2318 = scmp.le.s32.totalorder 2, %s9
    // Predicated region
    $region37: #{_lambda_.17} parent=5 // pred_check
      %p2319 = pneg %p2318
    $region38: #{_lambda_.17} parent=5 // pred_check_branch
      %2321 = sbr.rel (%p2319) target = $region40
    $region39: #{_lambda_.17} parent=5 // pred_region
      %s2322 = ssub.s32 %s9, 2
      // Predicated region
      $region41: #{_lambda_.17} parent=39 // pred_check
        %p2323 = pneg %p106
      $region42: #{_lambda_.17} parent=39 // pred_check_branch
        %2325 = sbr.rel (%p2323) target = $region44
      $region43: #{_lambda_.17} parent=39 // pred_region
        %s2326 = smul.u32 137, %s15
        %p2327 = scmp.lt.s32.totalorder %s2326, 273
        %s2328 = scalar_select %p2327, %s2326, 273
        %s2329 = smul.addr %s2328, 4
        %s2330 = scalar_lea.vmem %s3, %s2329
      $region44: #{_lambda_.17} parent=39 // pred_fallthru
        _
    $region40: #{_lambda_.17} parent=5 // pred_fallthru
      _
  $region6: #{_lambda_.17} parent=0 // loop_footer
    %s13 = sadd.s32 1, %s9
  $region7: #{_lambda_.17} parent=0 // loop_footer_branch
    %8 = sbr.rel target = $region3
  $region8: #{_lambda_.17} parent=0 // loop_exit
    _

</llo_original>
